<compile_context>
chip_gen: v5e
topology: v5e:2x2
jax: 0.10.0
libtpu: 0.0.40
codegen_flags: <defaults>
</compile_context>

<pallas_src>
import functools

import jax
import jax.numpy as jnp
import numpy as np
from jax import lax
from jax.experimental import pallas as pl
from jax.experimental.pallas import tpu as pltpu


def _sigmoid(x):
    # exp goes to the EUP; keep the divide exact (pl.reciprocal(approx=True) is
    # only ~2^-12 accurate and we want to stay tight against the f32 reference).
    return 1.0 / (1.0 + jnp.exp(-x))


def _cbam_kernel(x_ref, wct_ref, bc_ref, m_ref, o_ref, *, inv_hw, inv_c):
    """CBAM forward for one batch tile.

    x_ref  : (Bt, C, HW) VMEM f32 -- lane-dense view of the input images
    wct_ref: (C, C)      VMEM f32 -- ChannelAttention.fc weight, transposed (in, out)
    bc_ref : (1, C)      VMEM f32 -- ChannelAttention.fc bias (row vector)
    m_ref  : (2, HW, HW) VMEM f32 -- 7x7 'same' conv expressed as dense matmuls
    o_ref  : (Bt, C, HW) VMEM f32
    """
    x = x_ref[...]                                            # (Bt, C, HW)
    wct = wct_ref[...]                                        # (C, C)
    bc = bc_ref[...]                                          # (1, C)
    m_mean = m_ref[0]                                         # (HW, HW)
    m_max = m_ref[1]                                          # (HW, HW)

    # ---- channel attention: x * sigmoid(W @ avgpool(x) + b), batched ----
    pool = jnp.sum(x, axis=2) * inv_hw                        # (Bt, C)  lane reduce
    logits = jnp.dot(pool, wct,
                     preferred_element_type=jnp.float32,
                     precision=lax.Precision.HIGHEST) + bc    # (Bt, C)  one MXU matmul
    xc = x * _sigmoid(logits)[:, :, None]                     # (Bt, C, HW)

    # ---- spatial attention: xc * sigmoid(conv7x7([mean_c(xc), max_c(xc)])) ----
    mean_map = jnp.sum(xc, axis=1) * inv_c                    # (Bt, HW) sublane reduce
    max_map = jnp.max(xc, axis=1)                             # (Bt, HW)
    conv = (jnp.dot(mean_map, m_mean,
                    preferred_element_type=jnp.float32,
                    precision=lax.Precision.HIGHEST)
            + jnp.dot(max_map, m_max,
                      preferred_element_type=jnp.float32,
                      precision=lax.Precision.HIGHEST))       # (Bt, HW)  two MXU matmuls
    o_ref[...] = xc * _sigmoid(conv)[:, None, :]              # (Bt, C, HW)


def _build_spatial_conv_matrix(wsa, H, W):
    """Dense matrices so that conv_flat = mean_flat @ M[0] + max_flat @ M[1].

    M[c, h_in*W + w_in, h_out*W + w_out] = wsa[c, h_in - h_out + pad, w_in - w_out + pad]
    (zero outside the KxK window), i.e. the 'same'-padded cross-correlation used by
    nn.Conv2d written as one matmul, so the in-kernel conv runs on the MXU.
    """
    K = wsa.shape[-1]
    pad = K // 2
    dh = jnp.arange(H)[:, None] - jnp.arange(H)[None, :] + pad   # (H_in, H_out)
    dw = jnp.arange(W)[:, None] - jnp.arange(W)[None, :] + pad   # (W_in, W_out)
    vh = (dh >= 0) & (dh < K)
    vw = (dw >= 0) & (dw < K)
    taps = wsa[:, jnp.clip(dh, 0, K - 1)[:, :, None, None],
               jnp.clip(dw, 0, K - 1)[None, None, :, :]]         # (2, Hi, Ho, Wi, Wo)
    taps = taps * (vh[:, :, None, None] & vw[None, None, :, :]).astype(wsa.dtype)
    # (c, h_in, w_in, h_out, w_out) -> (2, H*W, H*W)
    return jnp.transpose(taps, (0, 1, 3, 2, 4)).reshape(2, H * W, H * W)


def _pick_batch_tile(B, C, HW, itemsize=4, max_tile=8, budget_bytes=4 << 20):
    """Largest divisor of B (<= max_tile) whose in+out blocks stay under budget."""
    bt = 1
    for cand in range(1, min(B, max_tile) + 1):
        if B % cand == 0 and 2 * cand * C * HW * itemsize <= budget_bytes:
            bt = cand
    return bt


def cbam_forward(x, wc, bc, wsa):
    """x: (B, C, H, W) f32; wc: (C, C) fc weight; bc: (C,) fc bias; wsa: (2, K, K)."""
    B, C, H, W = x.shape
    HW = H * W

    x2 = x.reshape(B, C, HW).astype(jnp.float32)                 # lane-dense view
    wct = jnp.asarray(wc, jnp.float32).T                         # (C_in, C_out)
    bc2 = jnp.asarray(bc, jnp.float32).reshape(1, C)             # (1, C)
    m = _build_spatial_conv_matrix(jnp.asarray(wsa, jnp.float32), H, W)  # (2, HW, HW)

    Bt = _pick_batch_tile(B, C, HW)
    grid = (B // Bt,)

    kernel = functools.partial(_cbam_kernel, inv_hw=1.0 / HW, inv_c=1.0 / C)

    out = pl.pallas_call(
        kernel,
        out_shape=jax.ShapeDtypeStruct((B, C, HW), jnp.float32),
        grid=grid,
        in_specs=[
            pl.BlockSpec((Bt, C, HW), lambda i: (i, 0, 0)),      # images (lane-dense)
            pl.BlockSpec((C, C), lambda i: (0, 0)),              # channel FC weight^T
            pl.BlockSpec((1, C), lambda i: (0, 0)),              # channel FC bias
            pl.BlockSpec((2, HW, HW), lambda i: (0, 0, 0)),      # spatial conv matrices
        ],
        out_specs=pl.BlockSpec((Bt, C, HW), lambda i: (i, 0, 0)),
        compiler_params=pltpu.CompilerParams(
            dimension_semantics=("parallel",),
            vmem_limit_bytes=32 * 1024 * 1024,   # safe on v5e/v6e/v7x; blocks are tiny
        ),
    )(x2, wct, bc2, m)

    return out.reshape(B, C, H, W)


def cbam_reference(x, wc, bc, wsa):
    """Pure-JAX reference mirroring the PyTorch CBAM forward."""
    pool = jnp.mean(x, axis=(2, 3), keepdims=True)                       # (B,C,1,1)
    logits = jnp.einsum("bkxy,ck->bcxy", pool, wc) + bc[None, :, None, None]
    xc = x * jax.nn.sigmoid(logits)
    mean_map = jnp.mean(xc, axis=1, keepdims=True)
    max_map = jnp.max(xc, axis=1, keepdims=True)
    feat = jnp.concatenate([mean_map, max_map], axis=1)                  # (B,2,H,W)
    conv = jax.lax.conv_general_dilated(
        feat, wsa[None], window_strides=(1, 1), padding="SAME",
        dimension_numbers=("NCHW", "OIHW", "NCHW"))
    return xc * jax.nn.sigmoid(conv)


if __name__ == "__main__":
    B, C, H, W, K = 2, 4, 16, 16, 7
    key = jax.random.PRNGKey(0)
    kx, kw1, kb1, kw2 = jax.random.split(key, 4)

    x = jax.random.normal(kx, (B, C, H, W), jnp.float32)
    # ChannelAttention.fc = Conv2d(C, C, 1, bias=True) -> weight (C, C), bias (C,)
    wc = jax.random.normal(kw1, (C, C), jnp.float32) * 0.2
    bc = jax.random.normal(kb1, (C,), jnp.float32) * 0.1
    # SpatialAttention.cv1 = Conv2d(2, 1, 7, padding=3, bias=False) -> weight (2, 7, 7)
    wsa = jax.random.normal(kw2, (2, K, K), jnp.float32) * 0.1

    out = jax.block_until_ready(cbam_forward(x, wc, bc, wsa))
    ref = cbam_reference(x, wc, bc, wsa)

    np.testing.assert_allclose(np.asarray(out), np.asarray(ref), rtol=5e-3, atol=1e-3)

    print("KERNEL_OK")
</pallas_src>

<mosaic_0001>
module attributes {stable_mosaic.version = 11 : i64} {
  func.func @_cbam_kernel(%arg0: i32, %arg1: memref<2x4x256xf32, #tpu.memory_space<vmem>>, %arg2: memref<4x4xf32, #tpu.memory_space<vmem>>, %arg3: memref<1x4xf32, #tpu.memory_space<vmem>>, %arg4: memref<2x256x256xf32, #tpu.memory_space<vmem>>, %arg5: memref<2x4x256xf32, #tpu.memory_space<vmem>>) attributes {dimension_semantics = [#tpu.dimension_semantics<parallel>], iteration_bounds = array<i64: 1>, scalar_prefetch = 0 : i64, scratch_operands = 0 : i64, tpu.core_type = #tpu.core_type<tc>, window_params = [{transform_indices = @transform_0, window_bounds = array<i64: 2, 4, 256>}, {pipeline_mode = #tpu.pipeline_mode<synchronous>, transform_indices = @transform_1, window_bounds = array<i64: 4, 4>}, {pipeline_mode = #tpu.pipeline_mode<synchronous>, transform_indices = @transform_2, window_bounds = array<i64: 1, 4>}, {pipeline_mode = #tpu.pipeline_mode<synchronous>, transform_indices = @transform_3, window_bounds = array<i64: 2, 256, 256>}, {transform_indices = @transform_4, window_bounds = array<i64: 2, 4, 256>}]} {
    %c0 = arith.constant 0 : index
    %c0_0 = arith.constant 0 : index
    %c0_1 = arith.constant 0 : index
    %0 = vector.load %arg1[%c0, %c0_0, %c0_1] : memref<2x4x256xf32, #tpu.memory_space<vmem>>, vector<2x4x256xf32>
    %c0_2 = arith.constant 0 : index
    %c0_3 = arith.constant 0 : index
    %1 = vector.load %arg2[%c0_2, %c0_3] : memref<4x4xf32, #tpu.memory_space<vmem>>, vector<4x4xf32>
    %c0_4 = arith.constant 0 : index
    %c0_5 = arith.constant 0 : index
    %2 = vector.load %arg3[%c0_4, %c0_5] : memref<1x4xf32, #tpu.memory_space<vmem>>, vector<1x4xf32>
    %c0_6 = arith.constant 0 : index
    %c0_7 = arith.constant 0 : index
    %c0_8 = arith.constant 0 : index
    %3 = vector.load %arg4[%c0_6, %c0_7, %c0_8] : memref<2x256x256xf32, #tpu.memory_space<vmem>>, vector<1x256x256xf32>
    %4 = vector.shape_cast %3 : vector<1x256x256xf32> to vector<256x256xf32>
    %c1 = arith.constant 1 : index
    %c0_9 = arith.constant 0 : index
    %c0_10 = arith.constant 0 : index
    %5 = vector.load %arg4[%c1, %c0_9, %c0_10] : memref<2x256x256xf32, #tpu.memory_space<vmem>>, vector<1x256x256xf32>
    %6 = vector.shape_cast %5 : vector<1x256x256xf32> to vector<256x256xf32>
    %cst = arith.constant dense<0.000000e+00> : vector<2x4xf32>
    %7 = vector.multi_reduction <add>, %0, %cst [2] : vector<2x4x256xf32> to vector<2x4xf32>
    %cst_11 = arith.constant 3.906250e-03 : f32
    %8 = vector.broadcast %cst_11 : f32 to vector<2x4xf32>
    %9 = arith.mulf %7, %8 : vector<2x4xf32>
    %cst_12 = arith.constant dense<0.000000e+00> : vector<2x4xf32>
    %10 = tpu.matmul %9, %1, %cst_12 {dimension_numbers = #tpu.dot_dimension_numbers<[1], [0], [0], [1], [0, 0, 1, 1], [], []>, precision = #tpu.contract_precision<fp32>} : vector<2x4xf32>, vector<4x4xf32>, vector<2x4xf32> -> vector<2x4xf32>
    %11 = vector.broadcast %2 : vector<1x4xf32> to vector<2x4xf32>
    %12 = arith.addf %10, %11 : vector<2x4xf32>
    %cst_13 = arith.constant 0.000000e+00 : f32
    %13 = vector.broadcast %cst_13 : f32 to vector<2x4xf32>
    %14 = arith.subf %13, %12 : vector<2x4xf32>
    %15 = math.exp %14 : vector<2x4xf32>
    %cst_14 = arith.constant 1.000000e+00 : f32
    %16 = vector.broadcast %cst_14 : f32 to vector<2x4xf32>
    %17 = arith.addf %16, %15 : vector<2x4xf32>
    %cst_15 = arith.constant 1.000000e+00 : f32
    %18 = vector.broadcast %cst_15 : f32 to vector<2x4xf32>
    %19 = arith.divf %18, %17 : vector<2x4xf32>
    %20 = vector.shape_cast %19 : vector<2x4xf32> to vector<2x4x1xf32>
    %21 = vector.broadcast %20 : vector<2x4x1xf32> to vector<2x4x256xf32>
    %22 = arith.mulf %0, %21 : vector<2x4x256xf32>
    %cst_16 = arith.constant dense<0.000000e+00> : vector<2x256xf32>
    %23 = vector.multi_reduction <add>, %22, %cst_16 [1] : vector<2x4x256xf32> to vector<2x256xf32>
    %cst_17 = arith.constant 2.500000e-01 : f32
    %24 = vector.broadcast %cst_17 : f32 to vector<2x256xf32>
    %25 = arith.mulf %23, %24 : vector<2x256xf32>
    %cst_18 = arith.constant dense<0xFF800000> : vector<2x256xf32>
    %26 = vector.multi_reduction <maximumf>, %22, %cst_18 [1] : vector<2x4x256xf32> to vector<2x256xf32>
    %cst_19 = arith.constant dense<0.000000e+00> : vector<2x256xf32>
    %27 = tpu.matmul %25, %4, %cst_19 {dimension_numbers = #tpu.dot_dimension_numbers<[1], [0], [0], [1], [0, 0, 1, 1], [], []>, precision = #tpu.contract_precision<fp32>} : vector<2x256xf32>, vector<256x256xf32>, vector<2x256xf32> -> vector<2x256xf32>
    %cst_20 = arith.constant dense<0.000000e+00> : vector<2x256xf32>
    %28 = tpu.matmul %26, %6, %cst_20 {dimension_numbers = #tpu.dot_dimension_numbers<[1], [0], [0], [1], [0, 0, 1, 1], [], []>, precision = #tpu.contract_precision<fp32>} : vector<2x256xf32>, vector<256x256xf32>, vector<2x256xf32> -> vector<2x256xf32>
    %29 = arith.addf %27, %28 : vector<2x256xf32>
    %cst_21 = arith.constant 0.000000e+00 : f32
    %30 = vector.broadcast %cst_21 : f32 to vector<2x256xf32>
    %31 = arith.subf %30, %29 : vector<2x256xf32>
    %32 = math.exp %31 : vector<2x256xf32>
    %cst_22 = arith.constant 1.000000e+00 : f32
    %33 = vector.broadcast %cst_22 : f32 to vector<2x256xf32>
    %34 = arith.addf %33, %32 : vector<2x256xf32>
    %cst_23 = arith.constant 1.000000e+00 : f32
    %35 = vector.broadcast %cst_23 : f32 to vector<2x256xf32>
    %36 = arith.divf %35, %34 : vector<2x256xf32>
    %37 = vector.shape_cast %36 : vector<2x256xf32> to vector<2x1x256xf32>
    %38 = vector.broadcast %37 : vector<2x1x256xf32> to vector<2x4x256xf32>
    %39 = arith.mulf %22, %38 : vector<2x4x256xf32>
    %c0_24 = arith.constant 0 : index
    %c0_25 = arith.constant 0 : index
    %c0_26 = arith.constant 0 : index
    %40 = vector.load %arg5[%c0_24, %c0_25, %c0_26] : memref<2x4x256xf32, #tpu.memory_space<vmem>>, vector<2x4x256xf32>
    tpu.vector_store %arg5[%c0_24, %c0_25, %c0_26], %39 {strides = array<i32>} : memref<2x4x256xf32, #tpu.memory_space<vmem>>, vector<2x4x256xf32>,
    return
  }
  func.func @transform_0(%arg0: i32) -> (i32, i32, i32) {
    %c0_i32 = arith.constant 0 : i32
    %c0_i32_0 = arith.constant 0 : i32
    %c0_i32_1 = arith.constant 0 : i32
    return %arg0, %c0_i32, %c0_i32_0 : i32, i32, i32
  }
  func.func @transform_1(%arg0: i32) -> (i32, i32) {
    %c0_i32 = arith.constant 0 : i32
    %c0_i32_0 = arith.constant 0 : i32
    %c0_i32_1 = arith.constant 0 : i32
    return %c0_i32, %c0_i32_0 : i32, i32
  }
  func.func @transform_2(%arg0: i32) -> (i32, i32) {
    %c0_i32 = arith.constant 0 : i32
    %c0_i32_0 = arith.constant 0 : i32
    %c0_i32_1 = arith.constant 0 : i32
    return %c0_i32, %c0_i32_0 : i32, i32
  }
  func.func @transform_3(%arg0: i32) -> (i32, i32, i32) {
    %c0_i32 = arith.constant 0 : i32
    %c0_i32_0 = arith.constant 0 : i32
    %c0_i32_1 = arith.constant 0 : i32
    %c0_i32_2 = arith.constant 0 : i32
    return %c0_i32, %c0_i32_0, %c0_i32_1 : i32, i32, i32
  }
  func.func @transform_4(%arg0: i32) -> (i32, i32, i32) {
    %c0_i32 = arith.constant 0 : i32
    %c0_i32_0 = arith.constant 0 : i32
    %c0_i32_1 = arith.constant 0 : i32
    return %arg0, %c0_i32, %c0_i32_0 : i32, i32, i32
  }
}

</mosaic_0001>

<llo_original>
// kernel: tpu_custom_call.1
$region0: #{tpu_custom_call.1}
  #allocation0 [shape = 'u32[]', space=smem, size = 0x4, offset = 0x4, fixed_abs, tag = 'smem constant byte address 0x4 - core index']
  #allocation1 [shape = 'u32[72,128]{1,0:T(1,128)}', space=vmem, size = 0x9000, scoped, tag = 'internal scratch']
  %s0 = inlined_call_operand.hbm [shape: f32[2,4,256], index: 0, kind: input, shape index: {}]
  %s1 = inlined_call_operand.hbm [shape: f32[4,4], index: 1, kind: input, shape index: {}]
  %s2 = inlined_call_operand.vmem [shape: f32[1,4], index: 2, kind: input, shape index: {}]
  %s3 = inlined_call_operand.hbm [shape: f32[2,256,256], index: 3, kind: input, shape index: {}]
  %s4 = inlined_call_operand.hbm [shape: f32[2,4,256], index: 4, kind: output, shape index: {}]
  %s5 = sld [smem:[#allocation0]]
  $region38: #{tpu_custom_call.1} parent=0
    _
  %s7 = ssub.s32 1, %s5
  %s8 = scalar_select 0, %s7, %s5
  $region1: #{tpu_custom_call.1} parent=0
    #allocation2 [shape = 'u8[8192]{0}', space=vmem, size = 0x2000, scoped, tag = 'input window, operand 0, single buffered']
    #allocation3 [shape = 's32[1]{0}', space=sflag, size = 0x4, scoped, tag = 'scoped memory for tpu_custom_call.1']
    #allocation4 [shape = 's32[1]{0}', space=sflag, size = 0x4, scoped, tag = 'scoped memory for tpu_custom_call.1']
    #allocation5 [shape = 'u8[2048]{0}', space=vmem, size = 0x800, scoped, tag = 'input window, operand 1, single buffered']
    #allocation6 [shape = 's32[1]{0}', space=sflag, size = 0x4, scoped, tag = 'scoped memory for tpu_custom_call.1']
    #allocation7 [shape = 'u8[524288]{0}', space=vmem, size = 0x80000, scoped, tag = 'input window, operand 3, single buffered']
    #allocation8 [shape = 'u8[8192]{0}', space=vmem, size = 0x2000, scoped, tag = 'output window, operand 0, single buffered']
    %9 = vsyncpa [#allocation3], 0
    %10 = vsyncpa [#allocation6], 0
    %11 = vsyncpa [#allocation4], 0
    // Predicated region
    $region2: #{tpu_custom_call.1} parent=1 // pred_check
      _
    $region3: #{tpu_custom_call.1} parent=1 // pred_check_branch
      %13 = sbr.rel (0) target = $region5
    $region4: #{tpu_custom_call.1} parent=1 // pred_region
      %15 = vsyncadd [#allocation3], 0
      %s16 = sshll.u32 %s0, 4
      %s17 = int_to_ptr.hbm [resolvable:$true] %s16
      %s18 = sshll.u32 [#allocation2], 4
      %s19 = int_to_ptr.vmem [resolvable:$true] %s18
      %24 = dma.hbm_to_vmem [thread:$0]  %s17, 256, %s19, [#allocation3], 128, 128, 8
    $region5: #{tpu_custom_call.1} parent=1 // pred_fallthru
      _
    // Predicated region
    $region6: #{tpu_custom_call.1} parent=1 // pred_check
      _
    $region7: #{tpu_custom_call.1} parent=1 // pred_check_branch
      %26 = sbr.rel (0) target = $region9
    $region8: #{tpu_custom_call.1} parent=1 // pred_region
      %28 = vsyncadd [#allocation6], 0
      %s30 = sshll.u32 %s1, 4
      %s31 = int_to_ptr.hbm [resolvable:$true] %s30
      %s32 = sshll.u32 [#allocation5], 4
      %s33 = int_to_ptr.vmem [resolvable:$true] %s32
      %35 = dma.hbm_to_vmem [thread:$0]  %s31, 64, %s33, [#allocation6]
    $region9: #{tpu_custom_call.1} parent=1 // pred_fallthru
      _
    // Predicated region
    $region10: #{tpu_custom_call.1} parent=1 // pred_check
      _
    $region11: #{tpu_custom_call.1} parent=1 // pred_check_branch
      %37 = sbr.rel (0) target = $region13
    $region12: #{tpu_custom_call.1} parent=1 // pred_region
      _
    $region13: #{tpu_custom_call.1} parent=1 // pred_fallthru
      _
    // Predicated region
    $region14: #{tpu_custom_call.1} parent=1 // pred_check
      _
    $region15: #{tpu_custom_call.1} parent=1 // pred_check_branch
      %39 = sbr.rel (0) target = $region17
    $region16: #{tpu_custom_call.1} parent=1 // pred_region
      %41 = vsyncadd [#allocation6], 0
      %s42 = sshll.u32 %s3, 4
      %s43 = int_to_ptr.hbm [resolvable:$true] %s42
      %s44 = sshll.u32 [#allocation7], 4
      %s45 = int_to_ptr.vmem [resolvable:$true] %s44
      %50 = dma.hbm_to_vmem [thread:$0]  %s43, 16384, %s45, [#allocation6], 256, 256, 16
    $region17: #{tpu_custom_call.1} parent=1 // pred_fallthru
      _
    // Predicated region
    $region18: #{tpu_custom_call.1} parent=1 // pred_check
      _
    $region19: #{tpu_custom_call.1} parent=1 // pred_check_branch
      %52 = sbr.rel (0) target = $region21
    $region20: #{tpu_custom_call.1} parent=1 // pred_region
      %54 = dma.done [#allocation3], 256
    $region21: #{tpu_custom_call.1} parent=1 // pred_fallthru
      _
    // Predicated region
    $region22: #{tpu_custom_call.1} parent=1 // pred_check
      _
    $region23: #{tpu_custom_call.1} parent=1 // pred_check_branch
      %56 = sbr.rel (0) target = $region25
    $region24: #{tpu_custom_call.1} parent=1 // pred_region
      %58 = dma.done [#allocation6], 64
    $region25: #{tpu_custom_call.1} parent=1 // pred_fallthru
      _
    // Predicated region
    $region26: #{tpu_custom_call.1} parent=1 // pred_check
      _
    $region27: #{tpu_custom_call.1} parent=1 // pred_check_branch
      %60 = sbr.rel (0) target = $region29
    $region28: #{tpu_custom_call.1} parent=1 // pred_region
      %62 = dma.done [#allocation6], 16384
    $region29: #{tpu_custom_call.1} parent=1 // pred_fallthru
      _
    %v63 = vld [vmem:[#allocation2] sm:$0xff]
    %v64 = vld [vmem:[#allocation2 + $0x8] sm:$0xff]
    %v65 = vld [vmem:[#allocation5] sm:$0xf]
    %v66 = vld [vmem:[%s2] sm:$0x1]
    %v67 = vld [vmem:[#allocation7] sm:$0xff]
    %v68 = vld [vmem:[#allocation7 + $0x8] sm:$0xff]
    %v69 = vld [vmem:[#allocation7 + $0x10] sm:$0xff]
    %v70 = vld [vmem:[#allocation7 + $0x18] sm:$0xff]
    %v71 = vld [vmem:[#allocation7 + $0x20] sm:$0xff]
    %v72 = vld [vmem:[#allocation7 + $0x28] sm:$0xff]
    %v73 = vld [vmem:[#allocation7 + $0x30] sm:$0xff]
    %v74 = vld [vmem:[#allocation7 + $0x38] sm:$0xff]
    %v75 = vld [vmem:[#allocation7 + $0x40] sm:$0xff]
    %v76 = vld [vmem:[#allocation7 + $0x48] sm:$0xff]
    %v77 = vld [vmem:[#allocation7 + $0x50] sm:$0xff]
    %v78 = vld [vmem:[#allocation7 + $0x58] sm:$0xff]
    %v79 = vld [vmem:[#allocation7 + $0x60] sm:$0xff]
    %v80 = vld [vmem:[#allocation7 + $0x68] sm:$0xff]
    %v81 = vld [vmem:[#allocation7 + $0x70] sm:$0xff]
    %v82 = vld [vmem:[#allocation7 + $0x78] sm:$0xff]
    %v83 = vld [vmem:[#allocation7 + $0x80] sm:$0xff]
    %v84 = vld [vmem:[#allocation7 + $0x88] sm:$0xff]
    %v85 = vld [vmem:[#allocation7 + $0x90] sm:$0xff]
    %v86 = vld [vmem:[#allocation7 + $0x98] sm:$0xff]
    %v87 = vld [vmem:[#allocation7 + $0xa0] sm:$0xff]
    %v88 = vld [vmem:[#allocation7 + $0xa8] sm:$0xff]
    %v89 = vld [vmem:[#allocation7 + $0xb0] sm:$0xff]
    %v90 = vld [vmem:[#allocation7 + $0xb8] sm:$0xff]
    %v91 = vld [vmem:[#allocation7 + $0xc0] sm:$0xff]
    %v92 = vld [vmem:[#allocation7 + $0xc8] sm:$0xff]
    %v93 = vld [vmem:[#allocation7 + $0xd0] sm:$0xff]
    %v94 = vld [vmem:[#allocation7 + $0xd8] sm:$0xff]
    %v95 = vld [vmem:[#allocation7 + $0xe0] sm:$0xff]
    %v96 = vld [vmem:[#allocation7 + $0xe8] sm:$0xff]
    %v97 = vld [vmem:[#allocation7 + $0xf0] sm:$0xff]
    %v98 = vld [vmem:[#allocation7 + $0xf8] sm:$0xff]
    %v99 = vld [vmem:[#allocation7 + $0x100] sm:$0xff]
    %v100 = vld [vmem:[#allocation7 + $0x108] sm:$0xff]
    %v101 = vld [vmem:[#allocation7 + $0x110] sm:$0xff]
    %v102 = vld [vmem:[#allocation7 + $0x118] sm:$0xff]
    %v103 = vld [vmem:[#allocation7 + $0x120] sm:$0xff]
    %v104 = vld [vmem:[#allocation7 + $0x128] sm:$0xff]
    %v105 = vld [vmem:[#allocation7 + $0x130] sm:$0xff]
    %v106 = vld [vmem:[#allocation7 + $0x138] sm:$0xff]
    %v107 = vld [vmem:[#allocation7 + $0x140] sm:$0xff]
    %v108 = vld [vmem:[#allocation7 + $0x148] sm:$0xff]
    %v109 = vld [vmem:[#allocation7 + $0x150] sm:$0xff]
    %v110 = vld [vmem:[#allocation7 + $0x158] sm:$0xff]
    %v111 = vld [vmem:[#allocation7 + $0x160] sm:$0xff]
    %v112 = vld [vmem:[#allocation7 + $0x168] sm:$0xff]
    %v113 = vld [vmem:[#allocation7 + $0x170] sm:$0xff]
    %v114 = vld [vmem:[#allocation7 + $0x178] sm:$0xff]
    %v115 = vld [vmem:[#allocation7 + $0x180] sm:$0xff]
    %v116 = vld [vmem:[#allocation7 + $0x188] sm:$0xff]
    %v117 = vld [vmem:[#allocation7 + $0x190] sm:$0xff]
    %v118 = vld [vmem:[#allocation7 + $0x198] sm:$0xff]
    %v119 = vld [vmem:[#allocation7 + $0x1a0] sm:$0xff]
    %v120 = vld [vmem:[#allocation7 + $0x1a8] sm:$0xff]
    %v121 = vld [vmem:[#allocation7 + $0x1b0] sm:$0xff]
    %v122 = vld [vmem:[#allocation7 + $0x1b8] sm:$0xff]
    %v123 = vld [vmem:[#allocation7 + $0x1c0] sm:$0xff]
    %v124 = vld [vmem:[#allocation7 + $0x1c8] sm:$0xff]
    %v125 = vld [vmem:[#allocation7 + $0x1d0] sm:$0xff]
    %v126 = vld [vmem:[#allocation7 + $0x1d8] sm:$0xff]
    %v127 = vld [vmem:[#allocation7 + $0x1e0] sm:$0xff]
    %v128 = vld [vmem:[#allocation7 + $0x1e8] sm:$0xff]
    %v129 = vld [vmem:[#allocation7 + $0x1f0] sm:$0xff]
    %v130 = vld [vmem:[#allocation7 + $0x1f8] sm:$0xff]
    %s131 = scalar_lea.vmem [#allocation7], 512
    %v132 = vld [vmem:[%s131] sm:$0xff]
    %v133 = vld [vmem:[%s131 + $0x8] sm:$0xff]
    %v134 = vld [vmem:[%s131 + $0x10] sm:$0xff]
    %v135 = vld [vmem:[%s131 + $0x18] sm:$0xff]
    %v136 = vld [vmem:[%s131 + $0x20] sm:$0xff]
    %v137 = vld [vmem:[%s131 + $0x28] sm:$0xff]
    %v138 = vld [vmem:[%s131 + $0x30] sm:$0xff]
    %v139 = vld [vmem:[%s131 + $0x38] sm:$0xff]
    %v140 = vld [vmem:[%s131 + $0x40] sm:$0xff]
    %v141 = vld [vmem:[%s131 + $0x48] sm:$0xff]
    %v142 = vld [vmem:[%s131 + $0x50] sm:$0xff]
    %v143 = vld [vmem:[%s131 + $0x58] sm:$0xff]
    %v144 = vld [vmem:[%s131 + $0x60] sm:$0xff]
    %v145 = vld [vmem:[%s131 + $0x68] sm:$0xff]
    %v146 = vld [vmem:[%s131 + $0x70] sm:$0xff]
    %v147 = vld [vmem:[%s131 + $0x78] sm:$0xff]
    %v148 = vld [vmem:[%s131 + $0x80] sm:$0xff]
    %v149 = vld [vmem:[%s131 + $0x88] sm:$0xff]
    %v150 = vld [vmem:[%s131 + $0x90] sm:$0xff]
    %v151 = vld [vmem:[%s131 + $0x98] sm:$0xff]
    %v152 = vld [vmem:[%s131 + $0xa0] sm:$0xff]
    %v153 = vld [vmem:[%s131 + $0xa8] sm:$0xff]
    %v154 = vld [vmem:[%s131 + $0xb0] sm:$0xff]
    %v155 = vld [vmem:[%s131 + $0xb8] sm:$0xff]
    %v156 = vld [vmem:[%s131 + $0xc0] sm:$0xff]
    %v157 = vld [vmem:[%s131 + $0xc8] sm:$0xff]
    %v158 = vld [vmem:[%s131 + $0xd0] sm:$0xff]
    %v159 = vld [vmem:[%s131 + $0xd8] sm:$0xff]
    %v160 = vld [vmem:[%s131 + $0xe0] sm:$0xff]
    %v161 = vld [vmem:[%s131 + $0xe8] sm:$0xff]
    %v162 = vld [vmem:[%s131 + $0xf0] sm:$0xff]
    %v163 = vld [vmem:[%s131 + $0xf8] sm:$0xff]
    %v164 = vld [vmem:[%s131 + $0x100] sm:$0xff]
    %v165 = vld [vmem:[%s131 + $0x108] sm:$0xff]
    %v166 = vld [vmem:[%s131 + $0x110] sm:$0xff]
    %v167 = vld [vmem:[%s131 + $0x118] sm:$0xff]
    %v168 = vld [vmem:[%s131 + $0x120] sm:$0xff]
    %v169 = vld [vmem:[%s131 + $0x128] sm:$0xff]
    %v170 = vld [vmem:[%s131 + $0x130] sm:$0xff]
    %v171 = vld [vmem:[%s131 + $0x138] sm:$0xff]
    %v172 = vld [vmem:[%s131 + $0x140] sm:$0xff]
    %v173 = vld [vmem:[%s131 + $0x148] sm:$0xff]
    %v174 = vld [vmem:[%s131 + $0x150] sm:$0xff]
    %v175 = vld [vmem:[%s131 + $0x158] sm:$0xff]
    %v176 = vld [vmem:[%s131 + $0x160] sm:$0xff]
    %v177 = vld [vmem:[%s131 + $0x168] sm:$0xff]
    %v178 = vld [vmem:[%s131 + $0x170] sm:$0xff]
    %v179 = vld [vmem:[%s131 + $0x178] sm:$0xff]
    %v180 = vld [vmem:[%s131 + $0x180] sm:$0xff]
    %v181 = vld [vmem:[%s131 + $0x188] sm:$0xff]
    %v182 = vld [vmem:[%s131 + $0x190] sm:$0xff]
    %v183 = vld [vmem:[%s131 + $0x198] sm:$0xff]
    %v184 = vld [vmem:[%s131 + $0x1a0] sm:$0xff]
    %v185 = vld [vmem:[%s131 + $0x1a8] sm:$0xff]
    %v186 = vld [vmem:[%s131 + $0x1b0] sm:$0xff]
    %v187 = vld [vmem:[%s131 + $0x1b8] sm:$0xff]
    %v188 = vld [vmem:[%s131 + $0x1c0] sm:$0xff]
    %v189 = vld [vmem:[%s131 + $0x1c8] sm:$0xff]
    %v190 = vld [vmem:[%s131 + $0x1d0] sm:$0xff]
    %v191 = vld [vmem:[%s131 + $0x1d8] sm:$0xff]
    %v192 = vld [vmem:[%s131 + $0x1e0] sm:$0xff]
    %v193 = vld [vmem:[%s131 + $0x1e8] sm:$0xff]
    %v194 = vld [vmem:[%s131 + $0x1f0] sm:$0xff]
    %v195 = vld [vmem:[%s131 + $0x1f8] sm:$0xff]
    %198 = vst [vmem:[#allocation1] ss:$2 sm:$0xff] %v63
    %v199 = vld.sshfl [vmem:[#allocation1] sm:$0xff pattern:$0x75316420]
    %v200 = vld.sshfl [vmem:[#allocation1 + $0x8] sm:$0xff pattern:$0x75316420]
    %s201 = scalar_lea.vmem [#allocation1], 16
    %202 = vst [vmem:[%s201] ss:$2 sm:$0xff] %v64
    %v203 = vld.sshfl [vmem:[#allocation1 + $0x10] sm:$0xff pattern:$0x75316420]
    %v204 = vld.sshfl [vmem:[#allocation1 + $0x18] sm:$0xff pattern:$0x75316420]
    %vm209 = vcmask 1043456
    %v210 = vsel %vm209, %v199, 0.0
    %v211 = vsel %vm209, %v200, 0.0
    %v212 = vadd.f32 %v210, %v211
    %213 = vadd.xlane.f32.xlu0 %v212
    %v214 = vpop.xlane.xlu0 %213
    %v215 = vsel %vm209, %v203, 0.0
    %v216 = vsel %vm209, %v204, 0.0
    %v217 = vadd.f32 %v215, %v216
    %218 = vadd.xlane.f32.xlu0 %v217
    %v219 = vpop.xlane.xlu0 %218
    %v220 = vmul.f32 %v214, 0.00390625
    %v221 = vmul.f32 %v219, 0.00390625
    %v223 = vperm.slane %v66, 0
    %v227 = vlaneseq
    %v228 = vand.u32 %v227, 127
    %v229 = vperm.slane %v220, %v228
    %v230 = vperm.slane %v221, %v228
    %vm231 = vcmask 1041409
    %v232 = vsel %vm231, %v230, %v229
    %vm233 = vcmask 31744
    %v234 = vsel %vm233, %v232, 0
    %v237 = vsel %vm209, %v65, 0
    %239 = vmatpush.msra.mxu0 0.0
    %240 = vmatpush.msra.mxu0 0.0
    %241 = vmatpush.msra.mxu0 0.0
    %242 = vmatpush.msra.mxu0 0.0
    %243 = vmatpush.msra.mxu0 0.0
    %244 = vmatpush.msra.mxu0 0.0
    %245 = vmatpush.msra.mxu0 0.0
    %246 = vmatpush.msra.mxu0 0.0
    %247 = vmatpush.msra.mxu0 0.0
    %248 = vmatpush.msra.mxu0 0.0
    %249 = vmatpush.msra.mxu0 0.0
    %250 = vmatpush.msra.mxu0 0.0
    %251 = vmatpush.msra.mxu0 0.0
    %252 = vmatpush.msra.mxu0 0.0
    %253 = vmatpush.msra.mxu0 0.0
    %v254 = vand.u32 %v237, 4294901760
    %255 = vmatpush.msra.mxu0 %v254
    %v256 = vand.u32 %v234, 4294901760
    %v257 = vsub.f32 %v234, %v256
    %v258 = vand.u32 %v257, 4294901760
    %v259 = vsub.f32 %v257, %v258
    %v260 = vand.u32 %v259, 4294901760
    %261 = vmatmul.f32.gmra.mxu0 %v260
    %v262 = vpop.f32.mrf.mxu0
    %v263 = vadd.f32 %v223, %v262
    %264 = vdwg.mxu0
    %265 = vmatpush.msra.mxu0 0.0
    %266 = vmatpush.msra.mxu0 0.0
    %267 = vmatpush.msra.mxu0 0.0
    %268 = vmatpush.msra.mxu0 0.0
    %269 = vmatpush.msra.mxu0 0.0
    %270 = vmatpush.msra.mxu0 0.0
    %271 = vmatpush.msra.mxu0 0.0
    %272 = vmatpush.msra.mxu0 0.0
    %273 = vmatpush.msra.mxu0 0.0
    %274 = vmatpush.msra.mxu0 0.0
    %275 = vmatpush.msra.mxu0 0.0
    %276 = vmatpush.msra.mxu0 0.0
    %277 = vmatpush.msra.mxu0 0.0
    %278 = vmatpush.msra.mxu0 0.0
    %279 = vmatpush.msra.mxu0 0.0
    %v280 = vand.u32 %v237, 4294901760
    %v281 = vsub.f32 %v237, %v280
    %v282 = vand.u32 %v281, 4294901760
    %v283 = vsub.f32 %v281, %v282
    %v284 = vand.u32 %v283, 4294901760
    %285 = vmatpush.msra.mxu0 %v284
    %v286 = vand.u32 %v234, 4294901760
    %287 = vmatmul.f32.gmra.mxu0 %v286
    %v288 = vpop.f32.mrf.mxu0
    %v289 = vadd.f32 %v263, %v288
    %290 = vdwg.mxu0
    %291 = vmatpush.msra.mxu0 0.0
    %292 = vmatpush.msra.mxu0 0.0
    %293 = vmatpush.msra.mxu0 0.0
    %294 = vmatpush.msra.mxu0 0.0
    %295 = vmatpush.msra.mxu0 0.0
    %296 = vmatpush.msra.mxu0 0.0
    %297 = vmatpush.msra.mxu0 0.0
    %298 = vmatpush.msra.mxu0 0.0
    %299 = vmatpush.msra.mxu0 0.0
    %300 = vmatpush.msra.mxu0 0.0
    %301 = vmatpush.msra.mxu0 0.0
    %302 = vmatpush.msra.mxu0 0.0
    %303 = vmatpush.msra.mxu0 0.0
    %304 = vmatpush.msra.mxu0 0.0
    %305 = vmatpush.msra.mxu0 0.0
    %v306 = vand.u32 %v237, 4294901760
    %v307 = vsub.f32 %v237, %v306
    %308 = vmatpush.msra.mxu0 %v307
    %v309 = vand.u32 %v234, 4294901760
    %v310 = vsub.f32 %v234, %v309
    %311 = vmatmul.f32.gmra.mxu0 %v310
    %v312 = vpop.f32.mrf.mxu0
    %v313 = vadd.f32 %v289, %v312
    %314 = vdwg.mxu0
    %315 = vmatpush.msra.mxu0 0.0
    %316 = vmatpush.msra.mxu0 0.0
    %317 = vmatpush.msra.mxu0 0.0
    %318 = vmatpush.msra.mxu0 0.0
    %319 = vmatpush.msra.mxu0 0.0
    %320 = vmatpush.msra.mxu0 0.0
    %321 = vmatpush.msra.mxu0 0.0
    %322 = vmatpush.msra.mxu0 0.0
    %323 = vmatpush.msra.mxu0 0.0
    %324 = vmatpush.msra.mxu0 0.0
    %325 = vmatpush.msra.mxu0 0.0
    %326 = vmatpush.msra.mxu0 0.0
    %327 = vmatpush.msra.mxu0 0.0
    %328 = vmatpush.msra.mxu0 0.0
    %329 = vmatpush.msra.mxu0 0.0
    %v330 = vand.u32 %v237, 4294901760
    %331 = vmatpush.msra.mxu0 %v330
    %v332 = vand.u32 %v234, 4294901760
    %v333 = vsub.f32 %v234, %v332
    %v334 = vand.u32 %v333, 4294901760
    %335 = vmatmul.f32.gmra.mxu0 %v334
    %v336 = vpop.f32.mrf.mxu0
    %v337 = vadd.f32 %v313, %v336
    %338 = vdwg.mxu0
    %339 = vmatpush.msra.mxu0 0.0
    %340 = vmatpush.msra.mxu0 0.0
    %341 = vmatpush.msra.mxu0 0.0
    %342 = vmatpush.msra.mxu0 0.0
    %343 = vmatpush.msra.mxu0 0.0
    %344 = vmatpush.msra.mxu0 0.0
    %345 = vmatpush.msra.mxu0 0.0
    %346 = vmatpush.msra.mxu0 0.0
    %347 = vmatpush.msra.mxu0 0.0
    %348 = vmatpush.msra.mxu0 0.0
    %349 = vmatpush.msra.mxu0 0.0
    %350 = vmatpush.msra.mxu0 0.0
    %351 = vmatpush.msra.mxu0 0.0
    %352 = vmatpush.msra.mxu0 0.0
    %353 = vmatpush.msra.mxu0 0.0
    %v354 = vand.u32 %v237, 4294901760
    %v355 = vsub.f32 %v237, %v354
    %v356 = vand.u32 %v355, 4294901760
    %357 = vmatpush.msra.mxu0 %v356
    %v358 = vand.u32 %v234, 4294901760
    %359 = vmatmul.f32.gmra.mxu0 %v358
    %v360 = vpop.f32.mrf.mxu0
    %v361 = vadd.f32 %v337, %v360
    %362 = vdwg.mxu0
    %363 = vmatpush.msra.mxu0 0.0
    %364 = vmatpush.msra.mxu0 0.0
    %365 = vmatpush.msra.mxu0 0.0
    %366 = vmatpush.msra.mxu0 0.0
    %367 = vmatpush.msra.mxu0 0.0
    %368 = vmatpush.msra.mxu0 0.0
    %369 = vmatpush.msra.mxu0 0.0
    %370 = vmatpush.msra.mxu0 0.0
    %371 = vmatpush.msra.mxu0 0.0
    %372 = vmatpush.msra.mxu0 0.0
    %373 = vmatpush.msra.mxu0 0.0
    %374 = vmatpush.msra.mxu0 0.0
    %375 = vmatpush.msra.mxu0 0.0
    %376 = vmatpush.msra.mxu0 0.0
    %377 = vmatpush.msra.mxu0 0.0
    %v378 = vand.u32 %v237, 4294901760
    %379 = vmatpush.msra.mxu0 %v378
    %v380 = vand.u32 %v234, 4294901760
    %381 = vmatmul.f32.gmra.mxu0 %v380
    %v382 = vpop.f32.mrf.mxu0
    %v383 = vadd.f32 %v361, %v382
    %384 = vdwg.mxu0
    %v385 = vsub.f32 0.0, %v383
    %v386 = vmul.f32 %v385, 1.442695
    %v387 = vpow.pop %v386
    %v388 = vadd.f32 %v387, 1.0
    %v389 = vrcp.pop %v388
    %v390 = vmul.f32 %v388, %v389
    %v391 = vsub.f32 1.0, %v390
    %v392 = vmul.f32 %v389, %v391
    %v393 = vadd.f32 %v389, %v392
    %vm394 = vweird.f32 %v388
    %vm395 = vweird.f32 %v389
    %vm396 = vmor %vm394, %vm395
    %v397 = vsel %vm396, %v389, %v393
    %v398 = vand.u32 2147483647, %v388
    %vm399 = vcmp.eq.f32.partialorder %v398, 8.507059e+37
    %v400 = vand.u32 %v388, 2147483648
    %v401 = vor.u32 1.1754944e-38, %v400
    %v402 = vsel %vm399, %v401, %v397
    %v403 = vmul.f32 1.0, %v402
    %v404 = vperm.slane %v403, 0
    %v405 = vlaneseq
    %v406 = vshrl.u32 %v405, 7
    %408 = vset.pattern.permute.xlu0 %v406
    %409 = vperm.xlu0 %408, %v404
    %v410 = vpop.permute.xlu0 %409
    %v411 = vperm.slane %v403, 1
    %v412 = vlaneseq
    %v413 = vshrl.u32 %v412, 7
    %415 = vset.pattern.permute.xlu0 %v413
    %416 = vperm.xlu0 %415, %v411
    %v417 = vpop.permute.xlu0 %416
    %v421 = vunpack.c.l.s4 839922192
    %v422 = vunpack.c.0.s8 %v421
    %v423 = vperm.slane %v410, %v422
    %v425 = vunpack.c.l.s4 839922192
    %v426 = vunpack.c.0.s8 %v425
    %v427 = vperm.slane %v417, %v426
    %v430 = vmul.f32 %v63, %v423
    %v431 = vmul.f32 %v64, %v427
    %434 = vst [vmem:[#allocation1] ss:$2 sm:$0xff] %v430
    %v435 = vld.sshfl [vmem:[#allocation1] sm:$0xff pattern:$0x75316420]
    %v436 = vld.sshfl [vmem:[#allocation1 + $0x8] sm:$0xff pattern:$0x75316420]
    %s437 = scalar_lea.vmem [#allocation1], 16
    %438 = vst [vmem:[%s437] ss:$2 sm:$0xff] %v431
    %v439 = vld.sshfl [vmem:[#allocation1 + $0x10] sm:$0xff pattern:$0x75316420]
    %v440 = vld.sshfl [vmem:[#allocation1 + $0x18] sm:$0xff pattern:$0x75316420]
    %v445 = vsel %vm209, %v435, 0.0
    %v446 = vrot.slane %v445, 4
    %v447 = vadd.f32 %v445, %v446
    %v448 = vrot.slane %v447, 2
    %v449 = vadd.f32 %v447, %v448
    %v450 = vrot.slane %v449, 1
    %v451 = vadd.f32 %v449, %v450
    %v452 = vsel %vm209, %v436, 0.0
    %v453 = vrot.slane %v452, 4
    %v454 = vadd.f32 %v452, %v453
    %v455 = vrot.slane %v454, 2
    %v456 = vadd.f32 %v454, %v455
    %v457 = vrot.slane %v456, 1
    %v458 = vadd.f32 %v456, %v457
    %v459 = vsel %vm209, %v439, 0.0
    %v460 = vrot.slane %v459, 4
    %v461 = vadd.f32 %v459, %v460
    %v462 = vrot.slane %v461, 2
    %v463 = vadd.f32 %v461, %v462
    %v464 = vrot.slane %v463, 1
    %v465 = vadd.f32 %v463, %v464
    %v466 = vsel %vm209, %v440, 0.0
    %v467 = vrot.slane %v466, 4
    %v468 = vadd.f32 %v466, %v467
    %v469 = vrot.slane %v468, 2
    %v470 = vadd.f32 %v468, %v469
    %v471 = vrot.slane %v470, 1
    %v472 = vadd.f32 %v470, %v471
    %v473 = vmul.f32 %v451, 0.25
    %v474 = vmul.f32 %v458, 0.25
    %v475 = vmul.f32 %v465, 0.25
    %v476 = vmul.f32 %v472, 0.25
    %477 = vst [vmem:[#allocation1] ss:$2 sm:$0xff] %v430
    %v478 = vld.sshfl [vmem:[#allocation1] sm:$0xff pattern:$0x75316420]
    %v479 = vld.sshfl [vmem:[#allocation1 + $0x8] sm:$0xff pattern:$0x75316420]
    %s480 = scalar_lea.vmem [#allocation1], 16
    %481 = vst [vmem:[%s480] ss:$2 sm:$0xff] %v431
    %v482 = vld.sshfl [vmem:[#allocation1 + $0x10] sm:$0xff pattern:$0x75316420]
    %v483 = vld.sshfl [vmem:[#allocation1 + $0x18] sm:$0xff pattern:$0x75316420]
    %v488 = vsel %vm209, %v478, -inf
    %v489 = vrot.slane %v488, 4
    %v490 = vmax.f32 %v488, %v489
    %v491 = vrot.slane %v490, 2
    %v492 = vmax.f32 %v490, %v491
    %v493 = vrot.slane %v492, 1
    %v494 = vmax.f32 %v492, %v493
    %v495 = vsel %vm209, %v479, -inf
    %v496 = vrot.slane %v495, 4
    %v497 = vmax.f32 %v495, %v496
    %v498 = vrot.slane %v497, 2
    %v499 = vmax.f32 %v497, %v498
    %v500 = vrot.slane %v499, 1
    %v501 = vmax.f32 %v499, %v500
    %v502 = vsel %vm209, %v482, -inf
    %v503 = vrot.slane %v502, 4
    %v504 = vmax.f32 %v502, %v503
    %v505 = vrot.slane %v504, 2
    %v506 = vmax.f32 %v504, %v505
    %v507 = vrot.slane %v506, 1
    %v508 = vmax.f32 %v506, %v507
    %v509 = vsel %vm209, %v483, -inf
    %v510 = vrot.slane %v509, 4
    %v511 = vmax.f32 %v509, %v510
    %v512 = vrot.slane %v511, 2
    %v513 = vmax.f32 %v511, %v512
    %v514 = vrot.slane %v513, 1
    %v515 = vmax.f32 %v513, %v514
    %v520 = vsel %vm231, %v508, %v494
    %v521 = vsel %vm231, %v515, %v501
    %v524 = vand.u32 %v162, 4294901760
    %525 = vmatpush.msra.mxu0 %v524
    %v526 = vand.u32 %v160, 4294901760
    %527 = vmatpush.msra.mxu0 %v526
    %v528 = vand.u32 %v158, 4294901760
    %529 = vmatpush.msra.mxu0 %v528
    %v530 = vand.u32 %v156, 4294901760
    %531 = vmatpush.msra.mxu0 %v530
    %v532 = vand.u32 %v154, 4294901760
    %533 = vmatpush.msra.mxu0 %v532
    %v534 = vand.u32 %v152, 4294901760
    %535 = vmatpush.msra.mxu0 %v534
    %v536 = vand.u32 %v150, 4294901760
    %537 = vmatpush.msra.mxu0 %v536
    %v538 = vand.u32 %v148, 4294901760
    %539 = vmatpush.msra.mxu0 %v538
    %v540 = vand.u32 %v146, 4294901760
    %541 = vmatpush.msra.mxu0 %v540
    %v542 = vand.u32 %v144, 4294901760
    %543 = vmatpush.msra.mxu0 %v542
    %v544 = vand.u32 %v142, 4294901760
    %545 = vmatpush.msra.mxu0 %v544
    %v546 = vand.u32 %v140, 4294901760
    %547 = vmatpush.msra.mxu0 %v546
    %v548 = vand.u32 %v138, 4294901760
    %549 = vmatpush.msra.mxu0 %v548
    %v550 = vand.u32 %v136, 4294901760
    %551 = vmatpush.msra.mxu0 %v550
    %v552 = vand.u32 %v134, 4294901760
    %553 = vmatpush.msra.mxu0 %v552
    %v554 = vand.u32 %v132, 4294901760
    %555 = vmatpush.msra.mxu0 %v554
    %v556 = vand.u32 %v520, 4294901760
    %v557 = vsub.f32 %v520, %v556
    %v558 = vand.u32 %v557, 4294901760
    %v559 = vsub.f32 %v557, %v558
    %v560 = vand.u32 %v559, 4294901760
    %561 = vmatmul.f32.gmra.mxu0 %v560
    %v562 = vpop.f32.mrf.mxu0
    %v563 = vadd.f32 0.0, %v562
    %564 = vdwg.mxu0
    %v565 = vand.u32 %v162, 4294901760
    %v566 = vsub.f32 %v162, %v565
    %v567 = vand.u32 %v566, 4294901760
    %v568 = vsub.f32 %v566, %v567
    %v569 = vand.u32 %v568, 4294901760
    %570 = vmatpush.msra.mxu0 %v569
    %v571 = vand.u32 %v160, 4294901760
    %v572 = vsub.f32 %v160, %v571
    %v573 = vand.u32 %v572, 4294901760
    %v574 = vsub.f32 %v572, %v573
    %v575 = vand.u32 %v574, 4294901760
    %576 = vmatpush.msra.mxu0 %v575
    %v577 = vand.u32 %v158, 4294901760
    %v578 = vsub.f32 %v158, %v577
    %v579 = vand.u32 %v578, 4294901760
    %v580 = vsub.f32 %v578, %v579
    %v581 = vand.u32 %v580, 4294901760
    %582 = vmatpush.msra.mxu0 %v581
    %v583 = vand.u32 %v156, 4294901760
    %v584 = vsub.f32 %v156, %v583
    %v585 = vand.u32 %v584, 4294901760
    %v586 = vsub.f32 %v584, %v585
    %v587 = vand.u32 %v586, 4294901760
    %588 = vmatpush.msra.mxu0 %v587
    %v589 = vand.u32 %v154, 4294901760
    %v590 = vsub.f32 %v154, %v589
    %v591 = vand.u32 %v590, 4294901760
    %v592 = vsub.f32 %v590, %v591
    %v593 = vand.u32 %v592, 4294901760
    %594 = vmatpush.msra.mxu0 %v593
    %v595 = vand.u32 %v152, 4294901760
    %v596 = vsub.f32 %v152, %v595
    %v597 = vand.u32 %v596, 4294901760
    %v598 = vsub.f32 %v596, %v597
    %v599 = vand.u32 %v598, 4294901760
    %600 = vmatpush.msra.mxu0 %v599
    %v601 = vand.u32 %v150, 4294901760
    %v602 = vsub.f32 %v150, %v601
    %v603 = vand.u32 %v602, 4294901760
    %v604 = vsub.f32 %v602, %v603
    %v605 = vand.u32 %v604, 4294901760
    %606 = vmatpush.msra.mxu0 %v605
    %v607 = vand.u32 %v148, 4294901760
    %v608 = vsub.f32 %v148, %v607
    %v609 = vand.u32 %v608, 4294901760
    %v610 = vsub.f32 %v608, %v609
    %v611 = vand.u32 %v610, 4294901760
    %612 = vmatpush.msra.mxu0 %v611
    %v613 = vand.u32 %v146, 4294901760
    %v614 = vsub.f32 %v146, %v613
    %v615 = vand.u32 %v614, 4294901760
    %v616 = vsub.f32 %v614, %v615
    %v617 = vand.u32 %v616, 4294901760
    %618 = vmatpush.msra.mxu0 %v617
    %v619 = vand.u32 %v144, 4294901760
    %v620 = vsub.f32 %v144, %v619
    %v621 = vand.u32 %v620, 4294901760
    %v622 = vsub.f32 %v620, %v621
    %v623 = vand.u32 %v622, 4294901760
    %624 = vmatpush.msra.mxu0 %v623
    %v625 = vand.u32 %v142, 4294901760
    %v626 = vsub.f32 %v142, %v625
    %v627 = vand.u32 %v626, 4294901760
    %v628 = vsub.f32 %v626, %v627
    %v629 = vand.u32 %v628, 4294901760
    %630 = vmatpush.msra.mxu0 %v629
    %v631 = vand.u32 %v140, 4294901760
    %v632 = vsub.f32 %v140, %v631
    %v633 = vand.u32 %v632, 4294901760
    %v634 = vsub.f32 %v632, %v633
    %v635 = vand.u32 %v634, 4294901760
    %636 = vmatpush.msra.mxu0 %v635
    %v637 = vand.u32 %v138, 4294901760
    %v638 = vsub.f32 %v138, %v637
    %v639 = vand.u32 %v638, 4294901760
    %v640 = vsub.f32 %v638, %v639
    %v641 = vand.u32 %v640, 4294901760
    %642 = vmatpush.msra.mxu0 %v641
    %v643 = vand.u32 %v136, 4294901760
    %v644 = vsub.f32 %v136, %v643
    %v645 = vand.u32 %v644, 4294901760
    %v646 = vsub.f32 %v644, %v645
    %v647 = vand.u32 %v646, 4294901760
    %648 = vmatpush.msra.mxu0 %v647
    %v649 = vand.u32 %v134, 4294901760
    %v650 = vsub.f32 %v134, %v649
    %v651 = vand.u32 %v650, 4294901760
    %v652 = vsub.f32 %v650, %v651
    %v653 = vand.u32 %v652, 4294901760
    %654 = vmatpush.msra.mxu0 %v653
    %v655 = vand.u32 %v132, 4294901760
    %v656 = vsub.f32 %v132, %v655
    %v657 = vand.u32 %v656, 4294901760
    %v658 = vsub.f32 %v656, %v657
    %v659 = vand.u32 %v658, 4294901760
    %660 = vmatpush.msra.mxu0 %v659
    %v661 = vand.u32 %v520, 4294901760
    %662 = vmatmul.f32.gmra.mxu0 %v661
    %v663 = vpop.f32.mrf.mxu0
    %v664 = vadd.f32 %v563, %v663
    %665 = vdwg.mxu0
    %v666 = vand.u32 %v162, 4294901760
    %v667 = vsub.f32 %v162, %v666
    %668 = vmatpush.msra.mxu0 %v667
    %v669 = vand.u32 %v160, 4294901760
    %v670 = vsub.f32 %v160, %v669
    %671 = vmatpush.msra.mxu0 %v670
    %v672 = vand.u32 %v158, 4294901760
    %v673 = vsub.f32 %v158, %v672
    %674 = vmatpush.msra.mxu0 %v673
    %v675 = vand.u32 %v156, 4294901760
    %v676 = vsub.f32 %v156, %v675
    %677 = vmatpush.msra.mxu0 %v676
    %v678 = vand.u32 %v154, 4294901760
    %v679 = vsub.f32 %v154, %v678
    %680 = vmatpush.msra.mxu0 %v679
    %v681 = vand.u32 %v152, 4294901760
    %v682 = vsub.f32 %v152, %v681
    %683 = vmatpush.msra.mxu0 %v682
    %v684 = vand.u32 %v150, 4294901760
    %v685 = vsub.f32 %v150, %v684
    %686 = vmatpush.msra.mxu0 %v685
    %v687 = vand.u32 %v148, 4294901760
    %v688 = vsub.f32 %v148, %v687
    %689 = vmatpush.msra.mxu0 %v688
    %v690 = vand.u32 %v146, 4294901760
    %v691 = vsub.f32 %v146, %v690
    %692 = vmatpush.msra.mxu0 %v691
    %v693 = vand.u32 %v144, 4294901760
    %v694 = vsub.f32 %v144, %v693
    %695 = vmatpush.msra.mxu0 %v694
    %v696 = vand.u32 %v142, 4294901760
    %v697 = vsub.f32 %v142, %v696
    %698 = vmatpush.msra.mxu0 %v697
    %v699 = vand.u32 %v140, 4294901760
    %v700 = vsub.f32 %v140, %v699
    %701 = vmatpush.msra.mxu0 %v700
    %v702 = vand.u32 %v138, 4294901760
    %v703 = vsub.f32 %v138, %v702
    %704 = vmatpush.msra.mxu0 %v703
    %v705 = vand.u32 %v136, 4294901760
    %v706 = vsub.f32 %v136, %v705
    %707 = vmatpush.msra.mxu0 %v706
    %v708 = vand.u32 %v134, 4294901760
    %v709 = vsub.f32 %v134, %v708
    %710 = vmatpush.msra.mxu0 %v709
    %v711 = vand.u32 %v132, 4294901760
    %v712 = vsub.f32 %v132, %v711
    %713 = vmatpush.msra.mxu0 %v712
    %v714 = vand.u32 %v520, 4294901760
    %v715 = vsub.f32 %v520, %v714
    %716 = vmatmul.f32.gmra.mxu0 %v715
    %v717 = vpop.f32.mrf.mxu0
    %v718 = vadd.f32 %v664, %v717
    %719 = vdwg.mxu0
    %v720 = vand.u32 %v162, 4294901760
    %721 = vmatpush.msra.mxu0 %v720
    %v722 = vand.u32 %v160, 4294901760
    %723 = vmatpush.msra.mxu0 %v722
    %v724 = vand.u32 %v158, 4294901760
    %725 = vmatpush.msra.mxu0 %v724
    %v726 = vand.u32 %v156, 4294901760
    %727 = vmatpush.msra.mxu0 %v726
    %v728 = vand.u32 %v154, 4294901760
    %729 = vmatpush.msra.mxu0 %v728
    %v730 = vand.u32 %v152, 4294901760
    %731 = vmatpush.msra.mxu0 %v730
    %v732 = vand.u32 %v150, 4294901760
    %733 = vmatpush.msra.mxu0 %v732
    %v734 = vand.u32 %v148, 4294901760
    %735 = vmatpush.msra.mxu0 %v734
    %v736 = vand.u32 %v146, 4294901760
    %737 = vmatpush.msra.mxu0 %v736
    %v738 = vand.u32 %v144, 4294901760
    %739 = vmatpush.msra.mxu0 %v738
    %v740 = vand.u32 %v142, 4294901760
    %741 = vmatpush.msra.mxu0 %v740
    %v742 = vand.u32 %v140, 4294901760
    %743 = vmatpush.msra.mxu0 %v742
    %v744 = vand.u32 %v138, 4294901760
    %745 = vmatpush.msra.mxu0 %v744
    %v746 = vand.u32 %v136, 4294901760
    %747 = vmatpush.msra.mxu0 %v746
    %v748 = vand.u32 %v134, 4294901760
    %749 = vmatpush.msra.mxu0 %v748
    %v750 = vand.u32 %v132, 4294901760
    %751 = vmatpush.msra.mxu0 %v750
    %v752 = vand.u32 %v520, 4294901760
    %v753 = vsub.f32 %v520, %v752
    %v754 = vand.u32 %v753, 4294901760
    %755 = vmatmul.f32.gmra.mxu0 %v754
    %v756 = vpop.f32.mrf.mxu0
    %v757 = vadd.f32 %v718, %v756
    %758 = vdwg.mxu0
    %v759 = vand.u32 %v162, 4294901760
    %v760 = vsub.f32 %v162, %v759
    %v761 = vand.u32 %v760, 4294901760
    %762 = vmatpush.msra.mxu0 %v761
    %v763 = vand.u32 %v160, 4294901760
    %v764 = vsub.f32 %v160, %v763
    %v765 = vand.u32 %v764, 4294901760
    %766 = vmatpush.msra.mxu0 %v765
    %v767 = vand.u32 %v158, 4294901760
    %v768 = vsub.f32 %v158, %v767
    %v769 = vand.u32 %v768, 4294901760
    %770 = vmatpush.msra.mxu0 %v769
    %v771 = vand.u32 %v156, 4294901760
    %v772 = vsub.f32 %v156, %v771
    %v773 = vand.u32 %v772, 4294901760
    %774 = vmatpush.msra.mxu0 %v773
    %v775 = vand.u32 %v154, 4294901760
    %v776 = vsub.f32 %v154, %v775
    %v777 = vand.u32 %v776, 4294901760
    %778 = vmatpush.msra.mxu0 %v777
    %v779 = vand.u32 %v152, 4294901760
    %v780 = vsub.f32 %v152, %v779
    %v781 = vand.u32 %v780, 4294901760
    %782 = vmatpush.msra.mxu0 %v781
    %v783 = vand.u32 %v150, 4294901760
    %v784 = vsub.f32 %v150, %v783
    %v785 = vand.u32 %v784, 4294901760
    %786 = vmatpush.msra.mxu0 %v785
    %v787 = vand.u32 %v148, 4294901760
    %v788 = vsub.f32 %v148, %v787
    %v789 = vand.u32 %v788, 4294901760
    %790 = vmatpush.msra.mxu0 %v789
    %v791 = vand.u32 %v146, 4294901760
    %v792 = vsub.f32 %v146, %v791
    %v793 = vand.u32 %v792, 4294901760
    %794 = vmatpush.msra.mxu0 %v793
    %v795 = vand.u32 %v144, 4294901760
    %v796 = vsub.f32 %v144, %v795
    %v797 = vand.u32 %v796, 4294901760
    %798 = vmatpush.msra.mxu0 %v797
    %v799 = vand.u32 %v142, 4294901760
    %v800 = vsub.f32 %v142, %v799
    %v801 = vand.u32 %v800, 4294901760
    %802 = vmatpush.msra.mxu0 %v801
    %v803 = vand.u32 %v140, 4294901760
    %v804 = vsub.f32 %v140, %v803
    %v805 = vand.u32 %v804, 4294901760
    %806 = vmatpush.msra.mxu0 %v805
    %v807 = vand.u32 %v138, 4294901760
    %v808 = vsub.f32 %v138, %v807
    %v809 = vand.u32 %v808, 4294901760
    %810 = vmatpush.msra.mxu0 %v809
    %v811 = vand.u32 %v136, 4294901760
    %v812 = vsub.f32 %v136, %v811
    %v813 = vand.u32 %v812, 4294901760
    %814 = vmatpush.msra.mxu0 %v813
    %v815 = vand.u32 %v134, 4294901760
    %v816 = vsub.f32 %v134, %v815
    %v817 = vand.u32 %v816, 4294901760
    %818 = vmatpush.msra.mxu0 %v817
    %v819 = vand.u32 %v132, 4294901760
    %v820 = vsub.f32 %v132, %v819
    %v821 = vand.u32 %v820, 4294901760
    %822 = vmatpush.msra.mxu0 %v821
    %v823 = vand.u32 %v520, 4294901760
    %824 = vmatmul.f32.gmra.mxu0 %v823
    %v825 = vpop.f32.mrf.mxu0
    %v826 = vadd.f32 %v757, %v825
    %827 = vdwg.mxu0
    %v828 = vand.u32 %v162, 4294901760
    %829 = vmatpush.msra.mxu0 %v828
    %v830 = vand.u32 %v160, 4294901760
    %831 = vmatpush.msra.mxu0 %v830
    %v832 = vand.u32 %v158, 4294901760
    %833 = vmatpush.msra.mxu0 %v832
    %v834 = vand.u32 %v156, 4294901760
    %835 = vmatpush.msra.mxu0 %v834
    %v836 = vand.u32 %v154, 4294901760
    %837 = vmatpush.msra.mxu0 %v836
    %v838 = vand.u32 %v152, 4294901760
    %839 = vmatpush.msra.mxu0 %v838
    %v840 = vand.u32 %v150, 4294901760
    %841 = vmatpush.msra.mxu0 %v840
    %v842 = vand.u32 %v148, 4294901760
    %843 = vmatpush.msra.mxu0 %v842
    %v844 = vand.u32 %v146, 4294901760
    %845 = vmatpush.msra.mxu0 %v844
    %v846 = vand.u32 %v144, 4294901760
    %847 = vmatpush.msra.mxu0 %v846
    %v848 = vand.u32 %v142, 4294901760
    %849 = vmatpush.msra.mxu0 %v848
    %v850 = vand.u32 %v140, 4294901760
    %851 = vmatpush.msra.mxu0 %v850
    %v852 = vand.u32 %v138, 4294901760
    %853 = vmatpush.msra.mxu0 %v852
    %v854 = vand.u32 %v136, 4294901760
    %855 = vmatpush.msra.mxu0 %v854
    %v856 = vand.u32 %v134, 4294901760
    %857 = vmatpush.msra.mxu0 %v856
    %v858 = vand.u32 %v132, 4294901760
    %859 = vmatpush.msra.mxu0 %v858
    %v860 = vand.u32 %v520, 4294901760
    %861 = vmatmul.f32.gmra.mxu0 %v860
    %v862 = vpop.f32.mrf.mxu0
    %v863 = vadd.f32 %v826, %v862
    %864 = vdwg.mxu0
    %v865 = vand.u32 %v194, 4294901760
    %866 = vmatpush.msra.mxu0 %v865
    %v867 = vand.u32 %v192, 4294901760
    %868 = vmatpush.msra.mxu0 %v867
    %v869 = vand.u32 %v190, 4294901760
    %870 = vmatpush.msra.mxu0 %v869
    %v871 = vand.u32 %v188, 4294901760
    %872 = vmatpush.msra.mxu0 %v871
    %v873 = vand.u32 %v186, 4294901760
    %874 = vmatpush.msra.mxu0 %v873
    %v875 = vand.u32 %v184, 4294901760
    %876 = vmatpush.msra.mxu0 %v875
    %v877 = vand.u32 %v182, 4294901760
    %878 = vmatpush.msra.mxu0 %v877
    %v879 = vand.u32 %v180, 4294901760
    %880 = vmatpush.msra.mxu0 %v879
    %v881 = vand.u32 %v178, 4294901760
    %882 = vmatpush.msra.mxu0 %v881
    %v883 = vand.u32 %v176, 4294901760
    %884 = vmatpush.msra.mxu0 %v883
    %v885 = vand.u32 %v174, 4294901760
    %886 = vmatpush.msra.mxu0 %v885
    %v887 = vand.u32 %v172, 4294901760
    %888 = vmatpush.msra.mxu0 %v887
    %v889 = vand.u32 %v170, 4294901760
    %890 = vmatpush.msra.mxu0 %v889
    %v891 = vand.u32 %v168, 4294901760
    %892 = vmatpush.msra.mxu0 %v891
    %v893 = vand.u32 %v166, 4294901760
    %894 = vmatpush.msra.mxu0 %v893
    %v895 = vand.u32 %v164, 4294901760
    %896 = vmatpush.msra.mxu0 %v895
    %v897 = vand.u32 %v521, 4294901760
    %v898 = vsub.f32 %v521, %v897
    %v899 = vand.u32 %v898, 4294901760
    %v900 = vsub.f32 %v898, %v899
    %v901 = vand.u32 %v900, 4294901760
    %902 = vmatmul.f32.gmra.mxu0 %v901
    %v903 = vpop.f32.mrf.mxu0
    %v904 = vadd.f32 %v863, %v903
    %905 = vdwg.mxu0
    %v906 = vand.u32 %v194, 4294901760
    %v907 = vsub.f32 %v194, %v906
    %v908 = vand.u32 %v907, 4294901760
    %v909 = vsub.f32 %v907, %v908
    %v910 = vand.u32 %v909, 4294901760
    %911 = vmatpush.msra.mxu0 %v910
    %v912 = vand.u32 %v192, 4294901760
    %v913 = vsub.f32 %v192, %v912
    %v914 = vand.u32 %v913, 4294901760
    %v915 = vsub.f32 %v913, %v914
    %v916 = vand.u32 %v915, 4294901760
    %917 = vmatpush.msra.mxu0 %v916
    %v918 = vand.u32 %v190, 4294901760
    %v919 = vsub.f32 %v190, %v918
    %v920 = vand.u32 %v919, 4294901760
    %v921 = vsub.f32 %v919, %v920
    %v922 = vand.u32 %v921, 4294901760
    %923 = vmatpush.msra.mxu0 %v922
    %v924 = vand.u32 %v188, 4294901760
    %v925 = vsub.f32 %v188, %v924
    %v926 = vand.u32 %v925, 4294901760
    %v927 = vsub.f32 %v925, %v926
    %v928 = vand.u32 %v927, 4294901760
    %929 = vmatpush.msra.mxu0 %v928
    %v930 = vand.u32 %v186, 4294901760
    %v931 = vsub.f32 %v186, %v930
    %v932 = vand.u32 %v931, 4294901760
    %v933 = vsub.f32 %v931, %v932
    %v934 = vand.u32 %v933, 4294901760
    %935 = vmatpush.msra.mxu0 %v934
    %v936 = vand.u32 %v184, 4294901760
    %v937 = vsub.f32 %v184, %v936
    %v938 = vand.u32 %v937, 4294901760
    %v939 = vsub.f32 %v937, %v938
    %v940 = vand.u32 %v939, 4294901760
    %941 = vmatpush.msra.mxu0 %v940
    %v942 = vand.u32 %v182, 4294901760
    %v943 = vsub.f32 %v182, %v942
    %v944 = vand.u32 %v943, 4294901760
    %v945 = vsub.f32 %v943, %v944
    %v946 = vand.u32 %v945, 4294901760
    %947 = vmatpush.msra.mxu0 %v946
    %v948 = vand.u32 %v180, 4294901760
    %v949 = vsub.f32 %v180, %v948
    %v950 = vand.u32 %v949, 4294901760
    %v951 = vsub.f32 %v949, %v950
    %v952 = vand.u32 %v951, 4294901760
    %953 = vmatpush.msra.mxu0 %v952
    %v954 = vand.u32 %v178, 4294901760
    %v955 = vsub.f32 %v178, %v954
    %v956 = vand.u32 %v955, 4294901760
    %v957 = vsub.f32 %v955, %v956
    %v958 = vand.u32 %v957, 4294901760
    %959 = vmatpush.msra.mxu0 %v958
    %v960 = vand.u32 %v176, 4294901760
    %v961 = vsub.f32 %v176, %v960
    %v962 = vand.u32 %v961, 4294901760
    %v963 = vsub.f32 %v961, %v962
    %v964 = vand.u32 %v963, 4294901760
    %965 = vmatpush.msra.mxu0 %v964
    %v966 = vand.u32 %v174, 4294901760
    %v967 = vsub.f32 %v174, %v966
    %v968 = vand.u32 %v967, 4294901760
    %v969 = vsub.f32 %v967, %v968
    %v970 = vand.u32 %v969, 4294901760
    %971 = vmatpush.msra.mxu0 %v970
    %v972 = vand.u32 %v172, 4294901760
    %v973 = vsub.f32 %v172, %v972
    %v974 = vand.u32 %v973, 4294901760
    %v975 = vsub.f32 %v973, %v974
    %v976 = vand.u32 %v975, 4294901760
    %977 = vmatpush.msra.mxu0 %v976
    %v978 = vand.u32 %v170, 4294901760
    %v979 = vsub.f32 %v170, %v978
    %v980 = vand.u32 %v979, 4294901760
    %v981 = vsub.f32 %v979, %v980
    %v982 = vand.u32 %v981, 4294901760
    %983 = vmatpush.msra.mxu0 %v982
    %v984 = vand.u32 %v168, 4294901760
    %v985 = vsub.f32 %v168, %v984
    %v986 = vand.u32 %v985, 4294901760
    %v987 = vsub.f32 %v985, %v986
    %v988 = vand.u32 %v987, 4294901760
    %989 = vmatpush.msra.mxu0 %v988
    %v990 = vand.u32 %v166, 4294901760
    %v991 = vsub.f32 %v166, %v990
    %v992 = vand.u32 %v991, 4294901760
    %v993 = vsub.f32 %v991, %v992
    %v994 = vand.u32 %v993, 4294901760
    %995 = vmatpush.msra.mxu0 %v994
    %v996 = vand.u32 %v164, 4294901760
    %v997 = vsub.f32 %v164, %v996
    %v998 = vand.u32 %v997, 4294901760
    %v999 = vsub.f32 %v997, %v998
    %v1000 = vand.u32 %v999, 4294901760
    %1001 = vmatpush.msra.mxu0 %v1000
    %v1002 = vand.u32 %v521, 4294901760
    %1003 = vmatmul.f32.gmra.mxu0 %v1002
    %v1004 = vpop.f32.mrf.mxu0
    %v1005 = vadd.f32 %v904, %v1004
    %1006 = vdwg.mxu0
    %v1007 = vand.u32 %v194, 4294901760
    %v1008 = vsub.f32 %v194, %v1007
    %1009 = vmatpush.msra.mxu0 %v1008
    %v1010 = vand.u32 %v192, 4294901760
    %v1011 = vsub.f32 %v192, %v1010
    %1012 = vmatpush.msra.mxu0 %v1011
    %v1013 = vand.u32 %v190, 4294901760
    %v1014 = vsub.f32 %v190, %v1013
    %1015 = vmatpush.msra.mxu0 %v1014
    %v1016 = vand.u32 %v188, 4294901760
    %v1017 = vsub.f32 %v188, %v1016
    %1018 = vmatpush.msra.mxu0 %v1017
    %v1019 = vand.u32 %v186, 4294901760
    %v1020 = vsub.f32 %v186, %v1019
    %1021 = vmatpush.msra.mxu0 %v1020
    %v1022 = vand.u32 %v184, 4294901760
    %v1023 = vsub.f32 %v184, %v1022
    %1024 = vmatpush.msra.mxu0 %v1023
    %v1025 = vand.u32 %v182, 4294901760
    %v1026 = vsub.f32 %v182, %v1025
    %1027 = vmatpush.msra.mxu0 %v1026
    %v1028 = vand.u32 %v180, 4294901760
    %v1029 = vsub.f32 %v180, %v1028
    %1030 = vmatpush.msra.mxu0 %v1029
    %v1031 = vand.u32 %v178, 4294901760
    %v1032 = vsub.f32 %v178, %v1031
    %1033 = vmatpush.msra.mxu0 %v1032
    %v1034 = vand.u32 %v176, 4294901760
    %v1035 = vsub.f32 %v176, %v1034
    %1036 = vmatpush.msra.mxu0 %v1035
    %v1037 = vand.u32 %v174, 4294901760
    %v1038 = vsub.f32 %v174, %v1037
    %1039 = vmatpush.msra.mxu0 %v1038
    %v1040 = vand.u32 %v172, 4294901760
    %v1041 = vsub.f32 %v172, %v1040
    %1042 = vmatpush.msra.mxu0 %v1041
    %v1043 = vand.u32 %v170, 4294901760
    %v1044 = vsub.f32 %v170, %v1043
    %1045 = vmatpush.msra.mxu0 %v1044
    %v1046 = vand.u32 %v168, 4294901760
    %v1047 = vsub.f32 %v168, %v1046
    %1048 = vmatpush.msra.mxu0 %v1047
    %v1049 = vand.u32 %v166, 4294901760
    %v1050 = vsub.f32 %v166, %v1049
    %1051 = vmatpush.msra.mxu0 %v1050
    %v1052 = vand.u32 %v164, 4294901760
    %v1053 = vsub.f32 %v164, %v1052
    %1054 = vmatpush.msra.mxu0 %v1053
    %v1055 = vand.u32 %v521, 4294901760
    %v1056 = vsub.f32 %v521, %v1055
    %1057 = vmatmul.f32.gmra.mxu0 %v1056
    %v1058 = vpop.f32.mrf.mxu0
    %v1059 = vadd.f32 %v1005, %v1058
    %1060 = vdwg.mxu0
    %v1061 = vand.u32 %v194, 4294901760
    %1062 = vmatpush.msra.mxu0 %v1061
    %v1063 = vand.u32 %v192, 4294901760
    %1064 = vmatpush.msra.mxu0 %v1063
    %v1065 = vand.u32 %v190, 4294901760
    %1066 = vmatpush.msra.mxu0 %v1065
    %v1067 = vand.u32 %v188, 4294901760
    %1068 = vmatpush.msra.mxu0 %v1067
    %v1069 = vand.u32 %v186, 4294901760
    %1070 = vmatpush.msra.mxu0 %v1069
    %v1071 = vand.u32 %v184, 4294901760
    %1072 = vmatpush.msra.mxu0 %v1071
    %v1073 = vand.u32 %v182, 4294901760
    %1074 = vmatpush.msra.mxu0 %v1073
    %v1075 = vand.u32 %v180, 4294901760
    %1076 = vmatpush.msra.mxu0 %v1075
    %v1077 = vand.u32 %v178, 4294901760
    %1078 = vmatpush.msra.mxu0 %v1077
    %v1079 = vand.u32 %v176, 4294901760
    %1080 = vmatpush.msra.mxu0 %v1079
    %v1081 = vand.u32 %v174, 4294901760
    %1082 = vmatpush.msra.mxu0 %v1081
    %v1083 = vand.u32 %v172, 4294901760
    %1084 = vmatpush.msra.mxu0 %v1083
    %v1085 = vand.u32 %v170, 4294901760
    %1086 = vmatpush.msra.mxu0 %v1085
    %v1087 = vand.u32 %v168, 4294901760
    %1088 = vmatpush.msra.mxu0 %v1087
    %v1089 = vand.u32 %v166, 4294901760
    %1090 = vmatpush.msra.mxu0 %v1089
    %v1091 = vand.u32 %v164, 4294901760
    %1092 = vmatpush.msra.mxu0 %v1091
    %v1093 = vand.u32 %v521, 4294901760
    %v1094 = vsub.f32 %v521, %v1093
    %v1095 = vand.u32 %v1094, 4294901760
    %1096 = vmatmul.f32.gmra.mxu0 %v1095
    %v1097 = vpop.f32.mrf.mxu0
    %v1098 = vadd.f32 %v1059, %v1097
    %1099 = vdwg.mxu0
    %v1100 = vand.u32 %v194, 4294901760
    %v1101 = vsub.f32 %v194, %v1100
    %v1102 = vand.u32 %v1101, 4294901760
    %1103 = vmatpush.msra.mxu0 %v1102
    %v1104 = vand.u32 %v192, 4294901760
    %v1105 = vsub.f32 %v192, %v1104
    %v1106 = vand.u32 %v1105, 4294901760
    %1107 = vmatpush.msra.mxu0 %v1106
    %v1108 = vand.u32 %v190, 4294901760
    %v1109 = vsub.f32 %v190, %v1108
    %v1110 = vand.u32 %v1109, 4294901760
    %1111 = vmatpush.msra.mxu0 %v1110
    %v1112 = vand.u32 %v188, 4294901760
    %v1113 = vsub.f32 %v188, %v1112
    %v1114 = vand.u32 %v1113, 4294901760
    %1115 = vmatpush.msra.mxu0 %v1114
    %v1116 = vand.u32 %v186, 4294901760
    %v1117 = vsub.f32 %v186, %v1116
    %v1118 = vand.u32 %v1117, 4294901760
    %1119 = vmatpush.msra.mxu0 %v1118
    %v1120 = vand.u32 %v184, 4294901760
    %v1121 = vsub.f32 %v184, %v1120
    %v1122 = vand.u32 %v1121, 4294901760
    %1123 = vmatpush.msra.mxu0 %v1122
    %v1124 = vand.u32 %v182, 4294901760
    %v1125 = vsub.f32 %v182, %v1124
    %v1126 = vand.u32 %v1125, 4294901760
    %1127 = vmatpush.msra.mxu0 %v1126
    %v1128 = vand.u32 %v180, 4294901760
    %v1129 = vsub.f32 %v180, %v1128
    %v1130 = vand.u32 %v1129, 4294901760
    %1131 = vmatpush.msra.mxu0 %v1130
    %v1132 = vand.u32 %v178, 4294901760
    %v1133 = vsub.f32 %v178, %v1132
    %v1134 = vand.u32 %v1133, 4294901760
    %1135 = vmatpush.msra.mxu0 %v1134
    %v1136 = vand.u32 %v176, 4294901760
    %v1137 = vsub.f32 %v176, %v1136
    %v1138 = vand.u32 %v1137, 4294901760
    %1139 = vmatpush.msra.mxu0 %v1138
    %v1140 = vand.u32 %v174, 4294901760
    %v1141 = vsub.f32 %v174, %v1140
    %v1142 = vand.u32 %v1141, 4294901760
    %1143 = vmatpush.msra.mxu0 %v1142
    %v1144 = vand.u32 %v172, 4294901760
    %v1145 = vsub.f32 %v172, %v1144
    %v1146 = vand.u32 %v1145, 4294901760
    %1147 = vmatpush.msra.mxu0 %v1146
    %v1148 = vand.u32 %v170, 4294901760
    %v1149 = vsub.f32 %v170, %v1148
    %v1150 = vand.u32 %v1149, 4294901760
    %1151 = vmatpush.msra.mxu0 %v1150
    %v1152 = vand.u32 %v168, 4294901760
    %v1153 = vsub.f32 %v168, %v1152
    %v1154 = vand.u32 %v1153, 4294901760
    %1155 = vmatpush.msra.mxu0 %v1154
    %v1156 = vand.u32 %v166, 4294901760
    %v1157 = vsub.f32 %v166, %v1156
    %v1158 = vand.u32 %v1157, 4294901760
    %1159 = vmatpush.msra.mxu0 %v1158
    %v1160 = vand.u32 %v164, 4294901760
    %v1161 = vsub.f32 %v164, %v1160
    %v1162 = vand.u32 %v1161, 4294901760
    %1163 = vmatpush.msra.mxu0 %v1162
    %v1164 = vand.u32 %v521, 4294901760
    %1165 = vmatmul.f32.gmra.mxu0 %v1164
    %v1166 = vpop.f32.mrf.mxu0
    %v1167 = vadd.f32 %v1098, %v1166
    %1168 = vdwg.mxu0
    %v1169 = vand.u32 %v194, 4294901760
    %1170 = vmatpush.msra.mxu0 %v1169
    %v1171 = vand.u32 %v192, 4294901760
    %1172 = vmatpush.msra.mxu0 %v1171
    %v1173 = vand.u32 %v190, 4294901760
    %1174 = vmatpush.msra.mxu0 %v1173
    %v1175 = vand.u32 %v188, 4294901760
    %1176 = vmatpush.msra.mxu0 %v1175
    %v1177 = vand.u32 %v186, 4294901760
    %1178 = vmatpush.msra.mxu0 %v1177
    %v1179 = vand.u32 %v184, 4294901760
    %1180 = vmatpush.msra.mxu0 %v1179
    %v1181 = vand.u32 %v182, 4294901760
    %1182 = vmatpush.msra.mxu0 %v1181
    %v1183 = vand.u32 %v180, 4294901760
    %1184 = vmatpush.msra.mxu0 %v1183
    %v1185 = vand.u32 %v178, 4294901760
    %1186 = vmatpush.msra.mxu0 %v1185
    %v1187 = vand.u32 %v176, 4294901760
    %1188 = vmatpush.msra.mxu0 %v1187
    %v1189 = vand.u32 %v174, 4294901760
    %1190 = vmatpush.msra.mxu0 %v1189
    %v1191 = vand.u32 %v172, 4294901760
    %1192 = vmatpush.msra.mxu0 %v1191
    %v1193 = vand.u32 %v170, 4294901760
    %1194 = vmatpush.msra.mxu0 %v1193
    %v1195 = vand.u32 %v168, 4294901760
    %1196 = vmatpush.msra.mxu0 %v1195
    %v1197 = vand.u32 %v166, 4294901760
    %1198 = vmatpush.msra.mxu0 %v1197
    %v1199 = vand.u32 %v164, 4294901760
    %1200 = vmatpush.msra.mxu0 %v1199
    %v1201 = vand.u32 %v521, 4294901760
    %1202 = vmatmul.f32.gmra.mxu0 %v1201
    %v1203 = vpop.f32.mrf.mxu0
    %v1204 = vadd.f32 %v1167, %v1203
    %1205 = vdwg.mxu0
    %v1206 = vand.u32 %v163, 4294901760
    %1207 = vmatpush.msra.mxu0 %v1206
    %v1208 = vand.u32 %v161, 4294901760
    %1209 = vmatpush.msra.mxu0 %v1208
    %v1210 = vand.u32 %v159, 4294901760
    %1211 = vmatpush.msra.mxu0 %v1210
    %v1212 = vand.u32 %v157, 4294901760
    %1213 = vmatpush.msra.mxu0 %v1212
    %v1214 = vand.u32 %v155, 4294901760
    %1215 = vmatpush.msra.mxu0 %v1214
    %v1216 = vand.u32 %v153, 4294901760
    %1217 = vmatpush.msra.mxu0 %v1216
    %v1218 = vand.u32 %v151, 4294901760
    %1219 = vmatpush.msra.mxu0 %v1218
    %v1220 = vand.u32 %v149, 4294901760
    %1221 = vmatpush.msra.mxu0 %v1220
    %v1222 = vand.u32 %v147, 4294901760
    %1223 = vmatpush.msra.mxu0 %v1222
    %v1224 = vand.u32 %v145, 4294901760
    %1225 = vmatpush.msra.mxu0 %v1224
    %v1226 = vand.u32 %v143, 4294901760
    %1227 = vmatpush.msra.mxu0 %v1226
    %v1228 = vand.u32 %v141, 4294901760
    %1229 = vmatpush.msra.mxu0 %v1228
    %v1230 = vand.u32 %v139, 4294901760
    %1231 = vmatpush.msra.mxu0 %v1230
    %v1232 = vand.u32 %v137, 4294901760
    %1233 = vmatpush.msra.mxu0 %v1232
    %v1234 = vand.u32 %v135, 4294901760
    %1235 = vmatpush.msra.mxu0 %v1234
    %v1236 = vand.u32 %v133, 4294901760
    %1237 = vmatpush.msra.mxu0 %v1236
    %v1238 = vand.u32 %v520, 4294901760
    %v1239 = vsub.f32 %v520, %v1238
    %v1240 = vand.u32 %v1239, 4294901760
    %v1241 = vsub.f32 %v1239, %v1240
    %v1242 = vand.u32 %v1241, 4294901760
    %1243 = vmatmul.f32.gmra.mxu0 %v1242
    %v1244 = vpop.f32.mrf.mxu0
    %v1245 = vadd.f32 0.0, %v1244
    %1246 = vdwg.mxu0
    %v1247 = vand.u32 %v163, 4294901760
    %v1248 = vsub.f32 %v163, %v1247
    %v1249 = vand.u32 %v1248, 4294901760
    %v1250 = vsub.f32 %v1248, %v1249
    %v1251 = vand.u32 %v1250, 4294901760
    %1252 = vmatpush.msra.mxu0 %v1251
    %v1253 = vand.u32 %v161, 4294901760
    %v1254 = vsub.f32 %v161, %v1253
    %v1255 = vand.u32 %v1254, 4294901760
    %v1256 = vsub.f32 %v1254, %v1255
    %v1257 = vand.u32 %v1256, 4294901760
    %1258 = vmatpush.msra.mxu0 %v1257
    %v1259 = vand.u32 %v159, 4294901760
    %v1260 = vsub.f32 %v159, %v1259
    %v1261 = vand.u32 %v1260, 4294901760
    %v1262 = vsub.f32 %v1260, %v1261
    %v1263 = vand.u32 %v1262, 4294901760
    %1264 = vmatpush.msra.mxu0 %v1263
    %v1265 = vand.u32 %v157, 4294901760
    %v1266 = vsub.f32 %v157, %v1265
    %v1267 = vand.u32 %v1266, 4294901760
    %v1268 = vsub.f32 %v1266, %v1267
    %v1269 = vand.u32 %v1268, 4294901760
    %1270 = vmatpush.msra.mxu0 %v1269
    %v1271 = vand.u32 %v155, 4294901760
    %v1272 = vsub.f32 %v155, %v1271
    %v1273 = vand.u32 %v1272, 4294901760
    %v1274 = vsub.f32 %v1272, %v1273
    %v1275 = vand.u32 %v1274, 4294901760
    %1276 = vmatpush.msra.mxu0 %v1275
    %v1277 = vand.u32 %v153, 4294901760
    %v1278 = vsub.f32 %v153, %v1277
    %v1279 = vand.u32 %v1278, 4294901760
    %v1280 = vsub.f32 %v1278, %v1279
    %v1281 = vand.u32 %v1280, 4294901760
    %1282 = vmatpush.msra.mxu0 %v1281
    %v1283 = vand.u32 %v151, 4294901760
    %v1284 = vsub.f32 %v151, %v1283
    %v1285 = vand.u32 %v1284, 4294901760
    %v1286 = vsub.f32 %v1284, %v1285
    %v1287 = vand.u32 %v1286, 4294901760
    %1288 = vmatpush.msra.mxu0 %v1287
    %v1289 = vand.u32 %v149, 4294901760
    %v1290 = vsub.f32 %v149, %v1289
    %v1291 = vand.u32 %v1290, 4294901760
    %v1292 = vsub.f32 %v1290, %v1291
    %v1293 = vand.u32 %v1292, 4294901760
    %1294 = vmatpush.msra.mxu0 %v1293
    %v1295 = vand.u32 %v147, 4294901760
    %v1296 = vsub.f32 %v147, %v1295
    %v1297 = vand.u32 %v1296, 4294901760
    %v1298 = vsub.f32 %v1296, %v1297
    %v1299 = vand.u32 %v1298, 4294901760
    %1300 = vmatpush.msra.mxu0 %v1299
    %v1301 = vand.u32 %v145, 4294901760
    %v1302 = vsub.f32 %v145, %v1301
    %v1303 = vand.u32 %v1302, 4294901760
    %v1304 = vsub.f32 %v1302, %v1303
    %v1305 = vand.u32 %v1304, 4294901760
    %1306 = vmatpush.msra.mxu0 %v1305
    %v1307 = vand.u32 %v143, 4294901760
    %v1308 = vsub.f32 %v143, %v1307
    %v1309 = vand.u32 %v1308, 4294901760
    %v1310 = vsub.f32 %v1308, %v1309
    %v1311 = vand.u32 %v1310, 4294901760
    %1312 = vmatpush.msra.mxu0 %v1311
    %v1313 = vand.u32 %v141, 4294901760
    %v1314 = vsub.f32 %v141, %v1313
    %v1315 = vand.u32 %v1314, 4294901760
    %v1316 = vsub.f32 %v1314, %v1315
    %v1317 = vand.u32 %v1316, 4294901760
    %1318 = vmatpush.msra.mxu0 %v1317
    %v1319 = vand.u32 %v139, 4294901760
    %v1320 = vsub.f32 %v139, %v1319
    %v1321 = vand.u32 %v1320, 4294901760
    %v1322 = vsub.f32 %v1320, %v1321
    %v1323 = vand.u32 %v1322, 4294901760
    %1324 = vmatpush.msra.mxu0 %v1323
    %v1325 = vand.u32 %v137, 4294901760
    %v1326 = vsub.f32 %v137, %v1325
    %v1327 = vand.u32 %v1326, 4294901760
    %v1328 = vsub.f32 %v1326, %v1327
    %v1329 = vand.u32 %v1328, 4294901760
    %1330 = vmatpush.msra.mxu0 %v1329
    %v1331 = vand.u32 %v135, 4294901760
    %v1332 = vsub.f32 %v135, %v1331
    %v1333 = vand.u32 %v1332, 4294901760
    %v1334 = vsub.f32 %v1332, %v1333
    %v1335 = vand.u32 %v1334, 4294901760
    %1336 = vmatpush.msra.mxu0 %v1335
    %v1337 = vand.u32 %v133, 4294901760
    %v1338 = vsub.f32 %v133, %v1337
    %v1339 = vand.u32 %v1338, 4294901760
    %v1340 = vsub.f32 %v1338, %v1339
    %v1341 = vand.u32 %v1340, 4294901760
    %1342 = vmatpush.msra.mxu0 %v1341
    %v1343 = vand.u32 %v520, 4294901760
    %1344 = vmatmul.f32.gmra.mxu0 %v1343
    %v1345 = vpop.f32.mrf.mxu0
    %v1346 = vadd.f32 %v1245, %v1345
    %1347 = vdwg.mxu0
    %v1348 = vand.u32 %v163, 4294901760
    %v1349 = vsub.f32 %v163, %v1348
    %1350 = vmatpush.msra.mxu0 %v1349
    %v1351 = vand.u32 %v161, 4294901760
    %v1352 = vsub.f32 %v161, %v1351
    %1353 = vmatpush.msra.mxu0 %v1352
    %v1354 = vand.u32 %v159, 4294901760
    %v1355 = vsub.f32 %v159, %v1354
    %1356 = vmatpush.msra.mxu0 %v1355
    %v1357 = vand.u32 %v157, 4294901760
    %v1358 = vsub.f32 %v157, %v1357
    %1359 = vmatpush.msra.mxu0 %v1358
    %v1360 = vand.u32 %v155, 4294901760
    %v1361 = vsub.f32 %v155, %v1360
    %1362 = vmatpush.msra.mxu0 %v1361
    %v1363 = vand.u32 %v153, 4294901760
    %v1364 = vsub.f32 %v153, %v1363
    %1365 = vmatpush.msra.mxu0 %v1364
    %v1366 = vand.u32 %v151, 4294901760
    %v1367 = vsub.f32 %v151, %v1366
    %1368 = vmatpush.msra.mxu0 %v1367
    %v1369 = vand.u32 %v149, 4294901760
    %v1370 = vsub.f32 %v149, %v1369
    %1371 = vmatpush.msra.mxu0 %v1370
    %v1372 = vand.u32 %v147, 4294901760
    %v1373 = vsub.f32 %v147, %v1372
    %1374 = vmatpush.msra.mxu0 %v1373
    %v1375 = vand.u32 %v145, 4294901760
    %v1376 = vsub.f32 %v145, %v1375
    %1377 = vmatpush.msra.mxu0 %v1376
    %v1378 = vand.u32 %v143, 4294901760
    %v1379 = vsub.f32 %v143, %v1378
    %1380 = vmatpush.msra.mxu0 %v1379
    %v1381 = vand.u32 %v141, 4294901760
    %v1382 = vsub.f32 %v141, %v1381
    %1383 = vmatpush.msra.mxu0 %v1382
    %v1384 = vand.u32 %v139, 4294901760
    %v1385 = vsub.f32 %v139, %v1384
    %1386 = vmatpush.msra.mxu0 %v1385
    %v1387 = vand.u32 %v137, 4294901760
    %v1388 = vsub.f32 %v137, %v1387
    %1389 = vmatpush.msra.mxu0 %v1388
    %v1390 = vand.u32 %v135, 4294901760
    %v1391 = vsub.f32 %v135, %v1390
    %1392 = vmatpush.msra.mxu0 %v1391
    %v1393 = vand.u32 %v133, 4294901760
    %v1394 = vsub.f32 %v133, %v1393
    %1395 = vmatpush.msra.mxu0 %v1394
    %v1396 = vand.u32 %v520, 4294901760
    %v1397 = vsub.f32 %v520, %v1396
    %1398 = vmatmul.f32.gmra.mxu0 %v1397
    %v1399 = vpop.f32.mrf.mxu0
    %v1400 = vadd.f32 %v1346, %v1399
    %1401 = vdwg.mxu0
    %v1402 = vand.u32 %v163, 4294901760
    %1403 = vmatpush.msra.mxu0 %v1402
    %v1404 = vand.u32 %v161, 4294901760
    %1405 = vmatpush.msra.mxu0 %v1404
    %v1406 = vand.u32 %v159, 4294901760
    %1407 = vmatpush.msra.mxu0 %v1406
    %v1408 = vand.u32 %v157, 4294901760
    %1409 = vmatpush.msra.mxu0 %v1408
    %v1410 = vand.u32 %v155, 4294901760
    %1411 = vmatpush.msra.mxu0 %v1410
    %v1412 = vand.u32 %v153, 4294901760
    %1413 = vmatpush.msra.mxu0 %v1412
    %v1414 = vand.u32 %v151, 4294901760
    %1415 = vmatpush.msra.mxu0 %v1414
    %v1416 = vand.u32 %v149, 4294901760
    %1417 = vmatpush.msra.mxu0 %v1416
    %v1418 = vand.u32 %v147, 4294901760
    %1419 = vmatpush.msra.mxu0 %v1418
    %v1420 = vand.u32 %v145, 4294901760
    %1421 = vmatpush.msra.mxu0 %v1420
    %v1422 = vand.u32 %v143, 4294901760
    %1423 = vmatpush.msra.mxu0 %v1422
    %v1424 = vand.u32 %v141, 4294901760
    %1425 = vmatpush.msra.mxu0 %v1424
    %v1426 = vand.u32 %v139, 4294901760
    %1427 = vmatpush.msra.mxu0 %v1426
    %v1428 = vand.u32 %v137, 4294901760
    %1429 = vmatpush.msra.mxu0 %v1428
    %v1430 = vand.u32 %v135, 4294901760
    %1431 = vmatpush.msra.mxu0 %v1430
    %v1432 = vand.u32 %v133, 4294901760
    %1433 = vmatpush.msra.mxu0 %v1432
    %v1434 = vand.u32 %v520, 4294901760
    %v1435 = vsub.f32 %v520, %v1434
    %v1436 = vand.u32 %v1435, 4294901760
    %1437 = vmatmul.f32.gmra.mxu0 %v1436
    %v1438 = vpop.f32.mrf.mxu0
    %v1439 = vadd.f32 %v1400, %v1438
    %1440 = vdwg.mxu0
    %v1441 = vand.u32 %v163, 4294901760
    %v1442 = vsub.f32 %v163, %v1441
    %v1443 = vand.u32 %v1442, 4294901760
    %1444 = vmatpush.msra.mxu0 %v1443
    %v1445 = vand.u32 %v161, 4294901760
    %v1446 = vsub.f32 %v161, %v1445
    %v1447 = vand.u32 %v1446, 4294901760
    %1448 = vmatpush.msra.mxu0 %v1447
    %v1449 = vand.u32 %v159, 4294901760
    %v1450 = vsub.f32 %v159, %v1449
    %v1451 = vand.u32 %v1450, 4294901760
    %1452 = vmatpush.msra.mxu0 %v1451
    %v1453 = vand.u32 %v157, 4294901760
    %v1454 = vsub.f32 %v157, %v1453
    %v1455 = vand.u32 %v1454, 4294901760
    %1456 = vmatpush.msra.mxu0 %v1455
    %v1457 = vand.u32 %v155, 4294901760
    %v1458 = vsub.f32 %v155, %v1457
    %v1459 = vand.u32 %v1458, 4294901760
    %1460 = vmatpush.msra.mxu0 %v1459
    %v1461 = vand.u32 %v153, 4294901760
    %v1462 = vsub.f32 %v153, %v1461
    %v1463 = vand.u32 %v1462, 4294901760
    %1464 = vmatpush.msra.mxu0 %v1463
    %v1465 = vand.u32 %v151, 4294901760
    %v1466 = vsub.f32 %v151, %v1465
    %v1467 = vand.u32 %v1466, 4294901760
    %1468 = vmatpush.msra.mxu0 %v1467
    %v1469 = vand.u32 %v149, 4294901760
    %v1470 = vsub.f32 %v149, %v1469
    %v1471 = vand.u32 %v1470, 4294901760
    %1472 = vmatpush.msra.mxu0 %v1471
    %v1473 = vand.u32 %v147, 4294901760
    %v1474 = vsub.f32 %v147, %v1473
    %v1475 = vand.u32 %v1474, 4294901760
    %1476 = vmatpush.msra.mxu0 %v1475
    %v1477 = vand.u32 %v145, 4294901760
    %v1478 = vsub.f32 %v145, %v1477
    %v1479 = vand.u32 %v1478, 4294901760
    %1480 = vmatpush.msra.mxu0 %v1479
    %v1481 = vand.u32 %v143, 4294901760
    %v1482 = vsub.f32 %v143, %v1481
    %v1483 = vand.u32 %v1482, 4294901760
    %1484 = vmatpush.msra.mxu0 %v1483
    %v1485 = vand.u32 %v141, 4294901760
    %v1486 = vsub.f32 %v141, %v1485
    %v1487 = vand.u32 %v1486, 4294901760
    %1488 = vmatpush.msra.mxu0 %v1487
    %v1489 = vand.u32 %v139, 4294901760
    %v1490 = vsub.f32 %v139, %v1489
    %v1491 = vand.u32 %v1490, 4294901760
    %1492 = vmatpush.msra.mxu0 %v1491
    %v1493 = vand.u32 %v137, 4294901760
    %v1494 = vsub.f32 %v137, %v1493
    %v1495 = vand.u32 %v1494, 4294901760
    %1496 = vmatpush.msra.mxu0 %v1495
    %v1497 = vand.u32 %v135, 4294901760
    %v1498 = vsub.f32 %v135, %v1497
    %v1499 = vand.u32 %v1498, 4294901760
    %1500 = vmatpush.msra.mxu0 %v1499
    %v1501 = vand.u32 %v133, 4294901760
    %v1502 = vsub.f32 %v133, %v1501
    %v1503 = vand.u32 %v1502, 4294901760
    %1504 = vmatpush.msra.mxu0 %v1503
    %v1505 = vand.u32 %v520, 4294901760
    %1506 = vmatmul.f32.gmra.mxu0 %v1505
    %v1507 = vpop.f32.mrf.mxu0
    %v1508 = vadd.f32 %v1439, %v1507
    %1509 = vdwg.mxu0
    %v1510 = vand.u32 %v163, 4294901760
    %1511 = vmatpush.msra.mxu0 %v1510
    %v1512 = vand.u32 %v161, 4294901760
    %1513 = vmatpush.msra.mxu0 %v1512
    %v1514 = vand.u32 %v159, 4294901760
    %1515 = vmatpush.msra.mxu0 %v1514
    %v1516 = vand.u32 %v157, 4294901760
    %1517 = vmatpush.msra.mxu0 %v1516
    %v1518 = vand.u32 %v155, 4294901760
    %1519 = vmatpush.msra.mxu0 %v1518
    %v1520 = vand.u32 %v153, 4294901760
    %1521 = vmatpush.msra.mxu0 %v1520
    %v1522 = vand.u32 %v151, 4294901760
    %1523 = vmatpush.msra.mxu0 %v1522
    %v1524 = vand.u32 %v149, 4294901760
    %1525 = vmatpush.msra.mxu0 %v1524
    %v1526 = vand.u32 %v147, 4294901760
    %1527 = vmatpush.msra.mxu0 %v1526
    %v1528 = vand.u32 %v145, 4294901760
    %1529 = vmatpush.msra.mxu0 %v1528
    %v1530 = vand.u32 %v143, 4294901760
    %1531 = vmatpush.msra.mxu0 %v1530
    %v1532 = vand.u32 %v141, 4294901760
    %1533 = vmatpush.msra.mxu0 %v1532
    %v1534 = vand.u32 %v139, 4294901760
    %1535 = vmatpush.msra.mxu0 %v1534
    %v1536 = vand.u32 %v137, 4294901760
    %1537 = vmatpush.msra.mxu0 %v1536
    %v1538 = vand.u32 %v135, 4294901760
    %1539 = vmatpush.msra.mxu0 %v1538
    %v1540 = vand.u32 %v133, 4294901760
    %1541 = vmatpush.msra.mxu0 %v1540
    %v1542 = vand.u32 %v520, 4294901760
    %1543 = vmatmul.f32.gmra.mxu0 %v1542
    %v1544 = vpop.f32.mrf.mxu0
    %v1545 = vadd.f32 %v1508, %v1544
    %1546 = vdwg.mxu0
    %v1547 = vand.u32 %v195, 4294901760
    %1548 = vmatpush.msra.mxu0 %v1547
    %v1549 = vand.u32 %v193, 4294901760
    %1550 = vmatpush.msra.mxu0 %v1549
    %v1551 = vand.u32 %v191, 4294901760
    %1552 = vmatpush.msra.mxu0 %v1551
    %v1553 = vand.u32 %v189, 4294901760
    %1554 = vmatpush.msra.mxu0 %v1553
    %v1555 = vand.u32 %v187, 4294901760
    %1556 = vmatpush.msra.mxu0 %v1555
    %v1557 = vand.u32 %v185, 4294901760
    %1558 = vmatpush.msra.mxu0 %v1557
    %v1559 = vand.u32 %v183, 4294901760
    %1560 = vmatpush.msra.mxu0 %v1559
    %v1561 = vand.u32 %v181, 4294901760
    %1562 = vmatpush.msra.mxu0 %v1561
    %v1563 = vand.u32 %v179, 4294901760
    %1564 = vmatpush.msra.mxu0 %v1563
    %v1565 = vand.u32 %v177, 4294901760
    %1566 = vmatpush.msra.mxu0 %v1565
    %v1567 = vand.u32 %v175, 4294901760
    %1568 = vmatpush.msra.mxu0 %v1567
    %v1569 = vand.u32 %v173, 4294901760
    %1570 = vmatpush.msra.mxu0 %v1569
    %v1571 = vand.u32 %v171, 4294901760
    %1572 = vmatpush.msra.mxu0 %v1571
    %v1573 = vand.u32 %v169, 4294901760
    %1574 = vmatpush.msra.mxu0 %v1573
    %v1575 = vand.u32 %v167, 4294901760
    %1576 = vmatpush.msra.mxu0 %v1575
    %v1577 = vand.u32 %v165, 4294901760
    %1578 = vmatpush.msra.mxu0 %v1577
    %v1579 = vand.u32 %v521, 4294901760
    %v1580 = vsub.f32 %v521, %v1579
    %v1581 = vand.u32 %v1580, 4294901760
    %v1582 = vsub.f32 %v1580, %v1581
    %v1583 = vand.u32 %v1582, 4294901760
    %1584 = vmatmul.f32.gmra.mxu0 %v1583
    %v1585 = vpop.f32.mrf.mxu0
    %v1586 = vadd.f32 %v1545, %v1585
    %1587 = vdwg.mxu0
    %v1588 = vand.u32 %v195, 4294901760
    %v1589 = vsub.f32 %v195, %v1588
    %v1590 = vand.u32 %v1589, 4294901760
    %v1591 = vsub.f32 %v1589, %v1590
    %v1592 = vand.u32 %v1591, 4294901760
    %1593 = vmatpush.msra.mxu0 %v1592
    %v1594 = vand.u32 %v193, 4294901760
    %v1595 = vsub.f32 %v193, %v1594
    %v1596 = vand.u32 %v1595, 4294901760
    %v1597 = vsub.f32 %v1595, %v1596
    %v1598 = vand.u32 %v1597, 4294901760
    %1599 = vmatpush.msra.mxu0 %v1598
    %v1600 = vand.u32 %v191, 4294901760
    %v1601 = vsub.f32 %v191, %v1600
    %v1602 = vand.u32 %v1601, 4294901760
    %v1603 = vsub.f32 %v1601, %v1602
    %v1604 = vand.u32 %v1603, 4294901760
    %1605 = vmatpush.msra.mxu0 %v1604
    %v1606 = vand.u32 %v189, 4294901760
    %v1607 = vsub.f32 %v189, %v1606
    %v1608 = vand.u32 %v1607, 4294901760
    %v1609 = vsub.f32 %v1607, %v1608
    %v1610 = vand.u32 %v1609, 4294901760
    %1611 = vmatpush.msra.mxu0 %v1610
    %v1612 = vand.u32 %v187, 4294901760
    %v1613 = vsub.f32 %v187, %v1612
    %v1614 = vand.u32 %v1613, 4294901760
    %v1615 = vsub.f32 %v1613, %v1614
    %v1616 = vand.u32 %v1615, 4294901760
    %1617 = vmatpush.msra.mxu0 %v1616
    %v1618 = vand.u32 %v185, 4294901760
    %v1619 = vsub.f32 %v185, %v1618
    %v1620 = vand.u32 %v1619, 4294901760
    %v1621 = vsub.f32 %v1619, %v1620
    %v1622 = vand.u32 %v1621, 4294901760
    %1623 = vmatpush.msra.mxu0 %v1622
    %v1624 = vand.u32 %v183, 4294901760
    %v1625 = vsub.f32 %v183, %v1624
    %v1626 = vand.u32 %v1625, 4294901760
    %v1627 = vsub.f32 %v1625, %v1626
    %v1628 = vand.u32 %v1627, 4294901760
    %1629 = vmatpush.msra.mxu0 %v1628
    %v1630 = vand.u32 %v181, 4294901760
    %v1631 = vsub.f32 %v181, %v1630
    %v1632 = vand.u32 %v1631, 4294901760
    %v1633 = vsub.f32 %v1631, %v1632
    %v1634 = vand.u32 %v1633, 4294901760
    %1635 = vmatpush.msra.mxu0 %v1634
    %v1636 = vand.u32 %v179, 4294901760
    %v1637 = vsub.f32 %v179, %v1636
    %v1638 = vand.u32 %v1637, 4294901760
    %v1639 = vsub.f32 %v1637, %v1638
    %v1640 = vand.u32 %v1639, 4294901760
    %1641 = vmatpush.msra.mxu0 %v1640
    %v1642 = vand.u32 %v177, 4294901760
    %v1643 = vsub.f32 %v177, %v1642
    %v1644 = vand.u32 %v1643, 4294901760
    %v1645 = vsub.f32 %v1643, %v1644
    %v1646 = vand.u32 %v1645, 4294901760
    %1647 = vmatpush.msra.mxu0 %v1646
    %v1648 = vand.u32 %v175, 4294901760
    %v1649 = vsub.f32 %v175, %v1648
    %v1650 = vand.u32 %v1649, 4294901760
    %v1651 = vsub.f32 %v1649, %v1650
    %v1652 = vand.u32 %v1651, 4294901760
    %1653 = vmatpush.msra.mxu0 %v1652
    %v1654 = vand.u32 %v173, 4294901760
    %v1655 = vsub.f32 %v173, %v1654
    %v1656 = vand.u32 %v1655, 4294901760
    %v1657 = vsub.f32 %v1655, %v1656
    %v1658 = vand.u32 %v1657, 4294901760
    %1659 = vmatpush.msra.mxu0 %v1658
    %v1660 = vand.u32 %v171, 4294901760
    %v1661 = vsub.f32 %v171, %v1660
    %v1662 = vand.u32 %v1661, 4294901760
    %v1663 = vsub.f32 %v1661, %v1662
    %v1664 = vand.u32 %v1663, 4294901760
    %1665 = vmatpush.msra.mxu0 %v1664
    %v1666 = vand.u32 %v169, 4294901760
    %v1667 = vsub.f32 %v169, %v1666
    %v1668 = vand.u32 %v1667, 4294901760
    %v1669 = vsub.f32 %v1667, %v1668
    %v1670 = vand.u32 %v1669, 4294901760
    %1671 = vmatpush.msra.mxu0 %v1670
    %v1672 = vand.u32 %v167, 4294901760
    %v1673 = vsub.f32 %v167, %v1672
    %v1674 = vand.u32 %v1673, 4294901760
    %v1675 = vsub.f32 %v1673, %v1674
    %v1676 = vand.u32 %v1675, 4294901760
    %1677 = vmatpush.msra.mxu0 %v1676
    %v1678 = vand.u32 %v165, 4294901760
    %v1679 = vsub.f32 %v165, %v1678
    %v1680 = vand.u32 %v1679, 4294901760
    %v1681 = vsub.f32 %v1679, %v1680
    %v1682 = vand.u32 %v1681, 4294901760
    %1683 = vmatpush.msra.mxu0 %v1682
    %v1684 = vand.u32 %v521, 4294901760
    %1685 = vmatmul.f32.gmra.mxu0 %v1684
    %v1686 = vpop.f32.mrf.mxu0
    %v1687 = vadd.f32 %v1586, %v1686
    %1688 = vdwg.mxu0
    %v1689 = vand.u32 %v195, 4294901760
    %v1690 = vsub.f32 %v195, %v1689
    %1691 = vmatpush.msra.mxu0 %v1690
    %v1692 = vand.u32 %v193, 4294901760
    %v1693 = vsub.f32 %v193, %v1692
    %1694 = vmatpush.msra.mxu0 %v1693
    %v1695 = vand.u32 %v191, 4294901760
    %v1696 = vsub.f32 %v191, %v1695
    %1697 = vmatpush.msra.mxu0 %v1696
    %v1698 = vand.u32 %v189, 4294901760
    %v1699 = vsub.f32 %v189, %v1698
    %1700 = vmatpush.msra.mxu0 %v1699
    %v1701 = vand.u32 %v187, 4294901760
    %v1702 = vsub.f32 %v187, %v1701
    %1703 = vmatpush.msra.mxu0 %v1702
    %v1704 = vand.u32 %v185, 4294901760
    %v1705 = vsub.f32 %v185, %v1704
    %1706 = vmatpush.msra.mxu0 %v1705
    %v1707 = vand.u32 %v183, 4294901760
    %v1708 = vsub.f32 %v183, %v1707
    %1709 = vmatpush.msra.mxu0 %v1708
    %v1710 = vand.u32 %v181, 4294901760
    %v1711 = vsub.f32 %v181, %v1710
    %1712 = vmatpush.msra.mxu0 %v1711
    %v1713 = vand.u32 %v179, 4294901760
    %v1714 = vsub.f32 %v179, %v1713
    %1715 = vmatpush.msra.mxu0 %v1714
    %v1716 = vand.u32 %v177, 4294901760
    %v1717 = vsub.f32 %v177, %v1716
    %1718 = vmatpush.msra.mxu0 %v1717
    %v1719 = vand.u32 %v175, 4294901760
    %v1720 = vsub.f32 %v175, %v1719
    %1721 = vmatpush.msra.mxu0 %v1720
    %v1722 = vand.u32 %v173, 4294901760
    %v1723 = vsub.f32 %v173, %v1722
    %1724 = vmatpush.msra.mxu0 %v1723
    %v1725 = vand.u32 %v171, 4294901760
    %v1726 = vsub.f32 %v171, %v1725
    %1727 = vmatpush.msra.mxu0 %v1726
    %v1728 = vand.u32 %v169, 4294901760
    %v1729 = vsub.f32 %v169, %v1728
    %1730 = vmatpush.msra.mxu0 %v1729
    %v1731 = vand.u32 %v167, 4294901760
    %v1732 = vsub.f32 %v167, %v1731
    %1733 = vmatpush.msra.mxu0 %v1732
    %v1734 = vand.u32 %v165, 4294901760
    %v1735 = vsub.f32 %v165, %v1734
    %1736 = vmatpush.msra.mxu0 %v1735
    %v1737 = vand.u32 %v521, 4294901760
    %v1738 = vsub.f32 %v521, %v1737
    %1739 = vmatmul.f32.gmra.mxu0 %v1738
    %v1740 = vpop.f32.mrf.mxu0
    %v1741 = vadd.f32 %v1687, %v1740
    %1742 = vdwg.mxu0
    %v1743 = vand.u32 %v195, 4294901760
    %1744 = vmatpush.msra.mxu0 %v1743
    %v1745 = vand.u32 %v193, 4294901760
    %1746 = vmatpush.msra.mxu0 %v1745
    %v1747 = vand.u32 %v191, 4294901760
    %1748 = vmatpush.msra.mxu0 %v1747
    %v1749 = vand.u32 %v189, 4294901760
    %1750 = vmatpush.msra.mxu0 %v1749
    %v1751 = vand.u32 %v187, 4294901760
    %1752 = vmatpush.msra.mxu0 %v1751
    %v1753 = vand.u32 %v185, 4294901760
    %1754 = vmatpush.msra.mxu0 %v1753
    %v1755 = vand.u32 %v183, 4294901760
    %1756 = vmatpush.msra.mxu0 %v1755
    %v1757 = vand.u32 %v181, 4294901760
    %1758 = vmatpush.msra.mxu0 %v1757
    %v1759 = vand.u32 %v179, 4294901760
    %1760 = vmatpush.msra.mxu0 %v1759
    %v1761 = vand.u32 %v177, 4294901760
    %1762 = vmatpush.msra.mxu0 %v1761
    %v1763 = vand.u32 %v175, 4294901760
    %1764 = vmatpush.msra.mxu0 %v1763
    %v1765 = vand.u32 %v173, 4294901760
    %1766 = vmatpush.msra.mxu0 %v1765
    %v1767 = vand.u32 %v171, 4294901760
    %1768 = vmatpush.msra.mxu0 %v1767
    %v1769 = vand.u32 %v169, 4294901760
    %1770 = vmatpush.msra.mxu0 %v1769
    %v1771 = vand.u32 %v167, 4294901760
    %1772 = vmatpush.msra.mxu0 %v1771
    %v1773 = vand.u32 %v165, 4294901760
    %1774 = vmatpush.msra.mxu0 %v1773
    %v1775 = vand.u32 %v521, 4294901760
    %v1776 = vsub.f32 %v521, %v1775
    %v1777 = vand.u32 %v1776, 4294901760
    %1778 = vmatmul.f32.gmra.mxu0 %v1777
    %v1779 = vpop.f32.mrf.mxu0
    %v1780 = vadd.f32 %v1741, %v1779
    %1781 = vdwg.mxu0
    %v1782 = vand.u32 %v195, 4294901760
    %v1783 = vsub.f32 %v195, %v1782
    %v1784 = vand.u32 %v1783, 4294901760
    %1785 = vmatpush.msra.mxu0 %v1784
    %v1786 = vand.u32 %v193, 4294901760
    %v1787 = vsub.f32 %v193, %v1786
    %v1788 = vand.u32 %v1787, 4294901760
    %1789 = vmatpush.msra.mxu0 %v1788
    %v1790 = vand.u32 %v191, 4294901760
    %v1791 = vsub.f32 %v191, %v1790
    %v1792 = vand.u32 %v1791, 4294901760
    %1793 = vmatpush.msra.mxu0 %v1792
    %v1794 = vand.u32 %v189, 4294901760
    %v1795 = vsub.f32 %v189, %v1794
    %v1796 = vand.u32 %v1795, 4294901760
    %1797 = vmatpush.msra.mxu0 %v1796
    %v1798 = vand.u32 %v187, 4294901760
    %v1799 = vsub.f32 %v187, %v1798
    %v1800 = vand.u32 %v1799, 4294901760
    %1801 = vmatpush.msra.mxu0 %v1800
    %v1802 = vand.u32 %v185, 4294901760
    %v1803 = vsub.f32 %v185, %v1802
    %v1804 = vand.u32 %v1803, 4294901760
    %1805 = vmatpush.msra.mxu0 %v1804
    %v1806 = vand.u32 %v183, 4294901760
    %v1807 = vsub.f32 %v183, %v1806
    %v1808 = vand.u32 %v1807, 4294901760
    %1809 = vmatpush.msra.mxu0 %v1808
    %v1810 = vand.u32 %v181, 4294901760
    %v1811 = vsub.f32 %v181, %v1810
    %v1812 = vand.u32 %v1811, 4294901760
    %1813 = vmatpush.msra.mxu0 %v1812
    %v1814 = vand.u32 %v179, 4294901760
    %v1815 = vsub.f32 %v179, %v1814
    %v1816 = vand.u32 %v1815, 4294901760
    %1817 = vmatpush.msra.mxu0 %v1816
    %v1818 = vand.u32 %v177, 4294901760
    %v1819 = vsub.f32 %v177, %v1818
    %v1820 = vand.u32 %v1819, 4294901760
    %1821 = vmatpush.msra.mxu0 %v1820
    %v1822 = vand.u32 %v175, 4294901760
    %v1823 = vsub.f32 %v175, %v1822
    %v1824 = vand.u32 %v1823, 4294901760
    %1825 = vmatpush.msra.mxu0 %v1824
    %v1826 = vand.u32 %v173, 4294901760
    %v1827 = vsub.f32 %v173, %v1826
    %v1828 = vand.u32 %v1827, 4294901760
    %1829 = vmatpush.msra.mxu0 %v1828
    %v1830 = vand.u32 %v171, 4294901760
    %v1831 = vsub.f32 %v171, %v1830
    %v1832 = vand.u32 %v1831, 4294901760
    %1833 = vmatpush.msra.mxu0 %v1832
    %v1834 = vand.u32 %v169, 4294901760
    %v1835 = vsub.f32 %v169, %v1834
    %v1836 = vand.u32 %v1835, 4294901760
    %1837 = vmatpush.msra.mxu0 %v1836
    %v1838 = vand.u32 %v167, 4294901760
    %v1839 = vsub.f32 %v167, %v1838
    %v1840 = vand.u32 %v1839, 4294901760
    %1841 = vmatpush.msra.mxu0 %v1840
    %v1842 = vand.u32 %v165, 4294901760
    %v1843 = vsub.f32 %v165, %v1842
    %v1844 = vand.u32 %v1843, 4294901760
    %1845 = vmatpush.msra.mxu0 %v1844
    %v1846 = vand.u32 %v521, 4294901760
    %1847 = vmatmul.f32.gmra.mxu0 %v1846
    %v1848 = vpop.f32.mrf.mxu0
    %v1849 = vadd.f32 %v1780, %v1848
    %1850 = vdwg.mxu0
    %v1851 = vand.u32 %v195, 4294901760
    %1852 = vmatpush.msra.mxu0 %v1851
    %v1853 = vand.u32 %v193, 4294901760
    %1854 = vmatpush.msra.mxu0 %v1853
    %v1855 = vand.u32 %v191, 4294901760
    %1856 = vmatpush.msra.mxu0 %v1855
    %v1857 = vand.u32 %v189, 4294901760
    %1858 = vmatpush.msra.mxu0 %v1857
    %v1859 = vand.u32 %v187, 4294901760
    %1860 = vmatpush.msra.mxu0 %v1859
    %v1861 = vand.u32 %v185, 4294901760
    %1862 = vmatpush.msra.mxu0 %v1861
    %v1863 = vand.u32 %v183, 4294901760
    %1864 = vmatpush.msra.mxu0 %v1863
    %v1865 = vand.u32 %v181, 4294901760
    %1866 = vmatpush.msra.mxu0 %v1865
    %v1867 = vand.u32 %v179, 4294901760
    %1868 = vmatpush.msra.mxu0 %v1867
    %v1869 = vand.u32 %v177, 4294901760
    %1870 = vmatpush.msra.mxu0 %v1869
    %v1871 = vand.u32 %v175, 4294901760
    %1872 = vmatpush.msra.mxu0 %v1871
    %v1873 = vand.u32 %v173, 4294901760
    %1874 = vmatpush.msra.mxu0 %v1873
    %v1875 = vand.u32 %v171, 4294901760
    %1876 = vmatpush.msra.mxu0 %v1875
    %v1877 = vand.u32 %v169, 4294901760
    %1878 = vmatpush.msra.mxu0 %v1877
    %v1879 = vand.u32 %v167, 4294901760
    %1880 = vmatpush.msra.mxu0 %v1879
    %v1881 = vand.u32 %v165, 4294901760
    %1882 = vmatpush.msra.mxu0 %v1881
    %v1883 = vand.u32 %v521, 4294901760
    %1884 = vmatmul.f32.gmra.mxu0 %v1883
    %v1885 = vpop.f32.mrf.mxu0
    %v1886 = vadd.f32 %v1849, %v1885
    %1887 = vdwg.mxu0
    %v1892 = vsel %vm231, %v475, %v473
    %v1893 = vsel %vm231, %v476, %v474
    %v1896 = vand.u32 %v97, 4294901760
    %1897 = vmatpush.msra.mxu0 %v1896
    %v1898 = vand.u32 %v95, 4294901760
    %1899 = vmatpush.msra.mxu0 %v1898
    %v1900 = vand.u32 %v93, 4294901760
    %1901 = vmatpush.msra.mxu0 %v1900
    %v1902 = vand.u32 %v91, 4294901760
    %1903 = vmatpush.msra.mxu0 %v1902
    %v1904 = vand.u32 %v89, 4294901760
    %1905 = vmatpush.msra.mxu0 %v1904
    %v1906 = vand.u32 %v87, 4294901760
    %1907 = vmatpush.msra.mxu0 %v1906
    %v1908 = vand.u32 %v85, 4294901760
    %1909 = vmatpush.msra.mxu0 %v1908
    %v1910 = vand.u32 %v83, 4294901760
    %1911 = vmatpush.msra.mxu0 %v1910
    %v1912 = vand.u32 %v81, 4294901760
    %1913 = vmatpush.msra.mxu0 %v1912
    %v1914 = vand.u32 %v79, 4294901760
    %1915 = vmatpush.msra.mxu0 %v1914
    %v1916 = vand.u32 %v77, 4294901760
    %1917 = vmatpush.msra.mxu0 %v1916
    %v1918 = vand.u32 %v75, 4294901760
    %1919 = vmatpush.msra.mxu0 %v1918
    %v1920 = vand.u32 %v73, 4294901760
    %1921 = vmatpush.msra.mxu0 %v1920
    %v1922 = vand.u32 %v71, 4294901760
    %1923 = vmatpush.msra.mxu0 %v1922
    %v1924 = vand.u32 %v69, 4294901760
    %1925 = vmatpush.msra.mxu0 %v1924
    %v1926 = vand.u32 %v67, 4294901760
    %1927 = vmatpush.msra.mxu0 %v1926
    %v1928 = vand.u32 %v1892, 4294901760
    %v1929 = vsub.f32 %v1892, %v1928
    %v1930 = vand.u32 %v1929, 4294901760
    %v1931 = vsub.f32 %v1929, %v1930
    %v1932 = vand.u32 %v1931, 4294901760
    %1933 = vmatmul.f32.gmra.mxu0 %v1932
    %v1934 = vpop.f32.mrf.mxu0
    %v1935 = vadd.f32 %v1204, %v1934
    %1936 = vdwg.mxu0
    %v1937 = vand.u32 %v97, 4294901760
    %v1938 = vsub.f32 %v97, %v1937
    %v1939 = vand.u32 %v1938, 4294901760
    %v1940 = vsub.f32 %v1938, %v1939
    %v1941 = vand.u32 %v1940, 4294901760
    %1942 = vmatpush.msra.mxu0 %v1941
    %v1943 = vand.u32 %v95, 4294901760
    %v1944 = vsub.f32 %v95, %v1943
    %v1945 = vand.u32 %v1944, 4294901760
    %v1946 = vsub.f32 %v1944, %v1945
    %v1947 = vand.u32 %v1946, 4294901760
    %1948 = vmatpush.msra.mxu0 %v1947
    %v1949 = vand.u32 %v93, 4294901760
    %v1950 = vsub.f32 %v93, %v1949
    %v1951 = vand.u32 %v1950, 4294901760
    %v1952 = vsub.f32 %v1950, %v1951
    %v1953 = vand.u32 %v1952, 4294901760
    %1954 = vmatpush.msra.mxu0 %v1953
    %v1955 = vand.u32 %v91, 4294901760
    %v1956 = vsub.f32 %v91, %v1955
    %v1957 = vand.u32 %v1956, 4294901760
    %v1958 = vsub.f32 %v1956, %v1957
    %v1959 = vand.u32 %v1958, 4294901760
    %1960 = vmatpush.msra.mxu0 %v1959
    %v1961 = vand.u32 %v89, 4294901760
    %v1962 = vsub.f32 %v89, %v1961
    %v1963 = vand.u32 %v1962, 4294901760
    %v1964 = vsub.f32 %v1962, %v1963
    %v1965 = vand.u32 %v1964, 4294901760
    %1966 = vmatpush.msra.mxu0 %v1965
    %v1967 = vand.u32 %v87, 4294901760
    %v1968 = vsub.f32 %v87, %v1967
    %v1969 = vand.u32 %v1968, 4294901760
    %v1970 = vsub.f32 %v1968, %v1969
    %v1971 = vand.u32 %v1970, 4294901760
    %1972 = vmatpush.msra.mxu0 %v1971
    %v1973 = vand.u32 %v85, 4294901760
    %v1974 = vsub.f32 %v85, %v1973
    %v1975 = vand.u32 %v1974, 4294901760
    %v1976 = vsub.f32 %v1974, %v1975
    %v1977 = vand.u32 %v1976, 4294901760
    %1978 = vmatpush.msra.mxu0 %v1977
    %v1979 = vand.u32 %v83, 4294901760
    %v1980 = vsub.f32 %v83, %v1979
    %v1981 = vand.u32 %v1980, 4294901760
    %v1982 = vsub.f32 %v1980, %v1981
    %v1983 = vand.u32 %v1982, 4294901760
    %1984 = vmatpush.msra.mxu0 %v1983
    %v1985 = vand.u32 %v81, 4294901760
    %v1986 = vsub.f32 %v81, %v1985
    %v1987 = vand.u32 %v1986, 4294901760
    %v1988 = vsub.f32 %v1986, %v1987
    %v1989 = vand.u32 %v1988, 4294901760
    %1990 = vmatpush.msra.mxu0 %v1989
    %v1991 = vand.u32 %v79, 4294901760
    %v1992 = vsub.f32 %v79, %v1991
    %v1993 = vand.u32 %v1992, 4294901760
    %v1994 = vsub.f32 %v1992, %v1993
    %v1995 = vand.u32 %v1994, 4294901760
    %1996 = vmatpush.msra.mxu0 %v1995
    %v1997 = vand.u32 %v77, 4294901760
    %v1998 = vsub.f32 %v77, %v1997
    %v1999 = vand.u32 %v1998, 4294901760
    %v2000 = vsub.f32 %v1998, %v1999
    %v2001 = vand.u32 %v2000, 4294901760
    %2002 = vmatpush.msra.mxu0 %v2001
    %v2003 = vand.u32 %v75, 4294901760
    %v2004 = vsub.f32 %v75, %v2003
    %v2005 = vand.u32 %v2004, 4294901760
    %v2006 = vsub.f32 %v2004, %v2005
    %v2007 = vand.u32 %v2006, 4294901760
    %2008 = vmatpush.msra.mxu0 %v2007
    %v2009 = vand.u32 %v73, 4294901760
    %v2010 = vsub.f32 %v73, %v2009
    %v2011 = vand.u32 %v2010, 4294901760
    %v2012 = vsub.f32 %v2010, %v2011
    %v2013 = vand.u32 %v2012, 4294901760
    %2014 = vmatpush.msra.mxu0 %v2013
    %v2015 = vand.u32 %v71, 4294901760
    %v2016 = vsub.f32 %v71, %v2015
    %v2017 = vand.u32 %v2016, 4294901760
    %v2018 = vsub.f32 %v2016, %v2017
    %v2019 = vand.u32 %v2018, 4294901760
    %2020 = vmatpush.msra.mxu0 %v2019
    %v2021 = vand.u32 %v69, 4294901760
    %v2022 = vsub.f32 %v69, %v2021
    %v2023 = vand.u32 %v2022, 4294901760
    %v2024 = vsub.f32 %v2022, %v2023
    %v2025 = vand.u32 %v2024, 4294901760
    %2026 = vmatpush.msra.mxu0 %v2025
    %v2027 = vand.u32 %v67, 4294901760
    %v2028 = vsub.f32 %v67, %v2027
    %v2029 = vand.u32 %v2028, 4294901760
    %v2030 = vsub.f32 %v2028, %v2029
    %v2031 = vand.u32 %v2030, 4294901760
    %2032 = vmatpush.msra.mxu0 %v2031
    %v2033 = vand.u32 %v1892, 4294901760
    %2034 = vmatmul.f32.gmra.mxu0 %v2033
    %v2035 = vpop.f32.mrf.mxu0
    %v2036 = vadd.f32 %v1935, %v2035
    %2037 = vdwg.mxu0
    %v2038 = vand.u32 %v97, 4294901760
    %v2039 = vsub.f32 %v97, %v2038
    %2040 = vmatpush.msra.mxu0 %v2039
    %v2041 = vand.u32 %v95, 4294901760
    %v2042 = vsub.f32 %v95, %v2041
    %2043 = vmatpush.msra.mxu0 %v2042
    %v2044 = vand.u32 %v93, 4294901760
    %v2045 = vsub.f32 %v93, %v2044
    %2046 = vmatpush.msra.mxu0 %v2045
    %v2047 = vand.u32 %v91, 4294901760
    %v2048 = vsub.f32 %v91, %v2047
    %2049 = vmatpush.msra.mxu0 %v2048
    %v2050 = vand.u32 %v89, 4294901760
    %v2051 = vsub.f32 %v89, %v2050
    %2052 = vmatpush.msra.mxu0 %v2051
    %v2053 = vand.u32 %v87, 4294901760
    %v2054 = vsub.f32 %v87, %v2053
    %2055 = vmatpush.msra.mxu0 %v2054
    %v2056 = vand.u32 %v85, 4294901760
    %v2057 = vsub.f32 %v85, %v2056
    %2058 = vmatpush.msra.mxu0 %v2057
    %v2059 = vand.u32 %v83, 4294901760
    %v2060 = vsub.f32 %v83, %v2059
    %2061 = vmatpush.msra.mxu0 %v2060
    %v2062 = vand.u32 %v81, 4294901760
    %v2063 = vsub.f32 %v81, %v2062
    %2064 = vmatpush.msra.mxu0 %v2063
    %v2065 = vand.u32 %v79, 4294901760
    %v2066 = vsub.f32 %v79, %v2065
    %2067 = vmatpush.msra.mxu0 %v2066
    %v2068 = vand.u32 %v77, 4294901760
    %v2069 = vsub.f32 %v77, %v2068
    %2070 = vmatpush.msra.mxu0 %v2069
    %v2071 = vand.u32 %v75, 4294901760
    %v2072 = vsub.f32 %v75, %v2071
    %2073 = vmatpush.msra.mxu0 %v2072
    %v2074 = vand.u32 %v73, 4294901760
    %v2075 = vsub.f32 %v73, %v2074
    %2076 = vmatpush.msra.mxu0 %v2075
    %v2077 = vand.u32 %v71, 4294901760
    %v2078 = vsub.f32 %v71, %v2077
    %2079 = vmatpush.msra.mxu0 %v2078
    %v2080 = vand.u32 %v69, 4294901760
    %v2081 = vsub.f32 %v69, %v2080
    %2082 = vmatpush.msra.mxu0 %v2081
    %v2083 = vand.u32 %v67, 4294901760
    %v2084 = vsub.f32 %v67, %v2083
    %2085 = vmatpush.msra.mxu0 %v2084
    %v2086 = vand.u32 %v1892, 4294901760
    %v2087 = vsub.f32 %v1892, %v2086
    %2088 = vmatmul.f32.gmra.mxu0 %v2087
    %v2089 = vpop.f32.mrf.mxu0
    %v2090 = vadd.f32 %v2036, %v2089
    %2091 = vdwg.mxu0
    %v2092 = vand.u32 %v97, 4294901760
    %2093 = vmatpush.msra.mxu0 %v2092
    %v2094 = vand.u32 %v95, 4294901760
    %2095 = vmatpush.msra.mxu0 %v2094
    %v2096 = vand.u32 %v93, 4294901760
    %2097 = vmatpush.msra.mxu0 %v2096
    %v2098 = vand.u32 %v91, 4294901760
    %2099 = vmatpush.msra.mxu0 %v2098
    %v2100 = vand.u32 %v89, 4294901760
    %2101 = vmatpush.msra.mxu0 %v2100
    %v2102 = vand.u32 %v87, 4294901760
    %2103 = vmatpush.msra.mxu0 %v2102
    %v2104 = vand.u32 %v85, 4294901760
    %2105 = vmatpush.msra.mxu0 %v2104
    %v2106 = vand.u32 %v83, 4294901760
    %2107 = vmatpush.msra.mxu0 %v2106
    %v2108 = vand.u32 %v81, 4294901760
    %2109 = vmatpush.msra.mxu0 %v2108
    %v2110 = vand.u32 %v79, 4294901760
    %2111 = vmatpush.msra.mxu0 %v2110
    %v2112 = vand.u32 %v77, 4294901760
    %2113 = vmatpush.msra.mxu0 %v2112
    %v2114 = vand.u32 %v75, 4294901760
    %2115 = vmatpush.msra.mxu0 %v2114
    %v2116 = vand.u32 %v73, 4294901760
    %2117 = vmatpush.msra.mxu0 %v2116
    %v2118 = vand.u32 %v71, 4294901760
    %2119 = vmatpush.msra.mxu0 %v2118
    %v2120 = vand.u32 %v69, 4294901760
    %2121 = vmatpush.msra.mxu0 %v2120
    %v2122 = vand.u32 %v67, 4294901760
    %2123 = vmatpush.msra.mxu0 %v2122
    %v2124 = vand.u32 %v1892, 4294901760
    %v2125 = vsub.f32 %v1892, %v2124
    %v2126 = vand.u32 %v2125, 4294901760
    %2127 = vmatmul.f32.gmra.mxu0 %v2126
    %v2128 = vpop.f32.mrf.mxu0
    %v2129 = vadd.f32 %v2090, %v2128
    %2130 = vdwg.mxu0
    %v2131 = vand.u32 %v97, 4294901760
    %v2132 = vsub.f32 %v97, %v2131
    %v2133 = vand.u32 %v2132, 4294901760
    %2134 = vmatpush.msra.mxu0 %v2133
    %v2135 = vand.u32 %v95, 4294901760
    %v2136 = vsub.f32 %v95, %v2135
    %v2137 = vand.u32 %v2136, 4294901760
    %2138 = vmatpush.msra.mxu0 %v2137
    %v2139 = vand.u32 %v93, 4294901760
    %v2140 = vsub.f32 %v93, %v2139
    %v2141 = vand.u32 %v2140, 4294901760
    %2142 = vmatpush.msra.mxu0 %v2141
    %v2143 = vand.u32 %v91, 4294901760
    %v2144 = vsub.f32 %v91, %v2143
    %v2145 = vand.u32 %v2144, 4294901760
    %2146 = vmatpush.msra.mxu0 %v2145
    %v2147 = vand.u32 %v89, 4294901760
    %v2148 = vsub.f32 %v89, %v2147
    %v2149 = vand.u32 %v2148, 4294901760
    %2150 = vmatpush.msra.mxu0 %v2149
    %v2151 = vand.u32 %v87, 4294901760
    %v2152 = vsub.f32 %v87, %v2151
    %v2153 = vand.u32 %v2152, 4294901760
    %2154 = vmatpush.msra.mxu0 %v2153
    %v2155 = vand.u32 %v85, 4294901760
    %v2156 = vsub.f32 %v85, %v2155
    %v2157 = vand.u32 %v2156, 4294901760
    %2158 = vmatpush.msra.mxu0 %v2157
    %v2159 = vand.u32 %v83, 4294901760
    %v2160 = vsub.f32 %v83, %v2159
    %v2161 = vand.u32 %v2160, 4294901760
    %2162 = vmatpush.msra.mxu0 %v2161
    %v2163 = vand.u32 %v81, 4294901760
    %v2164 = vsub.f32 %v81, %v2163
    %v2165 = vand.u32 %v2164, 4294901760
    %2166 = vmatpush.msra.mxu0 %v2165
    %v2167 = vand.u32 %v79, 4294901760
    %v2168 = vsub.f32 %v79, %v2167
    %v2169 = vand.u32 %v2168, 4294901760
    %2170 = vmatpush.msra.mxu0 %v2169
    %v2171 = vand.u32 %v77, 4294901760
    %v2172 = vsub.f32 %v77, %v2171
    %v2173 = vand.u32 %v2172, 4294901760
    %2174 = vmatpush.msra.mxu0 %v2173
    %v2175 = vand.u32 %v75, 4294901760
    %v2176 = vsub.f32 %v75, %v2175
    %v2177 = vand.u32 %v2176, 4294901760
    %2178 = vmatpush.msra.mxu0 %v2177
    %v2179 = vand.u32 %v73, 4294901760
    %v2180 = vsub.f32 %v73, %v2179
    %v2181 = vand.u32 %v2180, 4294901760
    %2182 = vmatpush.msra.mxu0 %v2181
    %v2183 = vand.u32 %v71, 4294901760
    %v2184 = vsub.f32 %v71, %v2183
    %v2185 = vand.u32 %v2184, 4294901760
    %2186 = vmatpush.msra.mxu0 %v2185
    %v2187 = vand.u32 %v69, 4294901760
    %v2188 = vsub.f32 %v69, %v2187
    %v2189 = vand.u32 %v2188, 4294901760
    %2190 = vmatpush.msra.mxu0 %v2189
    %v2191 = vand.u32 %v67, 4294901760
    %v2192 = vsub.f32 %v67, %v2191
    %v2193 = vand.u32 %v2192, 4294901760
    %2194 = vmatpush.msra.mxu0 %v2193
    %v2195 = vand.u32 %v1892, 4294901760
    %2196 = vmatmul.f32.gmra.mxu0 %v2195
    %v2197 = vpop.f32.mrf.mxu0
    %v2198 = vadd.f32 %v2129, %v2197
    %2199 = vdwg.mxu0
    %v2200 = vand.u32 %v97, 4294901760
    %2201 = vmatpush.msra.mxu0 %v2200
    %v2202 = vand.u32 %v95, 4294901760
    %2203 = vmatpush.msra.mxu0 %v2202
    %v2204 = vand.u32 %v93, 4294901760
    %2205 = vmatpush.msra.mxu0 %v2204
    %v2206 = vand.u32 %v91, 4294901760
    %2207 = vmatpush.msra.mxu0 %v2206
    %v2208 = vand.u32 %v89, 4294901760
    %2209 = vmatpush.msra.mxu0 %v2208
    %v2210 = vand.u32 %v87, 4294901760
    %2211 = vmatpush.msra.mxu0 %v2210
    %v2212 = vand.u32 %v85, 4294901760
    %2213 = vmatpush.msra.mxu0 %v2212
    %v2214 = vand.u32 %v83, 4294901760
    %2215 = vmatpush.msra.mxu0 %v2214
    %v2216 = vand.u32 %v81, 4294901760
    %2217 = vmatpush.msra.mxu0 %v2216
    %v2218 = vand.u32 %v79, 4294901760
    %2219 = vmatpush.msra.mxu0 %v2218
    %v2220 = vand.u32 %v77, 4294901760
    %2221 = vmatpush.msra.mxu0 %v2220
    %v2222 = vand.u32 %v75, 4294901760
    %2223 = vmatpush.msra.mxu0 %v2222
    %v2224 = vand.u32 %v73, 4294901760
    %2225 = vmatpush.msra.mxu0 %v2224
    %v2226 = vand.u32 %v71, 4294901760
    %2227 = vmatpush.msra.mxu0 %v2226
    %v2228 = vand.u32 %v69, 4294901760
    %2229 = vmatpush.msra.mxu0 %v2228
    %v2230 = vand.u32 %v67, 4294901760
    %2231 = vmatpush.msra.mxu0 %v2230
    %v2232 = vand.u32 %v1892, 4294901760
    %2233 = vmatmul.f32.gmra.mxu0 %v2232
    %v2234 = vpop.f32.mrf.mxu0
    %v2235 = vadd.f32 %v2198, %v2234
    %2236 = vdwg.mxu0
    %v2237 = vand.u32 %v129, 4294901760
    %2238 = vmatpush.msra.mxu0 %v2237
    %v2239 = vand.u32 %v127, 4294901760
    %2240 = vmatpush.msra.mxu0 %v2239
    %v2241 = vand.u32 %v125, 4294901760
    %2242 = vmatpush.msra.mxu0 %v2241
    %v2243 = vand.u32 %v123, 4294901760
    %2244 = vmatpush.msra.mxu0 %v2243
    %v2245 = vand.u32 %v121, 4294901760
    %2246 = vmatpush.msra.mxu0 %v2245
    %v2247 = vand.u32 %v119, 4294901760
    %2248 = vmatpush.msra.mxu0 %v2247
    %v2249 = vand.u32 %v117, 4294901760
    %2250 = vmatpush.msra.mxu0 %v2249
    %v2251 = vand.u32 %v115, 4294901760
    %2252 = vmatpush.msra.mxu0 %v2251
    %v2253 = vand.u32 %v113, 4294901760
    %2254 = vmatpush.msra.mxu0 %v2253
    %v2255 = vand.u32 %v111, 4294901760
    %2256 = vmatpush.msra.mxu0 %v2255
    %v2257 = vand.u32 %v109, 4294901760
    %2258 = vmatpush.msra.mxu0 %v2257
    %v2259 = vand.u32 %v107, 4294901760
    %2260 = vmatpush.msra.mxu0 %v2259
    %v2261 = vand.u32 %v105, 4294901760
    %2262 = vmatpush.msra.mxu0 %v2261
    %v2263 = vand.u32 %v103, 4294901760
    %2264 = vmatpush.msra.mxu0 %v2263
    %v2265 = vand.u32 %v101, 4294901760
    %2266 = vmatpush.msra.mxu0 %v2265
    %v2267 = vand.u32 %v99, 4294901760
    %2268 = vmatpush.msra.mxu0 %v2267
    %v2269 = vand.u32 %v1893, 4294901760
    %v2270 = vsub.f32 %v1893, %v2269
    %v2271 = vand.u32 %v2270, 4294901760
    %v2272 = vsub.f32 %v2270, %v2271
    %v2273 = vand.u32 %v2272, 4294901760
    %2274 = vmatmul.f32.gmra.mxu0 %v2273
    %v2275 = vpop.f32.mrf.mxu0
    %v2276 = vadd.f32 %v2235, %v2275
    %2277 = vdwg.mxu0
    %v2278 = vand.u32 %v129, 4294901760
    %v2279 = vsub.f32 %v129, %v2278
    %v2280 = vand.u32 %v2279, 4294901760
    %v2281 = vsub.f32 %v2279, %v2280
    %v2282 = vand.u32 %v2281, 4294901760
    %2283 = vmatpush.msra.mxu0 %v2282
    %v2284 = vand.u32 %v127, 4294901760
    %v2285 = vsub.f32 %v127, %v2284
    %v2286 = vand.u32 %v2285, 4294901760
    %v2287 = vsub.f32 %v2285, %v2286
    %v2288 = vand.u32 %v2287, 4294901760
    %2289 = vmatpush.msra.mxu0 %v2288
    %v2290 = vand.u32 %v125, 4294901760
    %v2291 = vsub.f32 %v125, %v2290
    %v2292 = vand.u32 %v2291, 4294901760
    %v2293 = vsub.f32 %v2291, %v2292
    %v2294 = vand.u32 %v2293, 4294901760
    %2295 = vmatpush.msra.mxu0 %v2294
    %v2296 = vand.u32 %v123, 4294901760
    %v2297 = vsub.f32 %v123, %v2296
    %v2298 = vand.u32 %v2297, 4294901760
    %v2299 = vsub.f32 %v2297, %v2298
    %v2300 = vand.u32 %v2299, 4294901760
    %2301 = vmatpush.msra.mxu0 %v2300
    %v2302 = vand.u32 %v121, 4294901760
    %v2303 = vsub.f32 %v121, %v2302
    %v2304 = vand.u32 %v2303, 4294901760
    %v2305 = vsub.f32 %v2303, %v2304
    %v2306 = vand.u32 %v2305, 4294901760
    %2307 = vmatpush.msra.mxu0 %v2306
    %v2308 = vand.u32 %v119, 4294901760
    %v2309 = vsub.f32 %v119, %v2308
    %v2310 = vand.u32 %v2309, 4294901760
    %v2311 = vsub.f32 %v2309, %v2310
    %v2312 = vand.u32 %v2311, 4294901760
    %2313 = vmatpush.msra.mxu0 %v2312
    %v2314 = vand.u32 %v117, 4294901760
    %v2315 = vsub.f32 %v117, %v2314
    %v2316 = vand.u32 %v2315, 4294901760
    %v2317 = vsub.f32 %v2315, %v2316
    %v2318 = vand.u32 %v2317, 4294901760
    %2319 = vmatpush.msra.mxu0 %v2318
    %v2320 = vand.u32 %v115, 4294901760
    %v2321 = vsub.f32 %v115, %v2320
    %v2322 = vand.u32 %v2321, 4294901760
    %v2323 = vsub.f32 %v2321, %v2322
    %v2324 = vand.u32 %v2323, 4294901760
    %2325 = vmatpush.msra.mxu0 %v2324
    %v2326 = vand.u32 %v113, 4294901760
    %v2327 = vsub.f32 %v113, %v2326
    %v2328 = vand.u32 %v2327, 4294901760
    %v2329 = vsub.f32 %v2327, %v2328
    %v2330 = vand.u32 %v2329, 4294901760
    %2331 = vmatpush.msra.mxu0 %v2330
    %v2332 = vand.u32 %v111, 4294901760
    %v2333 = vsub.f32 %v111, %v2332
    %v2334 = vand.u32 %v2333, 4294901760
    %v2335 = vsub.f32 %v2333, %v2334
    %v2336 = vand.u32 %v2335, 4294901760
    %2337 = vmatpush.msra.mxu0 %v2336
    %v2338 = vand.u32 %v109, 4294901760
    %v2339 = vsub.f32 %v109, %v2338
    %v2340 = vand.u32 %v2339, 4294901760
    %v2341 = vsub.f32 %v2339, %v2340
    %v2342 = vand.u32 %v2341, 4294901760
    %2343 = vmatpush.msra.mxu0 %v2342
    %v2344 = vand.u32 %v107, 4294901760
    %v2345 = vsub.f32 %v107, %v2344
    %v2346 = vand.u32 %v2345, 4294901760
    %v2347 = vsub.f32 %v2345, %v2346
    %v2348 = vand.u32 %v2347, 4294901760
    %2349 = vmatpush.msra.mxu0 %v2348
    %v2350 = vand.u32 %v105, 4294901760
    %v2351 = vsub.f32 %v105, %v2350
    %v2352 = vand.u32 %v2351, 4294901760
    %v2353 = vsub.f32 %v2351, %v2352
    %v2354 = vand.u32 %v2353, 4294901760
    %2355 = vmatpush.msra.mxu0 %v2354
    %v2356 = vand.u32 %v103, 4294901760
    %v2357 = vsub.f32 %v103, %v2356
    %v2358 = vand.u32 %v2357, 4294901760
    %v2359 = vsub.f32 %v2357, %v2358
    %v2360 = vand.u32 %v2359, 4294901760
    %2361 = vmatpush.msra.mxu0 %v2360
    %v2362 = vand.u32 %v101, 4294901760
    %v2363 = vsub.f32 %v101, %v2362
    %v2364 = vand.u32 %v2363, 4294901760
    %v2365 = vsub.f32 %v2363, %v2364
    %v2366 = vand.u32 %v2365, 4294901760
    %2367 = vmatpush.msra.mxu0 %v2366
    %v2368 = vand.u32 %v99, 4294901760
    %v2369 = vsub.f32 %v99, %v2368
    %v2370 = vand.u32 %v2369, 4294901760
    %v2371 = vsub.f32 %v2369, %v2370
    %v2372 = vand.u32 %v2371, 4294901760
    %2373 = vmatpush.msra.mxu0 %v2372
    %v2374 = vand.u32 %v1893, 4294901760
    %2375 = vmatmul.f32.gmra.mxu0 %v2374
    %v2376 = vpop.f32.mrf.mxu0
    %v2377 = vadd.f32 %v2276, %v2376
    %2378 = vdwg.mxu0
    %v2379 = vand.u32 %v129, 4294901760
    %v2380 = vsub.f32 %v129, %v2379
    %2381 = vmatpush.msra.mxu0 %v2380
    %v2382 = vand.u32 %v127, 4294901760
    %v2383 = vsub.f32 %v127, %v2382
    %2384 = vmatpush.msra.mxu0 %v2383
    %v2385 = vand.u32 %v125, 4294901760
    %v2386 = vsub.f32 %v125, %v2385
    %2387 = vmatpush.msra.mxu0 %v2386
    %v2388 = vand.u32 %v123, 4294901760
    %v2389 = vsub.f32 %v123, %v2388
    %2390 = vmatpush.msra.mxu0 %v2389
    %v2391 = vand.u32 %v121, 4294901760
    %v2392 = vsub.f32 %v121, %v2391
    %2393 = vmatpush.msra.mxu0 %v2392
    %v2394 = vand.u32 %v119, 4294901760
    %v2395 = vsub.f32 %v119, %v2394
    %2396 = vmatpush.msra.mxu0 %v2395
    %v2397 = vand.u32 %v117, 4294901760
    %v2398 = vsub.f32 %v117, %v2397
    %2399 = vmatpush.msra.mxu0 %v2398
    %v2400 = vand.u32 %v115, 4294901760
    %v2401 = vsub.f32 %v115, %v2400
    %2402 = vmatpush.msra.mxu0 %v2401
    %v2403 = vand.u32 %v113, 4294901760
    %v2404 = vsub.f32 %v113, %v2403
    %2405 = vmatpush.msra.mxu0 %v2404
    %v2406 = vand.u32 %v111, 4294901760
    %v2407 = vsub.f32 %v111, %v2406
    %2408 = vmatpush.msra.mxu0 %v2407
    %v2409 = vand.u32 %v109, 4294901760
    %v2410 = vsub.f32 %v109, %v2409
    %2411 = vmatpush.msra.mxu0 %v2410
    %v2412 = vand.u32 %v107, 4294901760
    %v2413 = vsub.f32 %v107, %v2412
    %2414 = vmatpush.msra.mxu0 %v2413
    %v2415 = vand.u32 %v105, 4294901760
    %v2416 = vsub.f32 %v105, %v2415
    %2417 = vmatpush.msra.mxu0 %v2416
    %v2418 = vand.u32 %v103, 4294901760
    %v2419 = vsub.f32 %v103, %v2418
    %2420 = vmatpush.msra.mxu0 %v2419
    %v2421 = vand.u32 %v101, 4294901760
    %v2422 = vsub.f32 %v101, %v2421
    %2423 = vmatpush.msra.mxu0 %v2422
    %v2424 = vand.u32 %v99, 4294901760
    %v2425 = vsub.f32 %v99, %v2424
    %2426 = vmatpush.msra.mxu0 %v2425
    %v2427 = vand.u32 %v1893, 4294901760
    %v2428 = vsub.f32 %v1893, %v2427
    %2429 = vmatmul.f32.gmra.mxu0 %v2428
    %v2430 = vpop.f32.mrf.mxu0
    %v2431 = vadd.f32 %v2377, %v2430
    %2432 = vdwg.mxu0
    %v2433 = vand.u32 %v129, 4294901760
    %2434 = vmatpush.msra.mxu0 %v2433
    %v2435 = vand.u32 %v127, 4294901760
    %2436 = vmatpush.msra.mxu0 %v2435
    %v2437 = vand.u32 %v125, 4294901760
    %2438 = vmatpush.msra.mxu0 %v2437
    %v2439 = vand.u32 %v123, 4294901760
    %2440 = vmatpush.msra.mxu0 %v2439
    %v2441 = vand.u32 %v121, 4294901760
    %2442 = vmatpush.msra.mxu0 %v2441
    %v2443 = vand.u32 %v119, 4294901760
    %2444 = vmatpush.msra.mxu0 %v2443
    %v2445 = vand.u32 %v117, 4294901760
    %2446 = vmatpush.msra.mxu0 %v2445
    %v2447 = vand.u32 %v115, 4294901760
    %2448 = vmatpush.msra.mxu0 %v2447
    %v2449 = vand.u32 %v113, 4294901760
    %2450 = vmatpush.msra.mxu0 %v2449
    %v2451 = vand.u32 %v111, 4294901760
    %2452 = vmatpush.msra.mxu0 %v2451
    %v2453 = vand.u32 %v109, 4294901760
    %2454 = vmatpush.msra.mxu0 %v2453
    %v2455 = vand.u32 %v107, 4294901760
    %2456 = vmatpush.msra.mxu0 %v2455
    %v2457 = vand.u32 %v105, 4294901760
    %2458 = vmatpush.msra.mxu0 %v2457
    %v2459 = vand.u32 %v103, 4294901760
    %2460 = vmatpush.msra.mxu0 %v2459
    %v2461 = vand.u32 %v101, 4294901760
    %2462 = vmatpush.msra.mxu0 %v2461
    %v2463 = vand.u32 %v99, 4294901760
    %2464 = vmatpush.msra.mxu0 %v2463
    %v2465 = vand.u32 %v1893, 4294901760
    %v2466 = vsub.f32 %v1893, %v2465
    %v2467 = vand.u32 %v2466, 4294901760
    %2468 = vmatmul.f32.gmra.mxu0 %v2467
    %v2469 = vpop.f32.mrf.mxu0
    %v2470 = vadd.f32 %v2431, %v2469
    %2471 = vdwg.mxu0
    %v2472 = vand.u32 %v129, 4294901760
    %v2473 = vsub.f32 %v129, %v2472
    %v2474 = vand.u32 %v2473, 4294901760
    %2475 = vmatpush.msra.mxu0 %v2474
    %v2476 = vand.u32 %v127, 4294901760
    %v2477 = vsub.f32 %v127, %v2476
    %v2478 = vand.u32 %v2477, 4294901760
    %2479 = vmatpush.msra.mxu0 %v2478
    %v2480 = vand.u32 %v125, 4294901760
    %v2481 = vsub.f32 %v125, %v2480
    %v2482 = vand.u32 %v2481, 4294901760
    %2483 = vmatpush.msra.mxu0 %v2482
    %v2484 = vand.u32 %v123, 4294901760
    %v2485 = vsub.f32 %v123, %v2484
    %v2486 = vand.u32 %v2485, 4294901760
    %2487 = vmatpush.msra.mxu0 %v2486
    %v2488 = vand.u32 %v121, 4294901760
    %v2489 = vsub.f32 %v121, %v2488
    %v2490 = vand.u32 %v2489, 4294901760
    %2491 = vmatpush.msra.mxu0 %v2490
    %v2492 = vand.u32 %v119, 4294901760
    %v2493 = vsub.f32 %v119, %v2492
    %v2494 = vand.u32 %v2493, 4294901760
    %2495 = vmatpush.msra.mxu0 %v2494
    %v2496 = vand.u32 %v117, 4294901760
    %v2497 = vsub.f32 %v117, %v2496
    %v2498 = vand.u32 %v2497, 4294901760
    %2499 = vmatpush.msra.mxu0 %v2498
    %v2500 = vand.u32 %v115, 4294901760
    %v2501 = vsub.f32 %v115, %v2500
    %v2502 = vand.u32 %v2501, 4294901760
    %2503 = vmatpush.msra.mxu0 %v2502
    %v2504 = vand.u32 %v113, 4294901760
    %v2505 = vsub.f32 %v113, %v2504
    %v2506 = vand.u32 %v2505, 4294901760
    %2507 = vmatpush.msra.mxu0 %v2506
    %v2508 = vand.u32 %v111, 4294901760
    %v2509 = vsub.f32 %v111, %v2508
    %v2510 = vand.u32 %v2509, 4294901760
    %2511 = vmatpush.msra.mxu0 %v2510
    %v2512 = vand.u32 %v109, 4294901760
    %v2513 = vsub.f32 %v109, %v2512
    %v2514 = vand.u32 %v2513, 4294901760
    %2515 = vmatpush.msra.mxu0 %v2514
    %v2516 = vand.u32 %v107, 4294901760
    %v2517 = vsub.f32 %v107, %v2516
    %v2518 = vand.u32 %v2517, 4294901760
    %2519 = vmatpush.msra.mxu0 %v2518
    %v2520 = vand.u32 %v105, 4294901760
    %v2521 = vsub.f32 %v105, %v2520
    %v2522 = vand.u32 %v2521, 4294901760
    %2523 = vmatpush.msra.mxu0 %v2522
    %v2524 = vand.u32 %v103, 4294901760
    %v2525 = vsub.f32 %v103, %v2524
    %v2526 = vand.u32 %v2525, 4294901760
    %2527 = vmatpush.msra.mxu0 %v2526
    %v2528 = vand.u32 %v101, 4294901760
    %v2529 = vsub.f32 %v101, %v2528
    %v2530 = vand.u32 %v2529, 4294901760
    %2531 = vmatpush.msra.mxu0 %v2530
    %v2532 = vand.u32 %v99, 4294901760
    %v2533 = vsub.f32 %v99, %v2532
    %v2534 = vand.u32 %v2533, 4294901760
    %2535 = vmatpush.msra.mxu0 %v2534
    %v2536 = vand.u32 %v1893, 4294901760
    %2537 = vmatmul.f32.gmra.mxu0 %v2536
    %v2538 = vpop.f32.mrf.mxu0
    %v2539 = vadd.f32 %v2470, %v2538
    %2540 = vdwg.mxu0
    %v2541 = vand.u32 %v129, 4294901760
    %2542 = vmatpush.msra.mxu0 %v2541
    %v2543 = vand.u32 %v127, 4294901760
    %2544 = vmatpush.msra.mxu0 %v2543
    %v2545 = vand.u32 %v125, 4294901760
    %2546 = vmatpush.msra.mxu0 %v2545
    %v2547 = vand.u32 %v123, 4294901760
    %2548 = vmatpush.msra.mxu0 %v2547
    %v2549 = vand.u32 %v121, 4294901760
    %2550 = vmatpush.msra.mxu0 %v2549
    %v2551 = vand.u32 %v119, 4294901760
    %2552 = vmatpush.msra.mxu0 %v2551
    %v2553 = vand.u32 %v117, 4294901760
    %2554 = vmatpush.msra.mxu0 %v2553
    %v2555 = vand.u32 %v115, 4294901760
    %2556 = vmatpush.msra.mxu0 %v2555
    %v2557 = vand.u32 %v113, 4294901760
    %2558 = vmatpush.msra.mxu0 %v2557
    %v2559 = vand.u32 %v111, 4294901760
    %2560 = vmatpush.msra.mxu0 %v2559
    %v2561 = vand.u32 %v109, 4294901760
    %2562 = vmatpush.msra.mxu0 %v2561
    %v2563 = vand.u32 %v107, 4294901760
    %2564 = vmatpush.msra.mxu0 %v2563
    %v2565 = vand.u32 %v105, 4294901760
    %2566 = vmatpush.msra.mxu0 %v2565
    %v2567 = vand.u32 %v103, 4294901760
    %2568 = vmatpush.msra.mxu0 %v2567
    %v2569 = vand.u32 %v101, 4294901760
    %2570 = vmatpush.msra.mxu0 %v2569
    %v2571 = vand.u32 %v99, 4294901760
    %2572 = vmatpush.msra.mxu0 %v2571
    %v2573 = vand.u32 %v1893, 4294901760
    %2574 = vmatmul.f32.gmra.mxu0 %v2573
    %v2575 = vpop.f32.mrf.mxu0
    %v2576 = vadd.f32 %v2539, %v2575
    %2577 = vdwg.mxu0
    %v2578 = vand.u32 %v98, 4294901760
    %2579 = vmatpush.msra.mxu0 %v2578
    %v2580 = vand.u32 %v96, 4294901760
    %2581 = vmatpush.msra.mxu0 %v2580
    %v2582 = vand.u32 %v94, 4294901760
    %2583 = vmatpush.msra.mxu0 %v2582
    %v2584 = vand.u32 %v92, 4294901760
    %2585 = vmatpush.msra.mxu0 %v2584
    %v2586 = vand.u32 %v90, 4294901760
    %2587 = vmatpush.msra.mxu0 %v2586
    %v2588 = vand.u32 %v88, 4294901760
    %2589 = vmatpush.msra.mxu0 %v2588
    %v2590 = vand.u32 %v86, 4294901760
    %2591 = vmatpush.msra.mxu0 %v2590
    %v2592 = vand.u32 %v84, 4294901760
    %2593 = vmatpush.msra.mxu0 %v2592
    %v2594 = vand.u32 %v82, 4294901760
    %2595 = vmatpush.msra.mxu0 %v2594
    %v2596 = vand.u32 %v80, 4294901760
    %2597 = vmatpush.msra.mxu0 %v2596
    %v2598 = vand.u32 %v78, 4294901760
    %2599 = vmatpush.msra.mxu0 %v2598
    %v2600 = vand.u32 %v76, 4294901760
    %2601 = vmatpush.msra.mxu0 %v2600
    %v2602 = vand.u32 %v74, 4294901760
    %2603 = vmatpush.msra.mxu0 %v2602
    %v2604 = vand.u32 %v72, 4294901760
    %2605 = vmatpush.msra.mxu0 %v2604
    %v2606 = vand.u32 %v70, 4294901760
    %2607 = vmatpush.msra.mxu0 %v2606
    %v2608 = vand.u32 %v68, 4294901760
    %2609 = vmatpush.msra.mxu0 %v2608
    %v2610 = vand.u32 %v1892, 4294901760
    %v2611 = vsub.f32 %v1892, %v2610
    %v2612 = vand.u32 %v2611, 4294901760
    %v2613 = vsub.f32 %v2611, %v2612
    %v2614 = vand.u32 %v2613, 4294901760
    %2615 = vmatmul.f32.gmra.mxu0 %v2614
    %v2616 = vpop.f32.mrf.mxu0
    %v2617 = vadd.f32 %v1886, %v2616
    %2618 = vdwg.mxu0
    %v2619 = vand.u32 %v98, 4294901760
    %v2620 = vsub.f32 %v98, %v2619
    %v2621 = vand.u32 %v2620, 4294901760
    %v2622 = vsub.f32 %v2620, %v2621
    %v2623 = vand.u32 %v2622, 4294901760
    %2624 = vmatpush.msra.mxu0 %v2623
    %v2625 = vand.u32 %v96, 4294901760
    %v2626 = vsub.f32 %v96, %v2625
    %v2627 = vand.u32 %v2626, 4294901760
    %v2628 = vsub.f32 %v2626, %v2627
    %v2629 = vand.u32 %v2628, 4294901760
    %2630 = vmatpush.msra.mxu0 %v2629
    %v2631 = vand.u32 %v94, 4294901760
    %v2632 = vsub.f32 %v94, %v2631
    %v2633 = vand.u32 %v2632, 4294901760
    %v2634 = vsub.f32 %v2632, %v2633
    %v2635 = vand.u32 %v2634, 4294901760
    %2636 = vmatpush.msra.mxu0 %v2635
    %v2637 = vand.u32 %v92, 4294901760
    %v2638 = vsub.f32 %v92, %v2637
    %v2639 = vand.u32 %v2638, 4294901760
    %v2640 = vsub.f32 %v2638, %v2639
    %v2641 = vand.u32 %v2640, 4294901760
    %2642 = vmatpush.msra.mxu0 %v2641
    %v2643 = vand.u32 %v90, 4294901760
    %v2644 = vsub.f32 %v90, %v2643
    %v2645 = vand.u32 %v2644, 4294901760
    %v2646 = vsub.f32 %v2644, %v2645
    %v2647 = vand.u32 %v2646, 4294901760
    %2648 = vmatpush.msra.mxu0 %v2647
    %v2649 = vand.u32 %v88, 4294901760
    %v2650 = vsub.f32 %v88, %v2649
    %v2651 = vand.u32 %v2650, 4294901760
    %v2652 = vsub.f32 %v2650, %v2651
    %v2653 = vand.u32 %v2652, 4294901760
    %2654 = vmatpush.msra.mxu0 %v2653
    %v2655 = vand.u32 %v86, 4294901760
    %v2656 = vsub.f32 %v86, %v2655
    %v2657 = vand.u32 %v2656, 4294901760
    %v2658 = vsub.f32 %v2656, %v2657
    %v2659 = vand.u32 %v2658, 4294901760
    %2660 = vmatpush.msra.mxu0 %v2659
    %v2661 = vand.u32 %v84, 4294901760
    %v2662 = vsub.f32 %v84, %v2661
    %v2663 = vand.u32 %v2662, 4294901760
    %v2664 = vsub.f32 %v2662, %v2663
    %v2665 = vand.u32 %v2664, 4294901760
    %2666 = vmatpush.msra.mxu0 %v2665
    %v2667 = vand.u32 %v82, 4294901760
    %v2668 = vsub.f32 %v82, %v2667
    %v2669 = vand.u32 %v2668, 4294901760
    %v2670 = vsub.f32 %v2668, %v2669
    %v2671 = vand.u32 %v2670, 4294901760
    %2672 = vmatpush.msra.mxu0 %v2671
    %v2673 = vand.u32 %v80, 4294901760
    %v2674 = vsub.f32 %v80, %v2673
    %v2675 = vand.u32 %v2674, 4294901760
    %v2676 = vsub.f32 %v2674, %v2675
    %v2677 = vand.u32 %v2676, 4294901760
    %2678 = vmatpush.msra.mxu0 %v2677
    %v2679 = vand.u32 %v78, 4294901760
    %v2680 = vsub.f32 %v78, %v2679
    %v2681 = vand.u32 %v2680, 4294901760
    %v2682 = vsub.f32 %v2680, %v2681
    %v2683 = vand.u32 %v2682, 4294901760
    %2684 = vmatpush.msra.mxu0 %v2683
    %v2685 = vand.u32 %v76, 4294901760
    %v2686 = vsub.f32 %v76, %v2685
    %v2687 = vand.u32 %v2686, 4294901760
    %v2688 = vsub.f32 %v2686, %v2687
    %v2689 = vand.u32 %v2688, 4294901760
    %2690 = vmatpush.msra.mxu0 %v2689
    %v2691 = vand.u32 %v74, 4294901760
    %v2692 = vsub.f32 %v74, %v2691
    %v2693 = vand.u32 %v2692, 4294901760
    %v2694 = vsub.f32 %v2692, %v2693
    %v2695 = vand.u32 %v2694, 4294901760
    %2696 = vmatpush.msra.mxu0 %v2695
    %v2697 = vand.u32 %v72, 4294901760
    %v2698 = vsub.f32 %v72, %v2697
    %v2699 = vand.u32 %v2698, 4294901760
    %v2700 = vsub.f32 %v2698, %v2699
    %v2701 = vand.u32 %v2700, 4294901760
    %2702 = vmatpush.msra.mxu0 %v2701
    %v2703 = vand.u32 %v70, 4294901760
    %v2704 = vsub.f32 %v70, %v2703
    %v2705 = vand.u32 %v2704, 4294901760
    %v2706 = vsub.f32 %v2704, %v2705
    %v2707 = vand.u32 %v2706, 4294901760
    %2708 = vmatpush.msra.mxu0 %v2707
    %v2709 = vand.u32 %v68, 4294901760
    %v2710 = vsub.f32 %v68, %v2709
    %v2711 = vand.u32 %v2710, 4294901760
    %v2712 = vsub.f32 %v2710, %v2711
    %v2713 = vand.u32 %v2712, 4294901760
    %2714 = vmatpush.msra.mxu0 %v2713
    %v2715 = vand.u32 %v1892, 4294901760
    %2716 = vmatmul.f32.gmra.mxu0 %v2715
    %v2717 = vpop.f32.mrf.mxu0
    %v2718 = vadd.f32 %v2617, %v2717
    %2719 = vdwg.mxu0
    %v2720 = vand.u32 %v98, 4294901760
    %v2721 = vsub.f32 %v98, %v2720
    %2722 = vmatpush.msra.mxu0 %v2721
    %v2723 = vand.u32 %v96, 4294901760
    %v2724 = vsub.f32 %v96, %v2723
    %2725 = vmatpush.msra.mxu0 %v2724
    %v2726 = vand.u32 %v94, 4294901760
    %v2727 = vsub.f32 %v94, %v2726
    %2728 = vmatpush.msra.mxu0 %v2727
    %v2729 = vand.u32 %v92, 4294901760
    %v2730 = vsub.f32 %v92, %v2729
    %2731 = vmatpush.msra.mxu0 %v2730
    %v2732 = vand.u32 %v90, 4294901760
    %v2733 = vsub.f32 %v90, %v2732
    %2734 = vmatpush.msra.mxu0 %v2733
    %v2735 = vand.u32 %v88, 4294901760
    %v2736 = vsub.f32 %v88, %v2735
    %2737 = vmatpush.msra.mxu0 %v2736
    %v2738 = vand.u32 %v86, 4294901760
    %v2739 = vsub.f32 %v86, %v2738
    %2740 = vmatpush.msra.mxu0 %v2739
    %v2741 = vand.u32 %v84, 4294901760
    %v2742 = vsub.f32 %v84, %v2741
    %2743 = vmatpush.msra.mxu0 %v2742
    %v2744 = vand.u32 %v82, 4294901760
    %v2745 = vsub.f32 %v82, %v2744
    %2746 = vmatpush.msra.mxu0 %v2745
    %v2747 = vand.u32 %v80, 4294901760
    %v2748 = vsub.f32 %v80, %v2747
    %2749 = vmatpush.msra.mxu0 %v2748
    %v2750 = vand.u32 %v78, 4294901760
    %v2751 = vsub.f32 %v78, %v2750
    %2752 = vmatpush.msra.mxu0 %v2751
    %v2753 = vand.u32 %v76, 4294901760
    %v2754 = vsub.f32 %v76, %v2753
    %2755 = vmatpush.msra.mxu0 %v2754
    %v2756 = vand.u32 %v74, 4294901760
    %v2757 = vsub.f32 %v74, %v2756
    %2758 = vmatpush.msra.mxu0 %v2757
    %v2759 = vand.u32 %v72, 4294901760
    %v2760 = vsub.f32 %v72, %v2759
    %2761 = vmatpush.msra.mxu0 %v2760
    %v2762 = vand.u32 %v70, 4294901760
    %v2763 = vsub.f32 %v70, %v2762
    %2764 = vmatpush.msra.mxu0 %v2763
    %v2765 = vand.u32 %v68, 4294901760
    %v2766 = vsub.f32 %v68, %v2765
    %2767 = vmatpush.msra.mxu0 %v2766
    %v2768 = vand.u32 %v1892, 4294901760
    %v2769 = vsub.f32 %v1892, %v2768
    %2770 = vmatmul.f32.gmra.mxu0 %v2769
    %v2771 = vpop.f32.mrf.mxu0
    %v2772 = vadd.f32 %v2718, %v2771
    %2773 = vdwg.mxu0
    %v2774 = vand.u32 %v98, 4294901760
    %2775 = vmatpush.msra.mxu0 %v2774
    %v2776 = vand.u32 %v96, 4294901760
    %2777 = vmatpush.msra.mxu0 %v2776
    %v2778 = vand.u32 %v94, 4294901760
    %2779 = vmatpush.msra.mxu0 %v2778
    %v2780 = vand.u32 %v92, 4294901760
    %2781 = vmatpush.msra.mxu0 %v2780
    %v2782 = vand.u32 %v90, 4294901760
    %2783 = vmatpush.msra.mxu0 %v2782
    %v2784 = vand.u32 %v88, 4294901760
    %2785 = vmatpush.msra.mxu0 %v2784
    %v2786 = vand.u32 %v86, 4294901760
    %2787 = vmatpush.msra.mxu0 %v2786
    %v2788 = vand.u32 %v84, 4294901760
    %2789 = vmatpush.msra.mxu0 %v2788
    %v2790 = vand.u32 %v82, 4294901760
    %2791 = vmatpush.msra.mxu0 %v2790
    %v2792 = vand.u32 %v80, 4294901760
    %2793 = vmatpush.msra.mxu0 %v2792
    %v2794 = vand.u32 %v78, 4294901760
    %2795 = vmatpush.msra.mxu0 %v2794
    %v2796 = vand.u32 %v76, 4294901760
    %2797 = vmatpush.msra.mxu0 %v2796
    %v2798 = vand.u32 %v74, 4294901760
    %2799 = vmatpush.msra.mxu0 %v2798
    %v2800 = vand.u32 %v72, 4294901760
    %2801 = vmatpush.msra.mxu0 %v2800
    %v2802 = vand.u32 %v70, 4294901760
    %2803 = vmatpush.msra.mxu0 %v2802
    %v2804 = vand.u32 %v68, 4294901760
    %2805 = vmatpush.msra.mxu0 %v2804
    %v2806 = vand.u32 %v1892, 4294901760
    %v2807 = vsub.f32 %v1892, %v2806
    %v2808 = vand.u32 %v2807, 4294901760
    %2809 = vmatmul.f32.gmra.mxu0 %v2808
    %v2810 = vpop.f32.mrf.mxu0
    %v2811 = vadd.f32 %v2772, %v2810
    %2812 = vdwg.mxu0
    %v2813 = vand.u32 %v98, 4294901760
    %v2814 = vsub.f32 %v98, %v2813
    %v2815 = vand.u32 %v2814, 4294901760
    %2816 = vmatpush.msra.mxu0 %v2815
    %v2817 = vand.u32 %v96, 4294901760
    %v2818 = vsub.f32 %v96, %v2817
    %v2819 = vand.u32 %v2818, 4294901760
    %2820 = vmatpush.msra.mxu0 %v2819
    %v2821 = vand.u32 %v94, 4294901760
    %v2822 = vsub.f32 %v94, %v2821
    %v2823 = vand.u32 %v2822, 4294901760
    %2824 = vmatpush.msra.mxu0 %v2823
    %v2825 = vand.u32 %v92, 4294901760
    %v2826 = vsub.f32 %v92, %v2825
    %v2827 = vand.u32 %v2826, 4294901760
    %2828 = vmatpush.msra.mxu0 %v2827
    %v2829 = vand.u32 %v90, 4294901760
    %v2830 = vsub.f32 %v90, %v2829
    %v2831 = vand.u32 %v2830, 4294901760
    %2832 = vmatpush.msra.mxu0 %v2831
    %v2833 = vand.u32 %v88, 4294901760
    %v2834 = vsub.f32 %v88, %v2833
    %v2835 = vand.u32 %v2834, 4294901760
    %2836 = vmatpush.msra.mxu0 %v2835
    %v2837 = vand.u32 %v86, 4294901760
    %v2838 = vsub.f32 %v86, %v2837
    %v2839 = vand.u32 %v2838, 4294901760
    %2840 = vmatpush.msra.mxu0 %v2839
    %v2841 = vand.u32 %v84, 4294901760
    %v2842 = vsub.f32 %v84, %v2841
    %v2843 = vand.u32 %v2842, 4294901760
    %2844 = vmatpush.msra.mxu0 %v2843
    %v2845 = vand.u32 %v82, 4294901760
    %v2846 = vsub.f32 %v82, %v2845
    %v2847 = vand.u32 %v2846, 4294901760
    %2848 = vmatpush.msra.mxu0 %v2847
    %v2849 = vand.u32 %v80, 4294901760
    %v2850 = vsub.f32 %v80, %v2849
    %v2851 = vand.u32 %v2850, 4294901760
    %2852 = vmatpush.msra.mxu0 %v2851
    %v2853 = vand.u32 %v78, 4294901760
    %v2854 = vsub.f32 %v78, %v2853
    %v2855 = vand.u32 %v2854, 4294901760
    %2856 = vmatpush.msra.mxu0 %v2855
    %v2857 = vand.u32 %v76, 4294901760
    %v2858 = vsub.f32 %v76, %v2857
    %v2859 = vand.u32 %v2858, 4294901760
    %2860 = vmatpush.msra.mxu0 %v2859
    %v2861 = vand.u32 %v74, 4294901760
    %v2862 = vsub.f32 %v74, %v2861
    %v2863 = vand.u32 %v2862, 4294901760
    %2864 = vmatpush.msra.mxu0 %v2863
    %v2865 = vand.u32 %v72, 4294901760
    %v2866 = vsub.f32 %v72, %v2865
    %v2867 = vand.u32 %v2866, 4294901760
    %2868 = vmatpush.msra.mxu0 %v2867
    %v2869 = vand.u32 %v70, 4294901760
    %v2870 = vsub.f32 %v70, %v2869
    %v2871 = vand.u32 %v2870, 4294901760
    %2872 = vmatpush.msra.mxu0 %v2871
    %v2873 = vand.u32 %v68, 4294901760
    %v2874 = vsub.f32 %v68, %v2873
    %v2875 = vand.u32 %v2874, 4294901760
    %2876 = vmatpush.msra.mxu0 %v2875
    %v2877 = vand.u32 %v1892, 4294901760
    %2878 = vmatmul.f32.gmra.mxu0 %v2877
    %v2879 = vpop.f32.mrf.mxu0
    %v2880 = vadd.f32 %v2811, %v2879
    %2881 = vdwg.mxu0
    %v2882 = vand.u32 %v98, 4294901760
    %2883 = vmatpush.msra.mxu0 %v2882
    %v2884 = vand.u32 %v96, 4294901760
    %2885 = vmatpush.msra.mxu0 %v2884
    %v2886 = vand.u32 %v94, 4294901760
    %2887 = vmatpush.msra.mxu0 %v2886
    %v2888 = vand.u32 %v92, 4294901760
    %2889 = vmatpush.msra.mxu0 %v2888
    %v2890 = vand.u32 %v90, 4294901760
    %2891 = vmatpush.msra.mxu0 %v2890
    %v2892 = vand.u32 %v88, 4294901760
    %2893 = vmatpush.msra.mxu0 %v2892
    %v2894 = vand.u32 %v86, 4294901760
    %2895 = vmatpush.msra.mxu0 %v2894
    %v2896 = vand.u32 %v84, 4294901760
    %2897 = vmatpush.msra.mxu0 %v2896
    %v2898 = vand.u32 %v82, 4294901760
    %2899 = vmatpush.msra.mxu0 %v2898
    %v2900 = vand.u32 %v80, 4294901760
    %2901 = vmatpush.msra.mxu0 %v2900
    %v2902 = vand.u32 %v78, 4294901760
    %2903 = vmatpush.msra.mxu0 %v2902
    %v2904 = vand.u32 %v76, 4294901760
    %2905 = vmatpush.msra.mxu0 %v2904
    %v2906 = vand.u32 %v74, 4294901760
    %2907 = vmatpush.msra.mxu0 %v2906
    %v2908 = vand.u32 %v72, 4294901760
    %2909 = vmatpush.msra.mxu0 %v2908
    %v2910 = vand.u32 %v70, 4294901760
    %2911 = vmatpush.msra.mxu0 %v2910
    %v2912 = vand.u32 %v68, 4294901760
    %2913 = vmatpush.msra.mxu0 %v2912
    %v2914 = vand.u32 %v1892, 4294901760
    %2915 = vmatmul.f32.gmra.mxu0 %v2914
    %v2916 = vpop.f32.mrf.mxu0
    %v2917 = vadd.f32 %v2880, %v2916
    %2918 = vdwg.mxu0
    %v2919 = vand.u32 %v130, 4294901760
    %2920 = vmatpush.msra.mxu0 %v2919
    %v2921 = vand.u32 %v128, 4294901760
    %2922 = vmatpush.msra.mxu0 %v2921
    %v2923 = vand.u32 %v126, 4294901760
    %2924 = vmatpush.msra.mxu0 %v2923
    %v2925 = vand.u32 %v124, 4294901760
    %2926 = vmatpush.msra.mxu0 %v2925
    %v2927 = vand.u32 %v122, 4294901760
    %2928 = vmatpush.msra.mxu0 %v2927
    %v2929 = vand.u32 %v120, 4294901760
    %2930 = vmatpush.msra.mxu0 %v2929
    %v2931 = vand.u32 %v118, 4294901760
    %2932 = vmatpush.msra.mxu0 %v2931
    %v2933 = vand.u32 %v116, 4294901760
    %2934 = vmatpush.msra.mxu0 %v2933
    %v2935 = vand.u32 %v114, 4294901760
    %2936 = vmatpush.msra.mxu0 %v2935
    %v2937 = vand.u32 %v112, 4294901760
    %2938 = vmatpush.msra.mxu0 %v2937
    %v2939 = vand.u32 %v110, 4294901760
    %2940 = vmatpush.msra.mxu0 %v2939
    %v2941 = vand.u32 %v108, 4294901760
    %2942 = vmatpush.msra.mxu0 %v2941
    %v2943 = vand.u32 %v106, 4294901760
    %2944 = vmatpush.msra.mxu0 %v2943
    %v2945 = vand.u32 %v104, 4294901760
    %2946 = vmatpush.msra.mxu0 %v2945
    %v2947 = vand.u32 %v102, 4294901760
    %2948 = vmatpush.msra.mxu0 %v2947
    %v2949 = vand.u32 %v100, 4294901760
    %2950 = vmatpush.msra.mxu0 %v2949
    %v2951 = vand.u32 %v1893, 4294901760
    %v2952 = vsub.f32 %v1893, %v2951
    %v2953 = vand.u32 %v2952, 4294901760
    %v2954 = vsub.f32 %v2952, %v2953
    %v2955 = vand.u32 %v2954, 4294901760
    %2956 = vmatmul.f32.gmra.mxu0 %v2955
    %v2957 = vpop.f32.mrf.mxu0
    %v2958 = vadd.f32 %v2917, %v2957
    %2959 = vdwg.mxu0
    %v2960 = vand.u32 %v130, 4294901760
    %v2961 = vsub.f32 %v130, %v2960
    %v2962 = vand.u32 %v2961, 4294901760
    %v2963 = vsub.f32 %v2961, %v2962
    %v2964 = vand.u32 %v2963, 4294901760
    %2965 = vmatpush.msra.mxu0 %v2964
    %v2966 = vand.u32 %v128, 4294901760
    %v2967 = vsub.f32 %v128, %v2966
    %v2968 = vand.u32 %v2967, 4294901760
    %v2969 = vsub.f32 %v2967, %v2968
    %v2970 = vand.u32 %v2969, 4294901760
    %2971 = vmatpush.msra.mxu0 %v2970
    %v2972 = vand.u32 %v126, 4294901760
    %v2973 = vsub.f32 %v126, %v2972
    %v2974 = vand.u32 %v2973, 4294901760
    %v2975 = vsub.f32 %v2973, %v2974
    %v2976 = vand.u32 %v2975, 4294901760
    %2977 = vmatpush.msra.mxu0 %v2976
    %v2978 = vand.u32 %v124, 4294901760
    %v2979 = vsub.f32 %v124, %v2978
    %v2980 = vand.u32 %v2979, 4294901760
    %v2981 = vsub.f32 %v2979, %v2980
    %v2982 = vand.u32 %v2981, 4294901760
    %2983 = vmatpush.msra.mxu0 %v2982
    %v2984 = vand.u32 %v122, 4294901760
    %v2985 = vsub.f32 %v122, %v2984
    %v2986 = vand.u32 %v2985, 4294901760
    %v2987 = vsub.f32 %v2985, %v2986
    %v2988 = vand.u32 %v2987, 4294901760
    %2989 = vmatpush.msra.mxu0 %v2988
    %v2990 = vand.u32 %v120, 4294901760
    %v2991 = vsub.f32 %v120, %v2990
    %v2992 = vand.u32 %v2991, 4294901760
    %v2993 = vsub.f32 %v2991, %v2992
    %v2994 = vand.u32 %v2993, 4294901760
    %2995 = vmatpush.msra.mxu0 %v2994
    %v2996 = vand.u32 %v118, 4294901760
    %v2997 = vsub.f32 %v118, %v2996
    %v2998 = vand.u32 %v2997, 4294901760
    %v2999 = vsub.f32 %v2997, %v2998
    %v3000 = vand.u32 %v2999, 4294901760
    %3001 = vmatpush.msra.mxu0 %v3000
    %v3002 = vand.u32 %v116, 4294901760
    %v3003 = vsub.f32 %v116, %v3002
    %v3004 = vand.u32 %v3003, 4294901760
    %v3005 = vsub.f32 %v3003, %v3004
    %v3006 = vand.u32 %v3005, 4294901760
    %3007 = vmatpush.msra.mxu0 %v3006
    %v3008 = vand.u32 %v114, 4294901760
    %v3009 = vsub.f32 %v114, %v3008
    %v3010 = vand.u32 %v3009, 4294901760
    %v3011 = vsub.f32 %v3009, %v3010
    %v3012 = vand.u32 %v3011, 4294901760
    %3013 = vmatpush.msra.mxu0 %v3012
    %v3014 = vand.u32 %v112, 4294901760
    %v3015 = vsub.f32 %v112, %v3014
    %v3016 = vand.u32 %v3015, 4294901760
    %v3017 = vsub.f32 %v3015, %v3016
    %v3018 = vand.u32 %v3017, 4294901760
    %3019 = vmatpush.msra.mxu0 %v3018
    %v3020 = vand.u32 %v110, 4294901760
    %v3021 = vsub.f32 %v110, %v3020
    %v3022 = vand.u32 %v3021, 4294901760
    %v3023 = vsub.f32 %v3021, %v3022
    %v3024 = vand.u32 %v3023, 4294901760
    %3025 = vmatpush.msra.mxu0 %v3024
    %v3026 = vand.u32 %v108, 4294901760
    %v3027 = vsub.f32 %v108, %v3026
    %v3028 = vand.u32 %v3027, 4294901760
    %v3029 = vsub.f32 %v3027, %v3028
    %v3030 = vand.u32 %v3029, 4294901760
    %3031 = vmatpush.msra.mxu0 %v3030
    %v3032 = vand.u32 %v106, 4294901760
    %v3033 = vsub.f32 %v106, %v3032
    %v3034 = vand.u32 %v3033, 4294901760
    %v3035 = vsub.f32 %v3033, %v3034
    %v3036 = vand.u32 %v3035, 4294901760
    %3037 = vmatpush.msra.mxu0 %v3036
    %v3038 = vand.u32 %v104, 4294901760
    %v3039 = vsub.f32 %v104, %v3038
    %v3040 = vand.u32 %v3039, 4294901760
    %v3041 = vsub.f32 %v3039, %v3040
    %v3042 = vand.u32 %v3041, 4294901760
    %3043 = vmatpush.msra.mxu0 %v3042
    %v3044 = vand.u32 %v102, 4294901760
    %v3045 = vsub.f32 %v102, %v3044
    %v3046 = vand.u32 %v3045, 4294901760
    %v3047 = vsub.f32 %v3045, %v3046
    %v3048 = vand.u32 %v3047, 4294901760
    %3049 = vmatpush.msra.mxu0 %v3048
    %v3050 = vand.u32 %v100, 4294901760
    %v3051 = vsub.f32 %v100, %v3050
    %v3052 = vand.u32 %v3051, 4294901760
    %v3053 = vsub.f32 %v3051, %v3052
    %v3054 = vand.u32 %v3053, 4294901760
    %3055 = vmatpush.msra.mxu0 %v3054
    %v3056 = vand.u32 %v1893, 4294901760
    %3057 = vmatmul.f32.gmra.mxu0 %v3056
    %v3058 = vpop.f32.mrf.mxu0
    %v3059 = vadd.f32 %v2958, %v3058
    %3060 = vdwg.mxu0
    %v3061 = vand.u32 %v130, 4294901760
    %v3062 = vsub.f32 %v130, %v3061
    %3063 = vmatpush.msra.mxu0 %v3062
    %v3064 = vand.u32 %v128, 4294901760
    %v3065 = vsub.f32 %v128, %v3064
    %3066 = vmatpush.msra.mxu0 %v3065
    %v3067 = vand.u32 %v126, 4294901760
    %v3068 = vsub.f32 %v126, %v3067
    %3069 = vmatpush.msra.mxu0 %v3068
    %v3070 = vand.u32 %v124, 4294901760
    %v3071 = vsub.f32 %v124, %v3070
    %3072 = vmatpush.msra.mxu0 %v3071
    %v3073 = vand.u32 %v122, 4294901760
    %v3074 = vsub.f32 %v122, %v3073
    %3075 = vmatpush.msra.mxu0 %v3074
    %v3076 = vand.u32 %v120, 4294901760
    %v3077 = vsub.f32 %v120, %v3076
    %3078 = vmatpush.msra.mxu0 %v3077
    %v3079 = vand.u32 %v118, 4294901760
    %v3080 = vsub.f32 %v118, %v3079
    %3081 = vmatpush.msra.mxu0 %v3080
    %v3082 = vand.u32 %v116, 4294901760
    %v3083 = vsub.f32 %v116, %v3082
    %3084 = vmatpush.msra.mxu0 %v3083
    %v3085 = vand.u32 %v114, 4294901760
    %v3086 = vsub.f32 %v114, %v3085
    %3087 = vmatpush.msra.mxu0 %v3086
    %v3088 = vand.u32 %v112, 4294901760
    %v3089 = vsub.f32 %v112, %v3088
    %3090 = vmatpush.msra.mxu0 %v3089
    %v3091 = vand.u32 %v110, 4294901760
    %v3092 = vsub.f32 %v110, %v3091
    %3093 = vmatpush.msra.mxu0 %v3092
    %v3094 = vand.u32 %v108, 4294901760
    %v3095 = vsub.f32 %v108, %v3094
    %3096 = vmatpush.msra.mxu0 %v3095
    %v3097 = vand.u32 %v106, 4294901760
    %v3098 = vsub.f32 %v106, %v3097
    %3099 = vmatpush.msra.mxu0 %v3098
    %v3100 = vand.u32 %v104, 4294901760
    %v3101 = vsub.f32 %v104, %v3100
    %3102 = vmatpush.msra.mxu0 %v3101
    %v3103 = vand.u32 %v102, 4294901760
    %v3104 = vsub.f32 %v102, %v3103
    %3105 = vmatpush.msra.mxu0 %v3104
    %v3106 = vand.u32 %v100, 4294901760
    %v3107 = vsub.f32 %v100, %v3106
    %3108 = vmatpush.msra.mxu0 %v3107
    %v3109 = vand.u32 %v1893, 4294901760
    %v3110 = vsub.f32 %v1893, %v3109
    %3111 = vmatmul.f32.gmra.mxu0 %v3110
    %v3112 = vpop.f32.mrf.mxu0
    %v3113 = vadd.f32 %v3059, %v3112
    %3114 = vdwg.mxu0
    %v3115 = vand.u32 %v130, 4294901760
    %3116 = vmatpush.msra.mxu0 %v3115
    %v3117 = vand.u32 %v128, 4294901760
    %3118 = vmatpush.msra.mxu0 %v3117
    %v3119 = vand.u32 %v126, 4294901760
    %3120 = vmatpush.msra.mxu0 %v3119
    %v3121 = vand.u32 %v124, 4294901760
    %3122 = vmatpush.msra.mxu0 %v3121
    %v3123 = vand.u32 %v122, 4294901760
    %3124 = vmatpush.msra.mxu0 %v3123
    %v3125 = vand.u32 %v120, 4294901760
    %3126 = vmatpush.msra.mxu0 %v3125
    %v3127 = vand.u32 %v118, 4294901760
    %3128 = vmatpush.msra.mxu0 %v3127
    %v3129 = vand.u32 %v116, 4294901760
    %3130 = vmatpush.msra.mxu0 %v3129
    %v3131 = vand.u32 %v114, 4294901760
    %3132 = vmatpush.msra.mxu0 %v3131
    %v3133 = vand.u32 %v112, 4294901760
    %3134 = vmatpush.msra.mxu0 %v3133
    %v3135 = vand.u32 %v110, 4294901760
    %3136 = vmatpush.msra.mxu0 %v3135
    %v3137 = vand.u32 %v108, 4294901760
    %3138 = vmatpush.msra.mxu0 %v3137
    %v3139 = vand.u32 %v106, 4294901760
    %3140 = vmatpush.msra.mxu0 %v3139
    %v3141 = vand.u32 %v104, 4294901760
    %3142 = vmatpush.msra.mxu0 %v3141
    %v3143 = vand.u32 %v102, 4294901760
    %3144 = vmatpush.msra.mxu0 %v3143
    %v3145 = vand.u32 %v100, 4294901760
    %3146 = vmatpush.msra.mxu0 %v3145
    %v3147 = vand.u32 %v1893, 4294901760
    %v3148 = vsub.f32 %v1893, %v3147
    %v3149 = vand.u32 %v3148, 4294901760
    %3150 = vmatmul.f32.gmra.mxu0 %v3149
    %v3151 = vpop.f32.mrf.mxu0
    %v3152 = vadd.f32 %v3113, %v3151
    %3153 = vdwg.mxu0
    %v3154 = vand.u32 %v130, 4294901760
    %v3155 = vsub.f32 %v130, %v3154
    %v3156 = vand.u32 %v3155, 4294901760
    %3157 = vmatpush.msra.mxu0 %v3156
    %v3158 = vand.u32 %v128, 4294901760
    %v3159 = vsub.f32 %v128, %v3158
    %v3160 = vand.u32 %v3159, 4294901760
    %3161 = vmatpush.msra.mxu0 %v3160
    %v3162 = vand.u32 %v126, 4294901760
    %v3163 = vsub.f32 %v126, %v3162
    %v3164 = vand.u32 %v3163, 4294901760
    %3165 = vmatpush.msra.mxu0 %v3164
    %v3166 = vand.u32 %v124, 4294901760
    %v3167 = vsub.f32 %v124, %v3166
    %v3168 = vand.u32 %v3167, 4294901760
    %3169 = vmatpush.msra.mxu0 %v3168
    %v3170 = vand.u32 %v122, 4294901760
    %v3171 = vsub.f32 %v122, %v3170
    %v3172 = vand.u32 %v3171, 4294901760
    %3173 = vmatpush.msra.mxu0 %v3172
    %v3174 = vand.u32 %v120, 4294901760
    %v3175 = vsub.f32 %v120, %v3174
    %v3176 = vand.u32 %v3175, 4294901760
    %3177 = vmatpush.msra.mxu0 %v3176
    %v3178 = vand.u32 %v118, 4294901760
    %v3179 = vsub.f32 %v118, %v3178
    %v3180 = vand.u32 %v3179, 4294901760
    %3181 = vmatpush.msra.mxu0 %v3180
    %v3182 = vand.u32 %v116, 4294901760
    %v3183 = vsub.f32 %v116, %v3182
    %v3184 = vand.u32 %v3183, 4294901760
    %3185 = vmatpush.msra.mxu0 %v3184
    %v3186 = vand.u32 %v114, 4294901760
    %v3187 = vsub.f32 %v114, %v3186
    %v3188 = vand.u32 %v3187, 4294901760
    %3189 = vmatpush.msra.mxu0 %v3188
    %v3190 = vand.u32 %v112, 4294901760
    %v3191 = vsub.f32 %v112, %v3190
    %v3192 = vand.u32 %v3191, 4294901760
    %3193 = vmatpush.msra.mxu0 %v3192
    %v3194 = vand.u32 %v110, 4294901760
    %v3195 = vsub.f32 %v110, %v3194
    %v3196 = vand.u32 %v3195, 4294901760
    %3197 = vmatpush.msra.mxu0 %v3196
    %v3198 = vand.u32 %v108, 4294901760
    %v3199 = vsub.f32 %v108, %v3198
    %v3200 = vand.u32 %v3199, 4294901760
    %3201 = vmatpush.msra.mxu0 %v3200
    %v3202 = vand.u32 %v106, 4294901760
    %v3203 = vsub.f32 %v106, %v3202
    %v3204 = vand.u32 %v3203, 4294901760
    %3205 = vmatpush.msra.mxu0 %v3204
    %v3206 = vand.u32 %v104, 4294901760
    %v3207 = vsub.f32 %v104, %v3206
    %v3208 = vand.u32 %v3207, 4294901760
    %3209 = vmatpush.msra.mxu0 %v3208
    %v3210 = vand.u32 %v102, 4294901760
    %v3211 = vsub.f32 %v102, %v3210
    %v3212 = vand.u32 %v3211, 4294901760
    %3213 = vmatpush.msra.mxu0 %v3212
    %v3214 = vand.u32 %v100, 4294901760
    %v3215 = vsub.f32 %v100, %v3214
    %v3216 = vand.u32 %v3215, 4294901760
    %3217 = vmatpush.msra.mxu0 %v3216
    %v3218 = vand.u32 %v1893, 4294901760
    %3219 = vmatmul.f32.gmra.mxu0 %v3218
    %v3220 = vpop.f32.mrf.mxu0
    %v3221 = vadd.f32 %v3152, %v3220
    %3222 = vdwg.mxu0
    %v3223 = vand.u32 %v130, 4294901760
    %3224 = vmatpush.msra.mxu0 %v3223
    %v3225 = vand.u32 %v128, 4294901760
    %3226 = vmatpush.msra.mxu0 %v3225
    %v3227 = vand.u32 %v126, 4294901760
    %3228 = vmatpush.msra.mxu0 %v3227
    %v3229 = vand.u32 %v124, 4294901760
    %3230 = vmatpush.msra.mxu0 %v3229
    %v3231 = vand.u32 %v122, 4294901760
    %3232 = vmatpush.msra.mxu0 %v3231
    %v3233 = vand.u32 %v120, 4294901760
    %3234 = vmatpush.msra.mxu0 %v3233
    %v3235 = vand.u32 %v118, 4294901760
    %3236 = vmatpush.msra.mxu0 %v3235
    %v3237 = vand.u32 %v116, 4294901760
    %3238 = vmatpush.msra.mxu0 %v3237
    %v3239 = vand.u32 %v114, 4294901760
    %3240 = vmatpush.msra.mxu0 %v3239
    %v3241 = vand.u32 %v112, 4294901760
    %3242 = vmatpush.msra.mxu0 %v3241
    %v3243 = vand.u32 %v110, 4294901760
    %3244 = vmatpush.msra.mxu0 %v3243
    %v3245 = vand.u32 %v108, 4294901760
    %3246 = vmatpush.msra.mxu0 %v3245
    %v3247 = vand.u32 %v106, 4294901760
    %3248 = vmatpush.msra.mxu0 %v3247
    %v3249 = vand.u32 %v104, 4294901760
    %3250 = vmatpush.msra.mxu0 %v3249
    %v3251 = vand.u32 %v102, 4294901760
    %3252 = vmatpush.msra.mxu0 %v3251
    %v3253 = vand.u32 %v100, 4294901760
    %3254 = vmatpush.msra.mxu0 %v3253
    %v3255 = vand.u32 %v1893, 4294901760
    %3256 = vmatmul.f32.gmra.mxu0 %v3255
    %v3257 = vpop.f32.mrf.mxu0
    %v3258 = vadd.f32 %v3221, %v3257
    %3259 = vdwg.mxu0
    %v3260 = vsub.f32 0.0, %v2576
    %v3261 = vsub.f32 0.0, %v3258
    %v3262 = vmul.f32 %v3260, 1.442695
    %v3263 = vpow.pop %v3262
    %v3264 = vmul.f32 %v3261, 1.442695
    %v3265 = vpow.pop %v3264
    %v3266 = vadd.f32 %v3263, 1.0
    %v3267 = vadd.f32 %v3265, 1.0
    %v3268 = vrcp.pop %v3266
    %v3269 = vmul.f32 %v3266, %v3268
    %v3270 = vsub.f32 1.0, %v3269
    %v3271 = vmul.f32 %v3268, %v3270
    %v3272 = vadd.f32 %v3268, %v3271
    %vm3273 = vweird.f32 %v3266
    %vm3274 = vweird.f32 %v3268
    %vm3275 = vmor %vm3273, %vm3274
    %v3276 = vsel %vm3275, %v3268, %v3272
    %v3277 = vand.u32 2147483647, %v3266
    %vm3278 = vcmp.eq.f32.partialorder %v3277, 8.507059e+37
    %v3279 = vand.u32 %v3266, 2147483648
    %v3280 = vor.u32 1.1754944e-38, %v3279
    %v3281 = vsel %vm3278, %v3280, %v3276
    %v3282 = vmul.f32 1.0, %v3281
    %v3283 = vrcp.pop %v3267
    %v3284 = vmul.f32 %v3267, %v3283
    %v3285 = vsub.f32 1.0, %v3284
    %v3286 = vmul.f32 %v3283, %v3285
    %v3287 = vadd.f32 %v3283, %v3286
    %vm3288 = vweird.f32 %v3267
    %vm3289 = vweird.f32 %v3283
    %vm3290 = vmor %vm3288, %vm3289
    %v3291 = vsel %vm3290, %v3283, %v3287
    %v3292 = vand.u32 2147483647, %v3267
    %vm3293 = vcmp.eq.f32.partialorder %v3292, 8.507059e+37
    %v3294 = vand.u32 %v3267, 2147483648
    %v3295 = vor.u32 1.1754944e-38, %v3294
    %v3296 = vsel %vm3293, %v3295, %v3291
    %v3297 = vmul.f32 1.0, %v3296
    %v3300 = vrot.slane %v3297, 7
    %vm3301 = vcmask 1040384
    %v3302 = vsel %vm3301, %v3282, %v3300
    %v3303 = vsel %vm231, %v3282, %v3300
    %v3304 = vrot.slane %v3303, 1
    %v3305 = vperm.slane %v3302, 0
    %v3306 = vperm.slane %v3302, 1
    %v3307 = vperm.slane %v3304, 0
    %v3308 = vperm.slane %v3304, 1
    %v3309 = vrot.slane %v3306, 4
    %v3310 = vrot.slane %v3308, 4
    %v3311 = vsel %vm209, %v3305, %v3309
    %v3312 = vsel %vm209, %v3307, %v3310
    %v3315 = vmul.f32 %v430, %v3311
    %v3316 = vmul.f32 %v431, %v3312
    %3317 = vst [vmem:[#allocation8] sm:$0xff] %v3315
    %3318 = vst [vmem:[#allocation8 + $0x8] sm:$0xff] %v3316
    // Predicated region
    $region30: #{tpu_custom_call.1} parent=1 // pred_check
      _
    $region31: #{tpu_custom_call.1} parent=1 // pred_check_branch
      %3320 = sbr.rel (0) target = $region33
    $region32: #{tpu_custom_call.1} parent=1 // pred_region
      %3322 = vsyncadd [#allocation4], 0
      %s3323 = sshll.u32 [#allocation8], 4
      %s3324 = int_to_ptr.vmem [resolvable:$true] %s3323
      %s3325 = sshll.u32 %s4, 4
      %s3326 = int_to_ptr.hbm [resolvable:$true] %s3325
      %3331 = dma.vmem_to_hbm [thread:$0]  %s3324, 256, %s3326, [#allocation4], 128, 128, 8
    $region33: #{tpu_custom_call.1} parent=1 // pred_fallthru
      _
    // Predicated region
    $region34: #{tpu_custom_call.1} parent=1 // pred_check
      _
    $region35: #{tpu_custom_call.1} parent=1 // pred_check_branch
      %3333 = sbr.rel (0) target = $region37
    $region36: #{tpu_custom_call.1} parent=1 // pred_region
      %3335 = dma.done [#allocation4], 256
    $region37: #{tpu_custom_call.1} parent=1 // pred_fallthru
      _
    %3336 = vsyncpa [#allocation3], 1
    %3337 = vsyncpa [#allocation6], 1
    %3338 = vsyncpa [#allocation4], 1

</llo_original>
